<compile_context>
chip_gen: v5e
topology: v5e:2x2
jax: 0.10.0
libtpu: 0.0.40
codegen_flags: <defaults>
</compile_context>

<pallas_src>
import jax
import jax.numpy as jnp
from jax.experimental import pallas as pl
from jax.experimental.pallas import tpu as pltpu

VMEM_LIMIT = 32 * 1024 * 1024  # explicit scoped-VMEM budget, safe on v5e/v6e/v7x


def _round_up(n, m):
    return ((n + m - 1) // m) * m


def _pick_time_chunk(T, target=16):
    tc = min(T, target)
    while T % tc != 0:
        tc -= 1
    return tc


def _pick_batch_block(B, target=128):
    if B <= 8:
        return B
    for bb in (target, 64, 32, 16, 8):
        if bb <= B and B % bb == 0:
            return bb
    return B


# ----------------------------------------------------------------------------
# Tiled dense (Linear) kernel: (M, N, K) grid, bf16 MXU operands, f32 accumulator.
# ----------------------------------------------------------------------------
def _dense_nobias_kernel(x_ref, w_ref, o_ref, acc_ref):
    @pl.when(pl.program_id(2) == 0)
    def _():
        acc_ref[...] = jnp.zeros_like(acc_ref)

    acc_ref[...] += jnp.dot(x_ref[...], w_ref[...],
                            preferred_element_type=jnp.float32)

    @pl.when(pl.program_id(2) == pl.num_programs(2) - 1)
    def _():
        o_ref[...] = acc_ref[...].astype(o_ref.dtype)


def _dense_bias_kernel(x_ref, w_ref, b_ref, o_ref, acc_ref):
    @pl.when(pl.program_id(2) == 0)
    def _():
        acc_ref[...] = jnp.zeros_like(acc_ref)

    acc_ref[...] += jnp.dot(x_ref[...], w_ref[...],
                            preferred_element_type=jnp.float32)

    @pl.when(pl.program_id(2) == pl.num_programs(2) - 1)
    def _():
        o_ref[...] = (acc_ref[...] + b_ref[...]).astype(o_ref.dtype)


def dense(x, w, b=None, out_dtype=jnp.float32, tm=256, tn=256, tk=512):
    """x: (M,K), w: (K,N), b: (N,) or None. bf16 MXU inputs, f32 accumulation."""
    M, K = x.shape
    N = w.shape[1]
    x = x.astype(jnp.bfloat16)
    w = w.astype(jnp.bfloat16)

    tm = min(tm, _round_up(M, 8))
    tn = min(tn, _round_up(N, 128))
    tk = min(tk, _round_up(K, 128))
    Mp, Kp, Np = _round_up(M, tm), _round_up(K, tk), _round_up(N, tn)
    if (Mp, Kp) != (M, K):
        x = jnp.pad(x, ((0, Mp - M), (0, Kp - K)))
    if (Kp, Np) != (K, N):
        w = jnp.pad(w, ((0, Kp - K), (0, Np - N)))

    grid = (Mp // tm, Np // tn, Kp // tk)
    in_specs = [pl.BlockSpec((tm, tk), lambda i, j, k: (i, k)),
                pl.BlockSpec((tk, tn), lambda i, j, k: (k, j))]
    args = [x, w]
    if b is not None:
        bp = jnp.pad(b.astype(jnp.float32), (0, Np - N)).reshape(1, Np)
        in_specs.append(pl.BlockSpec((1, tn), lambda i, j, k: (0, j)))
        args.append(bp)
        kernel = _dense_bias_kernel
    else:
        kernel = _dense_nobias_kernel

    out = pl.pallas_call(
        kernel,
        out_shape=jax.ShapeDtypeStruct((Mp, Np), out_dtype),
        grid_spec=pltpu.PrefetchScalarGridSpec(
            num_scalar_prefetch=0,
            grid=grid,
            in_specs=in_specs,
            out_specs=pl.BlockSpec((tm, tn), lambda i, j, k: (i, j)),
            scratch_shapes=[pltpu.VMEM((tm, tn), jnp.float32)]),
        compiler_params=pltpu.CompilerParams(
            dimension_semantics=("parallel", "parallel", "arbitrary"),
            vmem_limit_bytes=VMEM_LIMIT),
    )(*args)
    if (Mp, Np) != (M, N):
        out = out[:M, :N]
    return out


# ----------------------------------------------------------------------------
# GRU layer kernel: per-chunk fused input projection + serial recurrence.
# PyTorch gate math:
#   r = sig(i_r + h_r), z = sig(i_z + h_z)
#   n = tanh(i_n + r * (W_hn h + b_hn)), h' = (1 - z) * n + z * h
# i_* = x W_i*^T + b_i* (+ b_h* folded in for r/z).
# All hidden/gate dims padded to Hp (multiple of 128); padded lanes stay 0.
# ----------------------------------------------------------------------------
def _make_gru_kernel(Hp, hoist_weights, tc_unroll):
    def kernel(x_ref, wih_ref, gib_ref, whh_ref, bhn_ref, h0_ref,
               y_ref, gi_scr, h_scr):
        tc_idx = pl.program_id(1)
        TC = x_ref.shape[0]

        @pl.when(tc_idx == 0)
        def _():
            h_scr[...] = h0_ref[...]

        # Bias broadcasts hoisted out of the loops (JAX does not CSE them).
        gib = gib_ref[...]
        bhn = bhn_ref[...]
        if hoist_weights:           # only when the weights fit the vreg file
            wih = wih_ref[...]
            whh = whh_ref[...]

        # ---- Phase 1: input projection for the whole chunk (independent MXU work)
        def proj_step(t, carry):
            gi_scr[t] = jnp.dot(x_ref[t],
                                wih if hoist_weights else wih_ref[...],
                                preferred_element_type=jnp.float32) + gib
            return carry

        jax.lax.fori_loop(0, TC, proj_step, 0, unroll=tc_unroll)

        # ---- Phase 2: serial recurrence over the chunk (merged (Hp,3Hp) matmul)
        def step(t, h):
            gh = jnp.dot(h.astype(jnp.bfloat16),
                         whh if hoist_weights else whh_ref[...],
                         preferred_element_type=jnp.float32)        # (bb, 3Hp)
            gi_t = gi_scr[t]                                         # (bb, 3Hp)
            r = jax.nn.sigmoid(gi_t[:, 0:Hp] + gh[:, 0:Hp])
            z = jax.nn.sigmoid(gi_t[:, Hp:2 * Hp] + gh[:, Hp:2 * Hp])
            n = jnp.tanh(gi_t[:, 2 * Hp:3 * Hp] + r * (gh[:, 2 * Hp:3 * Hp] + bhn))
            h_new = (1.0 - z) * n + z * h
            y_ref[t] = h_new.astype(y_ref.dtype)
            return h_new

        h_fin = jax.lax.fori_loop(0, TC, step, h_scr[...], unroll=tc_unroll)
        h_scr[...] = h_fin

    return kernel


def gru_layer(x, h0, lp, time_chunk_target=16):
    """x: (T, B, Dp) bf16 (lane-padded), h0: (B, Hp) f32. Returns y (T, B, Hp) bf16."""
    T, B, Dp = x.shape
    Hp = lp['Hp']
    assert Dp == lp['Dp']
    TC = _pick_time_chunk(T, time_chunk_target)
    bb = _pick_batch_block(B)
    grid = (B // bb, T // TC)

    # Hoist weights into vregs only when they comfortably fit the register file.
    hoist = (Dp * 3 * Hp + Hp * 3 * Hp) * 2 <= 96 * 1024
    kernel = _make_gru_kernel(Hp, hoist, TC <= 8)

    # TODO(synk): at very large TC*bb*Hp, store gi_scr in bf16 (or shrink TC) to
    # stay inside v7x's 64 MiB VMEM.
    y = pl.pallas_call(
        kernel,
        out_shape=jax.ShapeDtypeStruct((T, B, Hp), jnp.bfloat16),
        grid_spec=pltpu.PrefetchScalarGridSpec(
            num_scalar_prefetch=0,
            grid=grid,
            in_specs=[
                pl.BlockSpec((TC, bb, Dp), lambda bi, ci: (ci, bi, 0)),   # x chunk
                pl.BlockSpec((Dp, 3 * Hp), lambda bi, ci: (0, 0)),        # W_ih^T
                pl.BlockSpec((1, 3 * Hp), lambda bi, ci: (0, 0)),         # gi bias
                pl.BlockSpec((Hp, 3 * Hp), lambda bi, ci: (0, 0)),        # W_hh^T
                pl.BlockSpec((1, Hp), lambda bi, ci: (0, 0)),             # b_hn
                pl.BlockSpec((bb, Hp), lambda bi, ci: (bi, 0)),           # h0
            ],
            out_specs=pl.BlockSpec((TC, bb, Hp), lambda bi, ci: (ci, bi, 0)),
            scratch_shapes=[
                pltpu.VMEM((TC, bb, 3 * Hp), jnp.float32),   # chunk gate preacts
                pltpu.VMEM((bb, Hp), jnp.float32),           # hidden-state carry
            ]),
        compiler_params=pltpu.CompilerParams(
            dimension_semantics=("parallel", "arbitrary"),
            vmem_limit_bytes=VMEM_LIMIT),
    )(x, lp['wih_t'], lp['gi_bias'], lp['whh_t'], lp['bhn'], h0)
    return y


# ----------------------------------------------------------------------------
# Fused VAE head: per-layer LayerNorm -> mu/log_var Linear -> reparameterize
# (z = mu + exp(0.5*log_var)*eps) -> decoder latent->hidden Linear. One kernel.
# All lane dims padded to 128; padded lanes are exact zeros so sums over the
# padded width equal sums over the true width (divide by the true H).
# ----------------------------------------------------------------------------
def _make_vae_head_kernel(n_enc, true_h):
    def kernel(*refs):
        s = refs[0:n_enc]
        ln = refs[n_enc:3 * n_enc]                # g0, b0, g1, b1, ...
        muw = refs[3 * n_enc:4 * n_enc]
        varw = refs[4 * n_enc:5 * n_enc]
        mu_b, var_b, eps, dec_w, dec_b = refs[5 * n_enc:5 * n_enc + 5]
        mu_out, lv_out, hid_out = refs[5 * n_enc + 5:]

        mu = mu_b[...]
        lv = var_b[...]
        for i in range(n_enc):
            x = s[i][...].astype(jnp.float32)
            inv_h = 1.0 / float(true_h[i])
            mean = jnp.sum(x, axis=-1, keepdims=True) * inv_h
            var = jnp.sum(x * x, axis=-1, keepdims=True) * inv_h - mean * mean
            xn = (x - mean) * jax.lax.rsqrt(var + 1e-5) * ln[2 * i][...] + ln[2 * i + 1][...]
            xn = xn.astype(jnp.bfloat16)
            mu = mu + jnp.dot(xn, muw[i][...], preferred_element_type=jnp.float32)
            lv = lv + jnp.dot(xn, varw[i][...], preferred_element_type=jnp.float32)

        z = mu + jnp.exp(0.5 * lv) * eps[...]          # == mu + sqrt(exp(lv)) * eps
        hid = jnp.dot(z.astype(jnp.bfloat16), dec_w[...],
                      preferred_element_type=jnp.float32) + dec_b[...]
        mu_out[...] = mu
        lv_out[...] = lv
        hid_out[...] = hid
    return kernel


def vae_head(states, prep, eps_p):
    n = len(states)
    B = states[0].shape[0]
    Lp, Sp = prep['Lp'], prep['Sp']

    args = list(states)
    for g, b in prep['enc_ln']:
        args += [g, b]
    args += list(prep['mu_w']) + list(prep['var_w'])
    args += [prep['mu_b'], prep['var_b'], eps_p, prep['dec_lin_w'], prep['dec_lin_b']]

    mu, lv, hid = pl.pallas_call(
        _make_vae_head_kernel(n, prep['enc_true_h']),
        out_shape=(jax.ShapeDtypeStruct((B, Lp), jnp.float32),
                   jax.ShapeDtypeStruct((B, Lp), jnp.float32),
                   jax.ShapeDtypeStruct((B, Sp), jnp.float32)),
        compiler_params=pltpu.CompilerParams(vmem_limit_bytes=VMEM_LIMIT),
    )(*args)
    return mu, lv, hid


# ----------------------------------------------------------------------------
# Parameter initialization (deterministic, synthetic) + one-time device layout.
# ----------------------------------------------------------------------------
def init_params(key, vocab_size, embedding_dim, enc_layers, dec_layers, latent_dim):
    def nrm(k, shape, scale=0.1):
        return scale * jax.random.normal(k, shape, jnp.float32)

    keys = iter(jax.random.split(key, 64))
    p = {}

    emb = nrm(next(keys), (vocab_size, embedding_dim))
    p['enc_embedding'] = emb.at[0].set(0.0)          # padding_idx=0
    dims = [embedding_dim] + list(enc_layers)
    p['enc_gru'] = []
    for i in range(len(enc_layers)):
        d_in, h = dims[i], dims[i + 1]
        p['enc_gru'].append(dict(
            w_ih=nrm(next(keys), (3 * h, d_in)),
            w_hh=nrm(next(keys), (3 * h, h)),
            b_ih=nrm(next(keys), (3 * h,)),
            b_hh=nrm(next(keys), (3 * h,)),
        ))
    p['enc_ln'] = [dict(g=jnp.ones((h,), jnp.float32),
                        b=jnp.zeros((h,), jnp.float32)) for h in enc_layers]
    p['mu_w'] = nrm(next(keys), (sum(enc_layers), latent_dim))
    p['mu_b'] = nrm(next(keys), (latent_dim,))
    p['var_w'] = nrm(next(keys), (sum(enc_layers), latent_dim))
    p['var_b'] = nrm(next(keys), (latent_dim,))

    demb = nrm(next(keys), (vocab_size, embedding_dim))
    p['dec_embedding'] = demb.at[0].set(0.0)         # padding_idx=0
    p['dec_linear_w'] = nrm(next(keys), (latent_dim, sum(dec_layers)))
    p['dec_linear_b'] = nrm(next(keys), (sum(dec_layers),))
    ddims = [embedding_dim] + list(dec_layers)
    p['dec_gru'] = []
    for i in range(len(dec_layers)):
        d_in, h = ddims[i], ddims[i + 1]
        p['dec_gru'].append(dict(
            w_ih=nrm(next(keys), (3 * h, d_in)),
            w_hh=nrm(next(keys), (3 * h, h)),
            b_ih=nrm(next(keys), (3 * h,)),
            b_hh=nrm(next(keys), (3 * h,)),
        ))
    p['dec_linear_out_w'] = nrm(next(keys), (dec_layers[-1], vocab_size))
    return p


def prepare_params(p, *, embedding_dim, enc_layers, dec_layers, latent_dim):
    """One-time conversion to the padded / transposed / bf16 kernel layout."""
    Ep = _round_up(embedding_dim, 128)
    Lp = _round_up(latent_dim, 128)
    S = sum(dec_layers)
    Sp = _round_up(S, 128)
    prep = {'Ep': Ep, 'Lp': Lp, 'Sp': Sp, 'enc_true_h': list(enc_layers)}

    prep['enc_emb'] = jnp.pad(
        p['enc_embedding'], ((0, 0), (0, Ep - embedding_dim))).astype(jnp.bfloat16)
    prep['dec_emb'] = jnp.pad(
        p['dec_embedding'], ((0, 0), (0, Ep - embedding_dim))).astype(jnp.bfloat16)

    def prep_gru_layer(lp, d_in, H):
        Dp = _round_up(d_in, 128)
        Hp = _round_up(H, 128)
        w_ih, w_hh = lp['w_ih'], lp['w_hh']
        b_ih, b_hh = lp['b_ih'], lp['b_hh']

        def pack(w, in_dim, in_pad):      # (3H, in_dim) -> (in_pad, 3Hp) bf16
            gs = []
            for g in range(3):
                wg = jnp.transpose(w[g * H:(g + 1) * H, :])
                gs.append(jnp.pad(wg, ((0, in_pad - in_dim), (0, Hp - H))))
            return jnp.concatenate(gs, axis=1).astype(jnp.bfloat16)

        def padg(v):
            return jnp.pad(v, (0, Hp - H))

        gi_bias = jnp.concatenate([padg(b_ih[0:H] + b_hh[0:H]),
                                   padg(b_ih[H:2 * H] + b_hh[H:2 * H]),
                                   padg(b_ih[2 * H:3 * H])]).reshape(1, 3 * Hp)
        bhn = padg(b_hh[2 * H:3 * H]).reshape(1, Hp)
        return dict(wih_t=pack(w_ih, d_in, Dp), whh_t=pack(w_hh, H, Hp),
                    gi_bias=gi_bias.astype(jnp.float32),
                    bhn=bhn.astype(jnp.float32), H=H, Hp=Hp, Dp=Dp)

    enc_dims = [embedding_dim] + list(enc_layers)
    prep['enc_gru'] = [prep_gru_layer(p['enc_gru'][i], enc_dims[i], enc_dims[i + 1])
                       for i in range(len(enc_layers))]
    dec_dims = [embedding_dim] + list(dec_layers)
    prep['dec_gru'] = [prep_gru_layer(p['dec_gru'][i], dec_dims[i], dec_dims[i + 1])
                       for i in range(len(dec_layers))]

    prep['enc_ln'] = []
    for h, lnp in zip(enc_layers, p['enc_ln']):
        Hp = _round_up(h, 128)
        prep['enc_ln'].append((
            jnp.pad(lnp['g'], (0, Hp - h)).reshape(1, Hp).astype(jnp.float32),
            jnp.pad(lnp['b'], (0, Hp - h)).reshape(1, Hp).astype(jnp.float32)))

    offs = [0]
    for h in enc_layers:
        offs.append(offs[-1] + h)
    prep['mu_w'], prep['var_w'] = [], []
    for i, h in enumerate(enc_layers):
        Hp = _round_up(h, 128)
        for name in ('mu_w', 'var_w'):
            wslice = p[name][offs[i]:offs[i + 1]]
            prep[name].append(jnp.pad(
                wslice, ((0, Hp - h), (0, Lp - latent_dim))).astype(jnp.bfloat16))
    prep['mu_b'] = jnp.pad(p['mu_b'], (0, Lp - latent_dim)).reshape(1, Lp)
    prep['var_b'] = jnp.pad(p['var_b'], (0, Lp - latent_dim)).reshape(1, Lp)

    prep['dec_lin_w'] = jnp.pad(
        p['dec_linear_w'], ((0, Lp - latent_dim), (0, Sp - S))).astype(jnp.bfloat16)
    prep['dec_lin_b'] = jnp.pad(p['dec_linear_b'], (0, Sp - S)).reshape(1, Sp)

    Hlast = dec_layers[-1]
    Hlast_p = _round_up(Hlast, 128)
    prep['dec_out_w'] = jnp.pad(
        p['dec_linear_out_w'], ((0, Hlast_p - Hlast), (0, 0))).astype(jnp.bfloat16)
    return prep


# ----------------------------------------------------------------------------
# Full GRUVAE forward: (out, mu, log_var)     [dropout = eval-mode identity]
# ----------------------------------------------------------------------------
def gru_vae_forward(prep, x_ids, y_ids, eps, enc_layers, dec_layers, latent_dim):
    B = x_ids.shape[1]

    # ---------------- Encoder ----------------
    x = prep['enc_emb'][x_ids]                        # (T, B, Ep) bf16, plain-JAX gather
    states = []
    for lp in prep['enc_gru']:
        h0 = jnp.zeros((B, lp['Hp']), jnp.float32)
        x = gru_layer(x, h0, lp)                      # (T, B, Hp) bf16
        states.append(x[-1])                          # final hidden per layer

    # ---- Fused LN + mu/var + reparameterisation + decoder latent->hidden ----
    Lp = prep['Lp']
    eps_p = jnp.pad(eps, ((0, 0), (0, Lp - latent_dim)))
    mu_p, lv_p, hidden_p = vae_head(states, prep, eps_p)
    mu = mu_p[:, :latent_dim]
    log_var = lv_p[:, :latent_dim]

    # ---------------- Decoder ----------------
    offs = [0]
    for h in dec_layers:
        offs.append(offs[-1] + h)
    x = prep['dec_emb'][y_ids]                        # (T, B, Ep) bf16
    for i, lp in enumerate(prep['dec_gru']):
        h0 = hidden_p[:, offs[i]:offs[i + 1]].astype(jnp.float32)
        h0 = jnp.pad(h0, ((0, 0), (0, lp['Hp'] - lp['H'])))
        x = gru_layer(x, h0, lp)

    T = x.shape[0]
    Hl = x.shape[2]
    logits = dense(x.reshape(T * B, Hl), prep['dec_out_w'], None,
                   out_dtype=jnp.float32)             # single narrowing at the logits
    out = logits.reshape(T, B, -1)                    # (T, B, vocab)
    return out, mu, log_var


if __name__ == "__main__":
    vocab_size = 16
    embedding_dim = 32
    latent_dim = 16
    enc_layers = [32, 32]
    dec_layers = [32, 32]
    T, B = 8, 2

    key = jax.random.PRNGKey(0)
    k_params, k_x, k_y, k_eps = jax.random.split(key, 4)

    raw = init_params(k_params, vocab_size, embedding_dim,
                      enc_layers, dec_layers, latent_dim)
    prep = prepare_params(raw, embedding_dim=embedding_dim,
                          enc_layers=enc_layers, dec_layers=dec_layers,
                          latent_dim=latent_dim)

    x_ids = jax.random.randint(k_x, (T, B), 1, vocab_size, dtype=jnp.int32)
    y_ids = jax.random.randint(k_y, (T, B), 1, vocab_size, dtype=jnp.int32)
    eps = jax.random.normal(k_eps, (B, latent_dim), jnp.float32)

    out, mu, log_var = gru_vae_forward(prep, x_ids, y_ids, eps,
                                       enc_layers, dec_layers, latent_dim)
    jax.block_until_ready((out, mu, log_var))

    assert out.shape == (T, B, vocab_size)
    assert mu.shape == (B, latent_dim)
    assert log_var.shape == (B, latent_dim)
    print("KERNEL_OK")
</pallas_src>

<mosaic_0001>
module attributes {stable_mosaic.version = 11 : i64} {
  func.func @kernel(%arg0: i32, %arg1: i32, %arg2: memref<8x2x128xbf16, #tpu.memory_space<vmem>>, %arg3: memref<128x384xbf16, #tpu.memory_space<vmem>>, %arg4: memref<1x384xf32, #tpu.memory_space<vmem>>, %arg5: memref<128x384xbf16, #tpu.memory_space<vmem>>, %arg6: memref<1x128xf32, #tpu.memory_space<vmem>>, %arg7: memref<2x128xf32, #tpu.memory_space<vmem>>, %arg8: memref<8x2x128xbf16, #tpu.memory_space<vmem>>, %arg9: memref<8x2x384xf32, #tpu.memory_space<vmem>>, %arg10: memref<2x128xf32, #tpu.memory_space<vmem>>) attributes {dimension_semantics = [#tpu.dimension_semantics<parallel>, #tpu.dimension_semantics<arbitrary>], iteration_bounds = array<i64: 1, 1>, scalar_prefetch = 0 : i64, scratch_operands = 2 : i64, tpu.core_type = #tpu.core_type<tc>, window_params = [{transform_indices = @transform_0, window_bounds = array<i64: 8, 2, 128>}, {pipeline_mode = #tpu.pipeline_mode<synchronous>, transform_indices = @transform_1, window_bounds = array<i64: 128, 384>}, {pipeline_mode = #tpu.pipeline_mode<synchronous>, transform_indices = @transform_2, window_bounds = array<i64: 1, 384>}, {pipeline_mode = #tpu.pipeline_mode<synchronous>, transform_indices = @transform_3, window_bounds = array<i64: 128, 384>}, {pipeline_mode = #tpu.pipeline_mode<synchronous>, transform_indices = @transform_4, window_bounds = array<i64: 1, 128>}, {transform_indices = @transform_5, window_bounds = array<i64: 2, 128>}, {transform_indices = @transform_6, window_bounds = array<i64: 8, 2, 128>}]} {
    %c0_i32 = arith.constant 0 : i32
    %0 = arith.cmpi eq, %arg1, %c0_i32 : i32
    %1 = arith.extui %0 : i1 to i32
    %c0_i32_0 = arith.constant 0 : i32
    %2 = arith.cmpi ne, %1, %c0_i32_0 : i32
    scf.if %2 {
      %c0_153 = arith.constant 0 : index
      %c0_154 = arith.constant 0 : index
      %407 = vector.load %arg7[%c0_153, %c0_154] : memref<2x128xf32, #tpu.memory_space<vmem>>, vector<2x128xf32>
      %c0_155 = arith.constant 0 : index
      %c0_156 = arith.constant 0 : index
      %408 = vector.load %arg10[%c0_155, %c0_156] : memref<2x128xf32, #tpu.memory_space<vmem>>, vector<2x128xf32>
      tpu.vector_store %arg10[%c0_155, %c0_156], %407 {strides = array<i32>} : memref<2x128xf32, #tpu.memory_space<vmem>>, vector<2x128xf32>,
    } else {
    }
    %c0 = arith.constant 0 : index
    %c0_1 = arith.constant 0 : index
    %3 = vector.load %arg4[%c0, %c0_1] : memref<1x384xf32, #tpu.memory_space<vmem>>, vector<1x384xf32>
    %c0_2 = arith.constant 0 : index
    %c0_3 = arith.constant 0 : index
    %4 = vector.load %arg6[%c0_2, %c0_3] : memref<1x128xf32, #tpu.memory_space<vmem>>, vector<1x128xf32>
    %c0_i32_4 = arith.constant 0 : i32
    %5 = arith.index_cast %c0_i32_4 : i32 to index
    %c0_5 = arith.constant 0 : index
    %c0_6 = arith.constant 0 : index
    %6 = vector.load %arg2[%5, %c0_5, %c0_6] : memref<8x2x128xbf16, #tpu.memory_space<vmem>>, vector<1x2x128xbf16>
    %7 = vector.shape_cast %6 : vector<1x2x128xbf16> to vector<2x128xbf16>
    %c0_7 = arith.constant 0 : index
    %c0_8 = arith.constant 0 : index
    %8 = vector.load %arg3[%c0_7, %c0_8] : memref<128x384xbf16, #tpu.memory_space<vmem>>, vector<128x384xbf16>
    %cst = arith.constant dense<0.000000e+00> : vector<2x384xf32>
    %9 = tpu.matmul %7, %8, %cst {dimension_numbers = #tpu.dot_dimension_numbers<[1], [0], [0], [1], [0, 0, 1, 1], [], []>} : vector<2x128xbf16>, vector<128x384xbf16>, vector<2x384xf32> -> vector<2x384xf32>
    %10 = vector.broadcast %3 : vector<1x384xf32> to vector<2x384xf32>
    %11 = arith.addf %9, %10 : vector<2x384xf32>
    %12 = arith.index_cast %c0_i32_4 : i32 to index
    %c0_9 = arith.constant 0 : index
    %c0_10 = arith.constant 0 : index
    %13 = vector.load %arg9[%12, %c0_9, %c0_10] : memref<8x2x384xf32, #tpu.memory_space<vmem>>, vector<1x2x384xf32>
    %14 = vector.shape_cast %13 : vector<1x2x384xf32> to vector<2x384xf32>
    %15 = vector.shape_cast %11 : vector<2x384xf32> to vector<1x2x384xf32>
    tpu.vector_store %arg9[%12, %c0_9, %c0_10], %15 {strides = array<i32>} : memref<8x2x384xf32, #tpu.memory_space<vmem>>, vector<1x2x384xf32>,
    %c1_i32 = arith.constant 1 : i32
    %16 = arith.index_cast %c1_i32 : i32 to index
    %c0_11 = arith.constant 0 : index
    %c0_12 = arith.constant 0 : index
    %17 = vector.load %arg2[%16, %c0_11, %c0_12] : memref<8x2x128xbf16, #tpu.memory_space<vmem>>, vector<1x2x128xbf16>
    %18 = vector.shape_cast %17 : vector<1x2x128xbf16> to vector<2x128xbf16>
    %c0_13 = arith.constant 0 : index
    %c0_14 = arith.constant 0 : index
    %19 = vector.load %arg3[%c0_13, %c0_14] : memref<128x384xbf16, #tpu.memory_space<vmem>>, vector<128x384xbf16>
    %cst_15 = arith.constant dense<0.000000e+00> : vector<2x384xf32>
    %20 = tpu.matmul %18, %19, %cst_15 {dimension_numbers = #tpu.dot_dimension_numbers<[1], [0], [0], [1], [0, 0, 1, 1], [], []>} : vector<2x128xbf16>, vector<128x384xbf16>, vector<2x384xf32> -> vector<2x384xf32>
    %21 = vector.broadcast %3 : vector<1x384xf32> to vector<2x384xf32>
    %22 = arith.addf %20, %21 : vector<2x384xf32>
    %23 = arith.index_cast %c1_i32 : i32 to index
    %c0_16 = arith.constant 0 : index
    %c0_17 = arith.constant 0 : index
    %24 = vector.load %arg9[%23, %c0_16, %c0_17] : memref<8x2x384xf32, #tpu.memory_space<vmem>>, vector<1x2x384xf32>
    %25 = vector.shape_cast %24 : vector<1x2x384xf32> to vector<2x384xf32>
    %26 = vector.shape_cast %22 : vector<2x384xf32> to vector<1x2x384xf32>
    tpu.vector_store %arg9[%23, %c0_16, %c0_17], %26 {strides = array<i32>} : memref<8x2x384xf32, #tpu.memory_space<vmem>>, vector<1x2x384xf32>,
    %c2_i32 = arith.constant 2 : i32
    %27 = arith.index_cast %c2_i32 : i32 to index
    %c0_18 = arith.constant 0 : index
    %c0_19 = arith.constant 0 : index
    %28 = vector.load %arg2[%27, %c0_18, %c0_19] : memref<8x2x128xbf16, #tpu.memory_space<vmem>>, vector<1x2x128xbf16>
    %29 = vector.shape_cast %28 : vector<1x2x128xbf16> to vector<2x128xbf16>
    %c0_20 = arith.constant 0 : index
    %c0_21 = arith.constant 0 : index
    %30 = vector.load %arg3[%c0_20, %c0_21] : memref<128x384xbf16, #tpu.memory_space<vmem>>, vector<128x384xbf16>
    %cst_22 = arith.constant dense<0.000000e+00> : vector<2x384xf32>
    %31 = tpu.matmul %29, %30, %cst_22 {dimension_numbers = #tpu.dot_dimension_numbers<[1], [0], [0], [1], [0, 0, 1, 1], [], []>} : vector<2x128xbf16>, vector<128x384xbf16>, vector<2x384xf32> -> vector<2x384xf32>
    %32 = vector.broadcast %3 : vector<1x384xf32> to vector<2x384xf32>
    %33 = arith.addf %31, %32 : vector<2x384xf32>
    %34 = arith.index_cast %c2_i32 : i32 to index
    %c0_23 = arith.constant 0 : index
    %c0_24 = arith.constant 0 : index
    %35 = vector.load %arg9[%34, %c0_23, %c0_24] : memref<8x2x384xf32, #tpu.memory_space<vmem>>, vector<1x2x384xf32>
    %36 = vector.shape_cast %35 : vector<1x2x384xf32> to vector<2x384xf32>
    %37 = vector.shape_cast %33 : vector<2x384xf32> to vector<1x2x384xf32>
    tpu.vector_store %arg9[%34, %c0_23, %c0_24], %37 {strides = array<i32>} : memref<8x2x384xf32, #tpu.memory_space<vmem>>, vector<1x2x384xf32>,
    %c3_i32 = arith.constant 3 : i32
    %38 = arith.index_cast %c3_i32 : i32 to index
    %c0_25 = arith.constant 0 : index
    %c0_26 = arith.constant 0 : index
    %39 = vector.load %arg2[%38, %c0_25, %c0_26] : memref<8x2x128xbf16, #tpu.memory_space<vmem>>, vector<1x2x128xbf16>
    %40 = vector.shape_cast %39 : vector<1x2x128xbf16> to vector<2x128xbf16>
    %c0_27 = arith.constant 0 : index
    %c0_28 = arith.constant 0 : index
    %41 = vector.load %arg3[%c0_27, %c0_28] : memref<128x384xbf16, #tpu.memory_space<vmem>>, vector<128x384xbf16>
    %cst_29 = arith.constant dense<0.000000e+00> : vector<2x384xf32>
    %42 = tpu.matmul %40, %41, %cst_29 {dimension_numbers = #tpu.dot_dimension_numbers<[1], [0], [0], [1], [0, 0, 1, 1], [], []>} : vector<2x128xbf16>, vector<128x384xbf16>, vector<2x384xf32> -> vector<2x384xf32>
    %43 = vector.broadcast %3 : vector<1x384xf32> to vector<2x384xf32>
    %44 = arith.addf %42, %43 : vector<2x384xf32>
    %45 = arith.index_cast %c3_i32 : i32 to index
    %c0_30 = arith.constant 0 : index
    %c0_31 = arith.constant 0 : index
    %46 = vector.load %arg9[%45, %c0_30, %c0_31] : memref<8x2x384xf32, #tpu.memory_space<vmem>>, vector<1x2x384xf32>
    %47 = vector.shape_cast %46 : vector<1x2x384xf32> to vector<2x384xf32>
    %48 = vector.shape_cast %44 : vector<2x384xf32> to vector<1x2x384xf32>
    tpu.vector_store %arg9[%45, %c0_30, %c0_31], %48 {strides = array<i32>} : memref<8x2x384xf32, #tpu.memory_space<vmem>>, vector<1x2x384xf32>,
    %c4_i32 = arith.constant 4 : i32
    %49 = arith.index_cast %c4_i32 : i32 to index
    %c0_32 = arith.constant 0 : index
    %c0_33 = arith.constant 0 : index
    %50 = vector.load %arg2[%49, %c0_32, %c0_33] : memref<8x2x128xbf16, #tpu.memory_space<vmem>>, vector<1x2x128xbf16>
    %51 = vector.shape_cast %50 : vector<1x2x128xbf16> to vector<2x128xbf16>
    %c0_34 = arith.constant 0 : index
    %c0_35 = arith.constant 0 : index
    %52 = vector.load %arg3[%c0_34, %c0_35] : memref<128x384xbf16, #tpu.memory_space<vmem>>, vector<128x384xbf16>
    %cst_36 = arith.constant dense<0.000000e+00> : vector<2x384xf32>
    %53 = tpu.matmul %51, %52, %cst_36 {dimension_numbers = #tpu.dot_dimension_numbers<[1], [0], [0], [1], [0, 0, 1, 1], [], []>} : vector<2x128xbf16>, vector<128x384xbf16>, vector<2x384xf32> -> vector<2x384xf32>
    %54 = vector.broadcast %3 : vector<1x384xf32> to vector<2x384xf32>
    %55 = arith.addf %53, %54 : vector<2x384xf32>
    %56 = arith.index_cast %c4_i32 : i32 to index
    %c0_37 = arith.constant 0 : index
    %c0_38 = arith.constant 0 : index
    %57 = vector.load %arg9[%56, %c0_37, %c0_38] : memref<8x2x384xf32, #tpu.memory_space<vmem>>, vector<1x2x384xf32>
    %58 = vector.shape_cast %57 : vector<1x2x384xf32> to vector<2x384xf32>
    %59 = vector.shape_cast %55 : vector<2x384xf32> to vector<1x2x384xf32>
    tpu.vector_store %arg9[%56, %c0_37, %c0_38], %59 {strides = array<i32>} : memref<8x2x384xf32, #tpu.memory_space<vmem>>, vector<1x2x384xf32>,
    %c5_i32 = arith.constant 5 : i32
    %60 = arith.index_cast %c5_i32 : i32 to index
    %c0_39 = arith.constant 0 : index
    %c0_40 = arith.constant 0 : index
    %61 = vector.load %arg2[%60, %c0_39, %c0_40] : memref<8x2x128xbf16, #tpu.memory_space<vmem>>, vector<1x2x128xbf16>
    %62 = vector.shape_cast %61 : vector<1x2x128xbf16> to vector<2x128xbf16>
    %c0_41 = arith.constant 0 : index
    %c0_42 = arith.constant 0 : index
    %63 = vector.load %arg3[%c0_41, %c0_42] : memref<128x384xbf16, #tpu.memory_space<vmem>>, vector<128x384xbf16>
    %cst_43 = arith.constant dense<0.000000e+00> : vector<2x384xf32>
    %64 = tpu.matmul %62, %63, %cst_43 {dimension_numbers = #tpu.dot_dimension_numbers<[1], [0], [0], [1], [0, 0, 1, 1], [], []>} : vector<2x128xbf16>, vector<128x384xbf16>, vector<2x384xf32> -> vector<2x384xf32>
    %65 = vector.broadcast %3 : vector<1x384xf32> to vector<2x384xf32>
    %66 = arith.addf %64, %65 : vector<2x384xf32>
    %67 = arith.index_cast %c5_i32 : i32 to index
    %c0_44 = arith.constant 0 : index
    %c0_45 = arith.constant 0 : index
    %68 = vector.load %arg9[%67, %c0_44, %c0_45] : memref<8x2x384xf32, #tpu.memory_space<vmem>>, vector<1x2x384xf32>
    %69 = vector.shape_cast %68 : vector<1x2x384xf32> to vector<2x384xf32>
    %70 = vector.shape_cast %66 : vector<2x384xf32> to vector<1x2x384xf32>
    tpu.vector_store %arg9[%67, %c0_44, %c0_45], %70 {strides = array<i32>} : memref<8x2x384xf32, #tpu.memory_space<vmem>>, vector<1x2x384xf32>,
    %c6_i32 = arith.constant 6 : i32
    %71 = arith.index_cast %c6_i32 : i32 to index
    %c0_46 = arith.constant 0 : index
    %c0_47 = arith.constant 0 : index
    %72 = vector.load %arg2[%71, %c0_46, %c0_47] : memref<8x2x128xbf16, #tpu.memory_space<vmem>>, vector<1x2x128xbf16>
    %73 = vector.shape_cast %72 : vector<1x2x128xbf16> to vector<2x128xbf16>
    %c0_48 = arith.constant 0 : index
    %c0_49 = arith.constant 0 : index
    %74 = vector.load %arg3[%c0_48, %c0_49] : memref<128x384xbf16, #tpu.memory_space<vmem>>, vector<128x384xbf16>
    %cst_50 = arith.constant dense<0.000000e+00> : vector<2x384xf32>
    %75 = tpu.matmul %73, %74, %cst_50 {dimension_numbers = #tpu.dot_dimension_numbers<[1], [0], [0], [1], [0, 0, 1, 1], [], []>} : vector<2x128xbf16>, vector<128x384xbf16>, vector<2x384xf32> -> vector<2x384xf32>
    %76 = vector.broadcast %3 : vector<1x384xf32> to vector<2x384xf32>
    %77 = arith.addf %75, %76 : vector<2x384xf32>
    %78 = arith.index_cast %c6_i32 : i32 to index
    %c0_51 = arith.constant 0 : index
    %c0_52 = arith.constant 0 : index
    %79 = vector.load %arg9[%78, %c0_51, %c0_52] : memref<8x2x384xf32, #tpu.memory_space<vmem>>, vector<1x2x384xf32>
    %80 = vector.shape_cast %79 : vector<1x2x384xf32> to vector<2x384xf32>
    %81 = vector.shape_cast %77 : vector<2x384xf32> to vector<1x2x384xf32>
    tpu.vector_store %arg9[%78, %c0_51, %c0_52], %81 {strides = array<i32>} : memref<8x2x384xf32, #tpu.memory_space<vmem>>, vector<1x2x384xf32>,
    %c7_i32 = arith.constant 7 : i32
    %82 = arith.index_cast %c7_i32 : i32 to index
    %c0_53 = arith.constant 0 : index
    %c0_54 = arith.constant 0 : index
    %83 = vector.load %arg2[%82, %c0_53, %c0_54] : memref<8x2x128xbf16, #tpu.memory_space<vmem>>, vector<1x2x128xbf16>
    %84 = vector.shape_cast %83 : vector<1x2x128xbf16> to vector<2x128xbf16>
    %c0_55 = arith.constant 0 : index
    %c0_56 = arith.constant 0 : index
    %85 = vector.load %arg3[%c0_55, %c0_56] : memref<128x384xbf16, #tpu.memory_space<vmem>>, vector<128x384xbf16>
    %cst_57 = arith.constant dense<0.000000e+00> : vector<2x384xf32>
    %86 = tpu.matmul %84, %85, %cst_57 {dimension_numbers = #tpu.dot_dimension_numbers<[1], [0], [0], [1], [0, 0, 1, 1], [], []>} : vector<2x128xbf16>, vector<128x384xbf16>, vector<2x384xf32> -> vector<2x384xf32>
    %87 = vector.broadcast %3 : vector<1x384xf32> to vector<2x384xf32>
    %88 = arith.addf %86, %87 : vector<2x384xf32>
    %89 = arith.index_cast %c7_i32 : i32 to index
    %c0_58 = arith.constant 0 : index
    %c0_59 = arith.constant 0 : index
    %90 = vector.load %arg9[%89, %c0_58, %c0_59] : memref<8x2x384xf32, #tpu.memory_space<vmem>>, vector<1x2x384xf32>
    %91 = vector.shape_cast %90 : vector<1x2x384xf32> to vector<2x384xf32>
    %92 = vector.shape_cast %88 : vector<2x384xf32> to vector<1x2x384xf32>
    tpu.vector_store %arg9[%89, %c0_58, %c0_59], %92 {strides = array<i32>} : memref<8x2x384xf32, #tpu.memory_space<vmem>>, vector<1x2x384xf32>,
    %c8_i32 = arith.constant 8 : i32
    %c0_60 = arith.constant 0 : index
    %c0_61 = arith.constant 0 : index
    %93 = vector.load %arg10[%c0_60, %c0_61] : memref<2x128xf32, #tpu.memory_space<vmem>>, vector<2x128xf32>
    %c0_i32_62 = arith.constant 0 : i32
    %94 = arith.truncf %93 : vector<2x128xf32> to vector<2x128xbf16>
    %c0_63 = arith.constant 0 : index
    %c0_64 = arith.constant 0 : index
    %95 = vector.load %arg5[%c0_63, %c0_64] : memref<128x384xbf16, #tpu.memory_space<vmem>>, vector<128x384xbf16>
    %cst_65 = arith.constant dense<0.000000e+00> : vector<2x384xf32>
    %96 = tpu.matmul %94, %95, %cst_65 {dimension_numbers = #tpu.dot_dimension_numbers<[1], [0], [0], [1], [0, 0, 1, 1], [], []>} : vector<2x128xbf16>, vector<128x384xbf16>, vector<2x384xf32> -> vector<2x384xf32>
    %97 = arith.index_cast %c0_i32_62 : i32 to index
    %c0_66 = arith.constant 0 : index
    %c0_67 = arith.constant 0 : index
    %98 = vector.load %arg9[%97, %c0_66, %c0_67] : memref<8x2x384xf32, #tpu.memory_space<vmem>>, vector<1x2x384xf32>
    %99 = vector.shape_cast %98 : vector<1x2x384xf32> to vector<2x384xf32>
    %100 = vector.extract_strided_slice %99 {offsets = [0, 0], sizes = [2, 128], strides = [1, 1]} : vector<2x384xf32> to vector<2x128xf32>
    %101 = vector.extract_strided_slice %96 {offsets = [0, 0], sizes = [2, 128], strides = [1, 1]} : vector<2x384xf32> to vector<2x128xf32>
    %102 = arith.addf %100, %101 : vector<2x128xf32>
    %103 = arith.negf %102 : vector<2x128xf32>
    %104 = math.exp %103 : vector<2x128xf32>
    %cst_68 = arith.constant 1.000000e+00 : f32
    %105 = vector.broadcast %cst_68 : f32 to vector<2x128xf32>
    %106 = arith.addf %105, %104 : vector<2x128xf32>
    %107 = arith.divf %105, %106 : vector<2x128xf32>
    %108 = vector.extract_strided_slice %99 {offsets = [0, 128], sizes = [2, 128], strides = [1, 1]} : vector<2x384xf32> to vector<2x128xf32>
    %109 = vector.extract_strided_slice %96 {offsets = [0, 128], sizes = [2, 128], strides = [1, 1]} : vector<2x384xf32> to vector<2x128xf32>
    %110 = arith.addf %108, %109 : vector<2x128xf32>
    %111 = arith.negf %110 : vector<2x128xf32>
    %112 = math.exp %111 : vector<2x128xf32>
    %cst_69 = arith.constant 1.000000e+00 : f32
    %113 = vector.broadcast %cst_69 : f32 to vector<2x128xf32>
    %114 = arith.addf %113, %112 : vector<2x128xf32>
    %115 = arith.divf %113, %114 : vector<2x128xf32>
    %116 = vector.extract_strided_slice %99 {offsets = [0, 256], sizes = [2, 128], strides = [1, 1]} : vector<2x384xf32> to vector<2x128xf32>
    %117 = vector.extract_strided_slice %96 {offsets = [0, 256], sizes = [2, 128], strides = [1, 1]} : vector<2x384xf32> to vector<2x128xf32>
    %118 = vector.broadcast %4 : vector<1x128xf32> to vector<2x128xf32>
    %119 = arith.addf %117, %118 : vector<2x128xf32>
    %120 = arith.mulf %107, %119 : vector<2x128xf32>
    %121 = arith.addf %116, %120 : vector<2x128xf32>
    %122 = math.tanh %121 : vector<2x128xf32>
    %cst_70 = arith.constant 1.000000e+00 : f32
    %123 = vector.broadcast %cst_70 : f32 to vector<2x128xf32>
    %124 = arith.subf %123, %115 : vector<2x128xf32>
    %125 = arith.mulf %124, %122 : vector<2x128xf32>
    %126 = arith.mulf %115, %93 : vector<2x128xf32>
    %127 = arith.addf %125, %126 : vector<2x128xf32>
    %128 = arith.truncf %127 : vector<2x128xf32> to vector<2x128xbf16>
    %129 = arith.index_cast %c0_i32_62 : i32 to index
    %c0_71 = arith.constant 0 : index
    %c0_72 = arith.constant 0 : index
    %130 = vector.load %arg8[%129, %c0_71, %c0_72] : memref<8x2x128xbf16, #tpu.memory_space<vmem>>, vector<1x2x128xbf16>
    %131 = vector.shape_cast %130 : vector<1x2x128xbf16> to vector<2x128xbf16>
    %132 = vector.shape_cast %128 : vector<2x128xbf16> to vector<1x2x128xbf16>
    tpu.vector_store %arg8[%129, %c0_71, %c0_72], %132 {strides = array<i32>} : memref<8x2x128xbf16, #tpu.memory_space<vmem>>, vector<1x2x128xbf16>,
    %c1_i32_73 = arith.constant 1 : i32
    %133 = arith.truncf %127 : vector<2x128xf32> to vector<2x128xbf16>
    %c0_74 = arith.constant 0 : index
    %c0_75 = arith.constant 0 : index
    %134 = vector.load %arg5[%c0_74, %c0_75] : memref<128x384xbf16, #tpu.memory_space<vmem>>, vector<128x384xbf16>
    %cst_76 = arith.constant dense<0.000000e+00> : vector<2x384xf32>
    %135 = tpu.matmul %133, %134, %cst_76 {dimension_numbers = #tpu.dot_dimension_numbers<[1], [0], [0], [1], [0, 0, 1, 1], [], []>} : vector<2x128xbf16>, vector<128x384xbf16>, vector<2x384xf32> -> vector<2x384xf32>
    %136 = arith.index_cast %c1_i32_73 : i32 to index
    %c0_77 = arith.constant 0 : index
    %c0_78 = arith.constant 0 : index
    %137 = vector.load %arg9[%136, %c0_77, %c0_78] : memref<8x2x384xf32, #tpu.memory_space<vmem>>, vector<1x2x384xf32>
    %138 = vector.shape_cast %137 : vector<1x2x384xf32> to vector<2x384xf32>
    %139 = vector.extract_strided_slice %138 {offsets = [0, 0], sizes = [2, 128], strides = [1, 1]} : vector<2x384xf32> to vector<2x128xf32>
    %140 = vector.extract_strided_slice %135 {offsets = [0, 0], sizes = [2, 128], strides = [1, 1]} : vector<2x384xf32> to vector<2x128xf32>
    %141 = arith.addf %139, %140 : vector<2x128xf32>
    %142 = arith.negf %141 : vector<2x128xf32>
    %143 = math.exp %142 : vector<2x128xf32>
    %cst_79 = arith.constant 1.000000e+00 : f32
    %144 = vector.broadcast %cst_79 : f32 to vector<2x128xf32>
    %145 = arith.addf %144, %143 : vector<2x128xf32>
    %146 = arith.divf %144, %145 : vector<2x128xf32>
    %147 = vector.extract_strided_slice %138 {offsets = [0, 128], sizes = [2, 128], strides = [1, 1]} : vector<2x384xf32> to vector<2x128xf32>
    %148 = vector.extract_strided_slice %135 {offsets = [0, 128], sizes = [2, 128], strides = [1, 1]} : vector<2x384xf32> to vector<2x128xf32>
    %149 = arith.addf %147, %148 : vector<2x128xf32>
    %150 = arith.negf %149 : vector<2x128xf32>
    %151 = math.exp %150 : vector<2x128xf32>
    %cst_80 = arith.constant 1.000000e+00 : f32
    %152 = vector.broadcast %cst_80 : f32 to vector<2x128xf32>
    %153 = arith.addf %152, %151 : vector<2x128xf32>
    %154 = arith.divf %152, %153 : vector<2x128xf32>
    %155 = vector.extract_strided_slice %138 {offsets = [0, 256], sizes = [2, 128], strides = [1, 1]} : vector<2x384xf32> to vector<2x128xf32>
    %156 = vector.extract_strided_slice %135 {offsets = [0, 256], sizes = [2, 128], strides = [1, 1]} : vector<2x384xf32> to vector<2x128xf32>
    %157 = vector.broadcast %4 : vector<1x128xf32> to vector<2x128xf32>
    %158 = arith.addf %156, %157 : vector<2x128xf32>
    %159 = arith.mulf %146, %158 : vector<2x128xf32>
    %160 = arith.addf %155, %159 : vector<2x128xf32>
    %161 = math.tanh %160 : vector<2x128xf32>
    %cst_81 = arith.constant 1.000000e+00 : f32
    %162 = vector.broadcast %cst_81 : f32 to vector<2x128xf32>
    %163 = arith.subf %162, %154 : vector<2x128xf32>
    %164 = arith.mulf %163, %161 : vector<2x128xf32>
    %165 = arith.mulf %154, %127 : vector<2x128xf32>
    %166 = arith.addf %164, %165 : vector<2x128xf32>
    %167 = arith.truncf %166 : vector<2x128xf32> to vector<2x128xbf16>
    %168 = arith.index_cast %c1_i32_73 : i32 to index
    %c0_82 = arith.constant 0 : index
    %c0_83 = arith.constant 0 : index
    %169 = vector.load %arg8[%168, %c0_82, %c0_83] : memref<8x2x128xbf16, #tpu.memory_space<vmem>>, vector<1x2x128xbf16>
    %170 = vector.shape_cast %169 : vector<1x2x128xbf16> to vector<2x128xbf16>
    %171 = vector.shape_cast %167 : vector<2x128xbf16> to vector<1x2x128xbf16>
    tpu.vector_store %arg8[%168, %c0_82, %c0_83], %171 {strides = array<i32>} : memref<8x2x128xbf16, #tpu.memory_space<vmem>>, vector<1x2x128xbf16>,
    %c2_i32_84 = arith.constant 2 : i32
    %172 = arith.truncf %166 : vector<2x128xf32> to vector<2x128xbf16>
    %c0_85 = arith.constant 0 : index
    %c0_86 = arith.constant 0 : index
    %173 = vector.load %arg5[%c0_85, %c0_86] : memref<128x384xbf16, #tpu.memory_space<vmem>>, vector<128x384xbf16>
    %cst_87 = arith.constant dense<0.000000e+00> : vector<2x384xf32>
    %174 = tpu.matmul %172, %173, %cst_87 {dimension_numbers = #tpu.dot_dimension_numbers<[1], [0], [0], [1], [0, 0, 1, 1], [], []>} : vector<2x128xbf16>, vector<128x384xbf16>, vector<2x384xf32> -> vector<2x384xf32>
    %175 = arith.index_cast %c2_i32_84 : i32 to index
    %c0_88 = arith.constant 0 : index
    %c0_89 = arith.constant 0 : index
    %176 = vector.load %arg9[%175, %c0_88, %c0_89] : memref<8x2x384xf32, #tpu.memory_space<vmem>>, vector<1x2x384xf32>
    %177 = vector.shape_cast %176 : vector<1x2x384xf32> to vector<2x384xf32>
    %178 = vector.extract_strided_slice %177 {offsets = [0, 0], sizes = [2, 128], strides = [1, 1]} : vector<2x384xf32> to vector<2x128xf32>
    %179 = vector.extract_strided_slice %174 {offsets = [0, 0], sizes = [2, 128], strides = [1, 1]} : vector<2x384xf32> to vector<2x128xf32>
    %180 = arith.addf %178, %179 : vector<2x128xf32>
    %181 = arith.negf %180 : vector<2x128xf32>
    %182 = math.exp %181 : vector<2x128xf32>
    %cst_90 = arith.constant 1.000000e+00 : f32
    %183 = vector.broadcast %cst_90 : f32 to vector<2x128xf32>
    %184 = arith.addf %183, %182 : vector<2x128xf32>
    %185 = arith.divf %183, %184 : vector<2x128xf32>
    %186 = vector.extract_strided_slice %177 {offsets = [0, 128], sizes = [2, 128], strides = [1, 1]} : vector<2x384xf32> to vector<2x128xf32>
    %187 = vector.extract_strided_slice %174 {offsets = [0, 128], sizes = [2, 128], strides = [1, 1]} : vector<2x384xf32> to vector<2x128xf32>
    %188 = arith.addf %186, %187 : vector<2x128xf32>
    %189 = arith.negf %188 : vector<2x128xf32>
    %190 = math.exp %189 : vector<2x128xf32>
    %cst_91 = arith.constant 1.000000e+00 : f32
    %191 = vector.broadcast %cst_91 : f32 to vector<2x128xf32>
    %192 = arith.addf %191, %190 : vector<2x128xf32>
    %193 = arith.divf %191, %192 : vector<2x128xf32>
    %194 = vector.extract_strided_slice %177 {offsets = [0, 256], sizes = [2, 128], strides = [1, 1]} : vector<2x384xf32> to vector<2x128xf32>
    %195 = vector.extract_strided_slice %174 {offsets = [0, 256], sizes = [2, 128], strides = [1, 1]} : vector<2x384xf32> to vector<2x128xf32>
    %196 = vector.broadcast %4 : vector<1x128xf32> to vector<2x128xf32>
    %197 = arith.addf %195, %196 : vector<2x128xf32>
    %198 = arith.mulf %185, %197 : vector<2x128xf32>
    %199 = arith.addf %194, %198 : vector<2x128xf32>
    %200 = math.tanh %199 : vector<2x128xf32>
    %cst_92 = arith.constant 1.000000e+00 : f32
    %201 = vector.broadcast %cst_92 : f32 to vector<2x128xf32>
    %202 = arith.subf %201, %193 : vector<2x128xf32>
    %203 = arith.mulf %202, %200 : vector<2x128xf32>
    %204 = arith.mulf %193, %166 : vector<2x128xf32>
    %205 = arith.addf %203, %204 : vector<2x128xf32>
    %206 = arith.truncf %205 : vector<2x128xf32> to vector<2x128xbf16>
    %207 = arith.index_cast %c2_i32_84 : i32 to index
    %c0_93 = arith.constant 0 : index
    %c0_94 = arith.constant 0 : index
    %208 = vector.load %arg8[%207, %c0_93, %c0_94] : memref<8x2x128xbf16, #tpu.memory_space<vmem>>, vector<1x2x128xbf16>
    %209 = vector.shape_cast %208 : vector<1x2x128xbf16> to vector<2x128xbf16>
    %210 = vector.shape_cast %206 : vector<2x128xbf16> to vector<1x2x128xbf16>
    tpu.vector_store %arg8[%207, %c0_93, %c0_94], %210 {strides = array<i32>} : memref<8x2x128xbf16, #tpu.memory_space<vmem>>, vector<1x2x128xbf16>,
    %c3_i32_95 = arith.constant 3 : i32
    %211 = arith.truncf %205 : vector<2x128xf32> to vector<2x128xbf16>
    %c0_96 = arith.constant 0 : index
    %c0_97 = arith.constant 0 : index
    %212 = vector.load %arg5[%c0_96, %c0_97] : memref<128x384xbf16, #tpu.memory_space<vmem>>, vector<128x384xbf16>
    %cst_98 = arith.constant dense<0.000000e+00> : vector<2x384xf32>
    %213 = tpu.matmul %211, %212, %cst_98 {dimension_numbers = #tpu.dot_dimension_numbers<[1], [0], [0], [1], [0, 0, 1, 1], [], []>} : vector<2x128xbf16>, vector<128x384xbf16>, vector<2x384xf32> -> vector<2x384xf32>
    %214 = arith.index_cast %c3_i32_95 : i32 to index
    %c0_99 = arith.constant 0 : index
    %c0_100 = arith.constant 0 : index
    %215 = vector.load %arg9[%214, %c0_99, %c0_100] : memref<8x2x384xf32, #tpu.memory_space<vmem>>, vector<1x2x384xf32>
    %216 = vector.shape_cast %215 : vector<1x2x384xf32> to vector<2x384xf32>
    %217 = vector.extract_strided_slice %216 {offsets = [0, 0], sizes = [2, 128], strides = [1, 1]} : vector<2x384xf32> to vector<2x128xf32>
    %218 = vector.extract_strided_slice %213 {offsets = [0, 0], sizes = [2, 128], strides = [1, 1]} : vector<2x384xf32> to vector<2x128xf32>
    %219 = arith.addf %217, %218 : vector<2x128xf32>
    %220 = arith.negf %219 : vector<2x128xf32>
    %221 = math.exp %220 : vector<2x128xf32>
    %cst_101 = arith.constant 1.000000e+00 : f32
    %222 = vector.broadcast %cst_101 : f32 to vector<2x128xf32>
    %223 = arith.addf %222, %221 : vector<2x128xf32>
    %224 = arith.divf %222, %223 : vector<2x128xf32>
    %225 = vector.extract_strided_slice %216 {offsets = [0, 128], sizes = [2, 128], strides = [1, 1]} : vector<2x384xf32> to vector<2x128xf32>
    %226 = vector.extract_strided_slice %213 {offsets = [0, 128], sizes = [2, 128], strides = [1, 1]} : vector<2x384xf32> to vector<2x128xf32>
    %227 = arith.addf %225, %226 : vector<2x128xf32>
    %228 = arith.negf %227 : vector<2x128xf32>
    %229 = math.exp %228 : vector<2x128xf32>
    %cst_102 = arith.constant 1.000000e+00 : f32
    %230 = vector.broadcast %cst_102 : f32 to vector<2x128xf32>
    %231 = arith.addf %230, %229 : vector<2x128xf32>
    %232 = arith.divf %230, %231 : vector<2x128xf32>
    %233 = vector.extract_strided_slice %216 {offsets = [0, 256], sizes = [2, 128], strides = [1, 1]} : vector<2x384xf32> to vector<2x128xf32>
    %234 = vector.extract_strided_slice %213 {offsets = [0, 256], sizes = [2, 128], strides = [1, 1]} : vector<2x384xf32> to vector<2x128xf32>
    %235 = vector.broadcast %4 : vector<1x128xf32> to vector<2x128xf32>
    %236 = arith.addf %234, %235 : vector<2x128xf32>
    %237 = arith.mulf %224, %236 : vector<2x128xf32>
    %238 = arith.addf %233, %237 : vector<2x128xf32>
    %239 = math.tanh %238 : vector<2x128xf32>
    %cst_103 = arith.constant 1.000000e+00 : f32
    %240 = vector.broadcast %cst_103 : f32 to vector<2x128xf32>
    %241 = arith.subf %240, %232 : vector<2x128xf32>
    %242 = arith.mulf %241, %239 : vector<2x128xf32>
    %243 = arith.mulf %232, %205 : vector<2x128xf32>
    %244 = arith.addf %242, %243 : vector<2x128xf32>
    %245 = arith.truncf %244 : vector<2x128xf32> to vector<2x128xbf16>
    %246 = arith.index_cast %c3_i32_95 : i32 to index
    %c0_104 = arith.constant 0 : index
    %c0_105 = arith.constant 0 : index
    %247 = vector.load %arg8[%246, %c0_104, %c0_105] : memref<8x2x128xbf16, #tpu.memory_space<vmem>>, vector<1x2x128xbf16>
    %248 = vector.shape_cast %247 : vector<1x2x128xbf16> to vector<2x128xbf16>
    %249 = vector.shape_cast %245 : vector<2x128xbf16> to vector<1x2x128xbf16>
    tpu.vector_store %arg8[%246, %c0_104, %c0_105], %249 {strides = array<i32>} : memref<8x2x128xbf16, #tpu.memory_space<vmem>>, vector<1x2x128xbf16>,
    %c4_i32_106 = arith.constant 4 : i32
    %250 = arith.truncf %244 : vector<2x128xf32> to vector<2x128xbf16>
    %c0_107 = arith.constant 0 : index
    %c0_108 = arith.constant 0 : index
    %251 = vector.load %arg5[%c0_107, %c0_108] : memref<128x384xbf16, #tpu.memory_space<vmem>>, vector<128x384xbf16>
    %cst_109 = arith.constant dense<0.000000e+00> : vector<2x384xf32>
    %252 = tpu.matmul %250, %251, %cst_109 {dimension_numbers = #tpu.dot_dimension_numbers<[1], [0], [0], [1], [0, 0, 1, 1], [], []>} : vector<2x128xbf16>, vector<128x384xbf16>, vector<2x384xf32> -> vector<2x384xf32>
    %253 = arith.index_cast %c4_i32_106 : i32 to index
    %c0_110 = arith.constant 0 : index
    %c0_111 = arith.constant 0 : index
    %254 = vector.load %arg9[%253, %c0_110, %c0_111] : memref<8x2x384xf32, #tpu.memory_space<vmem>>, vector<1x2x384xf32>
    %255 = vector.shape_cast %254 : vector<1x2x384xf32> to vector<2x384xf32>
    %256 = vector.extract_strided_slice %255 {offsets = [0, 0], sizes = [2, 128], strides = [1, 1]} : vector<2x384xf32> to vector<2x128xf32>
    %257 = vector.extract_strided_slice %252 {offsets = [0, 0], sizes = [2, 128], strides = [1, 1]} : vector<2x384xf32> to vector<2x128xf32>
    %258 = arith.addf %256, %257 : vector<2x128xf32>
    %259 = arith.negf %258 : vector<2x128xf32>
    %260 = math.exp %259 : vector<2x128xf32>
    %cst_112 = arith.constant 1.000000e+00 : f32
    %261 = vector.broadcast %cst_112 : f32 to vector<2x128xf32>
    %262 = arith.addf %261, %260 : vector<2x128xf32>
    %263 = arith.divf %261, %262 : vector<2x128xf32>
    %264 = vector.extract_strided_slice %255 {offsets = [0, 128], sizes = [2, 128], strides = [1, 1]} : vector<2x384xf32> to vector<2x128xf32>
    %265 = vector.extract_strided_slice %252 {offsets = [0, 128], sizes = [2, 128], strides = [1, 1]} : vector<2x384xf32> to vector<2x128xf32>
    %266 = arith.addf %264, %265 : vector<2x128xf32>
    %267 = arith.negf %266 : vector<2x128xf32>
    %268 = math.exp %267 : vector<2x128xf32>
    %cst_113 = arith.constant 1.000000e+00 : f32
    %269 = vector.broadcast %cst_113 : f32 to vector<2x128xf32>
    %270 = arith.addf %269, %268 : vector<2x128xf32>
    %271 = arith.divf %269, %270 : vector<2x128xf32>
    %272 = vector.extract_strided_slice %255 {offsets = [0, 256], sizes = [2, 128], strides = [1, 1]} : vector<2x384xf32> to vector<2x128xf32>
    %273 = vector.extract_strided_slice %252 {offsets = [0, 256], sizes = [2, 128], strides = [1, 1]} : vector<2x384xf32> to vector<2x128xf32>
    %274 = vector.broadcast %4 : vector<1x128xf32> to vector<2x128xf32>
    %275 = arith.addf %273, %274 : vector<2x128xf32>
    %276 = arith.mulf %263, %275 : vector<2x128xf32>
    %277 = arith.addf %272, %276 : vector<2x128xf32>
    %278 = math.tanh %277 : vector<2x128xf32>
    %cst_114 = arith.constant 1.000000e+00 : f32
    %279 = vector.broadcast %cst_114 : f32 to vector<2x128xf32>
    %280 = arith.subf %279, %271 : vector<2x128xf32>
    %281 = arith.mulf %280, %278 : vector<2x128xf32>
    %282 = arith.mulf %271, %244 : vector<2x128xf32>
    %283 = arith.addf %281, %282 : vector<2x128xf32>
    %284 = arith.truncf %283 : vector<2x128xf32> to vector<2x128xbf16>
    %285 = arith.index_cast %c4_i32_106 : i32 to index
    %c0_115 = arith.constant 0 : index
    %c0_116 = arith.constant 0 : index
    %286 = vector.load %arg8[%285, %c0_115, %c0_116] : memref<8x2x128xbf16, #tpu.memory_space<vmem>>, vector<1x2x128xbf16>
    %287 = vector.shape_cast %286 : vector<1x2x128xbf16> to vector<2x128xbf16>
    %288 = vector.shape_cast %284 : vector<2x128xbf16> to vector<1x2x128xbf16>
    tpu.vector_store %arg8[%285, %c0_115, %c0_116], %288 {strides = array<i32>} : memref<8x2x128xbf16, #tpu.memory_space<vmem>>, vector<1x2x128xbf16>,
    %c5_i32_117 = arith.constant 5 : i32
    %289 = arith.truncf %283 : vector<2x128xf32> to vector<2x128xbf16>
    %c0_118 = arith.constant 0 : index
    %c0_119 = arith.constant 0 : index
    %290 = vector.load %arg5[%c0_118, %c0_119] : memref<128x384xbf16, #tpu.memory_space<vmem>>, vector<128x384xbf16>
    %cst_120 = arith.constant dense<0.000000e+00> : vector<2x384xf32>
    %291 = tpu.matmul %289, %290, %cst_120 {dimension_numbers = #tpu.dot_dimension_numbers<[1], [0], [0], [1], [0, 0, 1, 1], [], []>} : vector<2x128xbf16>, vector<128x384xbf16>, vector<2x384xf32> -> vector<2x384xf32>
    %292 = arith.index_cast %c5_i32_117 : i32 to index
    %c0_121 = arith.constant 0 : index
    %c0_122 = arith.constant 0 : index
    %293 = vector.load %arg9[%292, %c0_121, %c0_122] : memref<8x2x384xf32, #tpu.memory_space<vmem>>, vector<1x2x384xf32>
    %294 = vector.shape_cast %293 : vector<1x2x384xf32> to vector<2x384xf32>
    %295 = vector.extract_strided_slice %294 {offsets = [0, 0], sizes = [2, 128], strides = [1, 1]} : vector<2x384xf32> to vector<2x128xf32>
    %296 = vector.extract_strided_slice %291 {offsets = [0, 0], sizes = [2, 128], strides = [1, 1]} : vector<2x384xf32> to vector<2x128xf32>
    %297 = arith.addf %295, %296 : vector<2x128xf32>
    %298 = arith.negf %297 : vector<2x128xf32>
    %299 = math.exp %298 : vector<2x128xf32>
    %cst_123 = arith.constant 1.000000e+00 : f32
    %300 = vector.broadcast %cst_123 : f32 to vector<2x128xf32>
    %301 = arith.addf %300, %299 : vector<2x128xf32>
    %302 = arith.divf %300, %301 : vector<2x128xf32>
    %303 = vector.extract_strided_slice %294 {offsets = [0, 128], sizes = [2, 128], strides = [1, 1]} : vector<2x384xf32> to vector<2x128xf32>
    %304 = vector.extract_strided_slice %291 {offsets = [0, 128], sizes = [2, 128], strides = [1, 1]} : vector<2x384xf32> to vector<2x128xf32>
    %305 = arith.addf %303, %304 : vector<2x128xf32>
    %306 = arith.negf %305 : vector<2x128xf32>
    %307 = math.exp %306 : vector<2x128xf32>
    %cst_124 = arith.constant 1.000000e+00 : f32
    %308 = vector.broadcast %cst_124 : f32 to vector<2x128xf32>
    %309 = arith.addf %308, %307 : vector<2x128xf32>
    %310 = arith.divf %308, %309 : vector<2x128xf32>
    %311 = vector.extract_strided_slice %294 {offsets = [0, 256], sizes = [2, 128], strides = [1, 1]} : vector<2x384xf32> to vector<2x128xf32>
    %312 = vector.extract_strided_slice %291 {offsets = [0, 256], sizes = [2, 128], strides = [1, 1]} : vector<2x384xf32> to vector<2x128xf32>
    %313 = vector.broadcast %4 : vector<1x128xf32> to vector<2x128xf32>
    %314 = arith.addf %312, %313 : vector<2x128xf32>
    %315 = arith.mulf %302, %314 : vector<2x128xf32>
    %316 = arith.addf %311, %315 : vector<2x128xf32>
    %317 = math.tanh %316 : vector<2x128xf32>
    %cst_125 = arith.constant 1.000000e+00 : f32
    %318 = vector.broadcast %cst_125 : f32 to vector<2x128xf32>
    %319 = arith.subf %318, %310 : vector<2x128xf32>
    %320 = arith.mulf %319, %317 : vector<2x128xf32>
    %321 = arith.mulf %310, %283 : vector<2x128xf32>
    %322 = arith.addf %320, %321 : vector<2x128xf32>
    %323 = arith.truncf %322 : vector<2x128xf32> to vector<2x128xbf16>
    %324 = arith.index_cast %c5_i32_117 : i32 to index
    %c0_126 = arith.constant 0 : index
    %c0_127 = arith.constant 0 : index
    %325 = vector.load %arg8[%324, %c0_126, %c0_127] : memref<8x2x128xbf16, #tpu.memory_space<vmem>>, vector<1x2x128xbf16>
    %326 = vector.shape_cast %325 : vector<1x2x128xbf16> to vector<2x128xbf16>
    %327 = vector.shape_cast %323 : vector<2x128xbf16> to vector<1x2x128xbf16>
    tpu.vector_store %arg8[%324, %c0_126, %c0_127], %327 {strides = array<i32>} : memref<8x2x128xbf16, #tpu.memory_space<vmem>>, vector<1x2x128xbf16>,
    %c6_i32_128 = arith.constant 6 : i32
    %328 = arith.truncf %322 : vector<2x128xf32> to vector<2x128xbf16>
    %c0_129 = arith.constant 0 : index
    %c0_130 = arith.constant 0 : index
    %329 = vector.load %arg5[%c0_129, %c0_130] : memref<128x384xbf16, #tpu.memory_space<vmem>>, vector<128x384xbf16>
    %cst_131 = arith.constant dense<0.000000e+00> : vector<2x384xf32>
    %330 = tpu.matmul %328, %329, %cst_131 {dimension_numbers = #tpu.dot_dimension_numbers<[1], [0], [0], [1], [0, 0, 1, 1], [], []>} : vector<2x128xbf16>, vector<128x384xbf16>, vector<2x384xf32> -> vector<2x384xf32>
    %331 = arith.index_cast %c6_i32_128 : i32 to index
    %c0_132 = arith.constant 0 : index
    %c0_133 = arith.constant 0 : index
    %332 = vector.load %arg9[%331, %c0_132, %c0_133] : memref<8x2x384xf32, #tpu.memory_space<vmem>>, vector<1x2x384xf32>
    %333 = vector.shape_cast %332 : vector<1x2x384xf32> to vector<2x384xf32>
    %334 = vector.extract_strided_slice %333 {offsets = [0, 0], sizes = [2, 128], strides = [1, 1]} : vector<2x384xf32> to vector<2x128xf32>
    %335 = vector.extract_strided_slice %330 {offsets = [0, 0], sizes = [2, 128], strides = [1, 1]} : vector<2x384xf32> to vector<2x128xf32>
    %336 = arith.addf %334, %335 : vector<2x128xf32>
    %337 = arith.negf %336 : vector<2x128xf32>
    %338 = math.exp %337 : vector<2x128xf32>
    %cst_134 = arith.constant 1.000000e+00 : f32
    %339 = vector.broadcast %cst_134 : f32 to vector<2x128xf32>
    %340 = arith.addf %339, %338 : vector<2x128xf32>
    %341 = arith.divf %339, %340 : vector<2x128xf32>
    %342 = vector.extract_strided_slice %333 {offsets = [0, 128], sizes = [2, 128], strides = [1, 1]} : vector<2x384xf32> to vector<2x128xf32>
    %343 = vector.extract_strided_slice %330 {offsets = [0, 128], sizes = [2, 128], strides = [1, 1]} : vector<2x384xf32> to vector<2x128xf32>
    %344 = arith.addf %342, %343 : vector<2x128xf32>
    %345 = arith.negf %344 : vector<2x128xf32>
    %346 = math.exp %345 : vector<2x128xf32>
    %cst_135 = arith.constant 1.000000e+00 : f32
    %347 = vector.broadcast %cst_135 : f32 to vector<2x128xf32>
    %348 = arith.addf %347, %346 : vector<2x128xf32>
    %349 = arith.divf %347, %348 : vector<2x128xf32>
    %350 = vector.extract_strided_slice %333 {offsets = [0, 256], sizes = [2, 128], strides = [1, 1]} : vector<2x384xf32> to vector<2x128xf32>
    %351 = vector.extract_strided_slice %330 {offsets = [0, 256], sizes = [2, 128], strides = [1, 1]} : vector<2x384xf32> to vector<2x128xf32>
    %352 = vector.broadcast %4 : vector<1x128xf32> to vector<2x128xf32>
    %353 = arith.addf %351, %352 : vector<2x128xf32>
    %354 = arith.mulf %341, %353 : vector<2x128xf32>
    %355 = arith.addf %350, %354 : vector<2x128xf32>
    %356 = math.tanh %355 : vector<2x128xf32>
    %cst_136 = arith.constant 1.000000e+00 : f32
    %357 = vector.broadcast %cst_136 : f32 to vector<2x128xf32>
    %358 = arith.subf %357, %349 : vector<2x128xf32>
    %359 = arith.mulf %358, %356 : vector<2x128xf32>
    %360 = arith.mulf %349, %322 : vector<2x128xf32>
    %361 = arith.addf %359, %360 : vector<2x128xf32>
    %362 = arith.truncf %361 : vector<2x128xf32> to vector<2x128xbf16>
    %363 = arith.index_cast %c6_i32_128 : i32 to index
    %c0_137 = arith.constant 0 : index
    %c0_138 = arith.constant 0 : index
    %364 = vector.load %arg8[%363, %c0_137, %c0_138] : memref<8x2x128xbf16, #tpu.memory_space<vmem>>, vector<1x2x128xbf16>
    %365 = vector.shape_cast %364 : vector<1x2x128xbf16> to vector<2x128xbf16>
    %366 = vector.shape_cast %362 : vector<2x128xbf16> to vector<1x2x128xbf16>
    tpu.vector_store %arg8[%363, %c0_137, %c0_138], %366 {strides = array<i32>} : memref<8x2x128xbf16, #tpu.memory_space<vmem>>, vector<1x2x128xbf16>,
    %c7_i32_139 = arith.constant 7 : i32
    %367 = arith.truncf %361 : vector<2x128xf32> to vector<2x128xbf16>
    %c0_140 = arith.constant 0 : index
    %c0_141 = arith.constant 0 : index
    %368 = vector.load %arg5[%c0_140, %c0_141] : memref<128x384xbf16, #tpu.memory_space<vmem>>, vector<128x384xbf16>
    %cst_142 = arith.constant dense<0.000000e+00> : vector<2x384xf32>
    %369 = tpu.matmul %367, %368, %cst_142 {dimension_numbers = #tpu.dot_dimension_numbers<[1], [0], [0], [1], [0, 0, 1, 1], [], []>} : vector<2x128xbf16>, vector<128x384xbf16>, vector<2x384xf32> -> vector<2x384xf32>
    %370 = arith.index_cast %c7_i32_139 : i32 to index
    %c0_143 = arith.constant 0 : index
    %c0_144 = arith.constant 0 : index
    %371 = vector.load %arg9[%370, %c0_143, %c0_144] : memref<8x2x384xf32, #tpu.memory_space<vmem>>, vector<1x2x384xf32>
    %372 = vector.shape_cast %371 : vector<1x2x384xf32> to vector<2x384xf32>
    %373 = vector.extract_strided_slice %372 {offsets = [0, 0], sizes = [2, 128], strides = [1, 1]} : vector<2x384xf32> to vector<2x128xf32>
    %374 = vector.extract_strided_slice %369 {offsets = [0, 0], sizes = [2, 128], strides = [1, 1]} : vector<2x384xf32> to vector<2x128xf32>
    %375 = arith.addf %373, %374 : vector<2x128xf32>
    %376 = arith.negf %375 : vector<2x128xf32>
    %377 = math.exp %376 : vector<2x128xf32>
    %cst_145 = arith.constant 1.000000e+00 : f32
    %378 = vector.broadcast %cst_145 : f32 to vector<2x128xf32>
    %379 = arith.addf %378, %377 : vector<2x128xf32>
    %380 = arith.divf %378, %379 : vector<2x128xf32>
    %381 = vector.extract_strided_slice %372 {offsets = [0, 128], sizes = [2, 128], strides = [1, 1]} : vector<2x384xf32> to vector<2x128xf32>
    %382 = vector.extract_strided_slice %369 {offsets = [0, 128], sizes = [2, 128], strides = [1, 1]} : vector<2x384xf32> to vector<2x128xf32>
    %383 = arith.addf %381, %382 : vector<2x128xf32>
    %384 = arith.negf %383 : vector<2x128xf32>
    %385 = math.exp %384 : vector<2x128xf32>
    %cst_146 = arith.constant 1.000000e+00 : f32
    %386 = vector.broadcast %cst_146 : f32 to vector<2x128xf32>
    %387 = arith.addf %386, %385 : vector<2x128xf32>
    %388 = arith.divf %386, %387 : vector<2x128xf32>
    %389 = vector.extract_strided_slice %372 {offsets = [0, 256], sizes = [2, 128], strides = [1, 1]} : vector<2x384xf32> to vector<2x128xf32>
    %390 = vector.extract_strided_slice %369 {offsets = [0, 256], sizes = [2, 128], strides = [1, 1]} : vector<2x384xf32> to vector<2x128xf32>
    %391 = vector.broadcast %4 : vector<1x128xf32> to vector<2x128xf32>
    %392 = arith.addf %390, %391 : vector<2x128xf32>
    %393 = arith.mulf %380, %392 : vector<2x128xf32>
    %394 = arith.addf %389, %393 : vector<2x128xf32>
    %395 = math.tanh %394 : vector<2x128xf32>
    %cst_147 = arith.constant 1.000000e+00 : f32
    %396 = vector.broadcast %cst_147 : f32 to vector<2x128xf32>
    %397 = arith.subf %396, %388 : vector<2x128xf32>
    %398 = arith.mulf %397, %395 : vector<2x128xf32>
    %399 = arith.mulf %388, %361 : vector<2x128xf32>
    %400 = arith.addf %398, %399 : vector<2x128xf32>
    %401 = arith.truncf %400 : vector<2x128xf32> to vector<2x128xbf16>
    %402 = arith.index_cast %c7_i32_139 : i32 to index
    %c0_148 = arith.constant 0 : index
    %c0_149 = arith.constant 0 : index
    %403 = vector.load %arg8[%402, %c0_148, %c0_149] : memref<8x2x128xbf16, #tpu.memory_space<vmem>>, vector<1x2x128xbf16>
    %404 = vector.shape_cast %403 : vector<1x2x128xbf16> to vector<2x128xbf16>
    %405 = vector.shape_cast %401 : vector<2x128xbf16> to vector<1x2x128xbf16>
    tpu.vector_store %arg8[%402, %c0_148, %c0_149], %405 {strides = array<i32>} : memref<8x2x128xbf16, #tpu.memory_space<vmem>>, vector<1x2x128xbf16>,
    %c8_i32_150 = arith.constant 8 : i32
    %c0_151 = arith.constant 0 : index
    %c0_152 = arith.constant 0 : index
    %406 = vector.load %arg10[%c0_151, %c0_152] : memref<2x128xf32, #tpu.memory_space<vmem>>, vector<2x128xf32>
    tpu.vector_store %arg10[%c0_151, %c0_152], %400 {strides = array<i32>} : memref<2x128xf32, #tpu.memory_space<vmem>>, vector<2x128xf32>,
    return
  }
  func.func @transform_0(%arg0: i32, %arg1: i32) -> (i32, i32, i32) {
    %c0_i32 = arith.constant 0 : i32
    %c0_i32_0 = arith.constant 0 : i32
    return %arg1, %arg0, %c0_i32 : i32, i32, i32
  }
  func.func @transform_1(%arg0: i32, %arg1: i32) -> (i32, i32) {
    %c0_i32 = arith.constant 0 : i32
    %c0_i32_0 = arith.constant 0 : i32
    %c0_i32_1 = arith.constant 0 : i32
    return %c0_i32, %c0_i32_0 : i32, i32
  }
  func.func @transform_2(%arg0: i32, %arg1: i32) -> (i32, i32) {
    %c0_i32 = arith.constant 0 : i32
    %c0_i32_0 = arith.constant 0 : i32
    %c0_i32_1 = arith.constant 0 : i32
    return %c0_i32, %c0_i32_0 : i32, i32
  }
  func.func @transform_3(%arg0: i32, %arg1: i32) -> (i32, i32) {
    %c0_i32 = arith.constant 0 : i32
    %c0_i32_0 = arith.constant 0 : i32
    %c0_i32_1 = arith.constant 0 : i32
    return %c0_i32, %c0_i32_0 : i32, i32
  }
  func.func @transform_4(%arg0: i32, %arg1: i32) -> (i32, i32) {
    %c0_i32 = arith.constant 0 : i32
    %c0_i32_0 = arith.constant 0 : i32
    %c0_i32_1 = arith.constant 0 : i32
    return %c0_i32, %c0_i32_0 : i32, i32
  }
  func.func @transform_5(%arg0: i32, %arg1: i32) -> (i32, i32) {
    %c0_i32 = arith.constant 0 : i32
    %c0_i32_0 = arith.constant 0 : i32
    return %arg0, %c0_i32 : i32, i32
  }
  func.func @transform_6(%arg0: i32, %arg1: i32) -> (i32, i32, i32) {
    %c0_i32 = arith.constant 0 : i32
    %c0_i32_0 = arith.constant 0 : i32
    return %arg1, %arg0, %c0_i32 : i32, i32, i32
  }
}

</mosaic_0001>

<llo_original>
// kernel: tpu_custom_call.1
$region0: #{tpu_custom_call.1}
  #allocation0 [shape = 'u32[]', space=smem, size = 0x4, offset = 0x4, fixed_abs, tag = 'smem constant byte address 0x4 - core index']
  #allocation1 [shape = 'u32[72,128]{1,0:T(1,128)}', space=vmem, size = 0x9000, scoped, tag = 'internal scratch']
  #allocation2 [shape = 'f32[8,2,384]{2,1,0:T(2,128)}', space=vmem, size = 0x6000, scoped, tag = 'scratch operand']
  #allocation3 [shape = 'f32[2,128]{1,0:T(2,128)}', space=vmem, size = 0x400, scoped, tag = 'scratch operand']
  %s0 = inlined_call_operand.hbm [shape: bf16[8,2,128], index: 0, kind: input, shape index: {}]
  %s1 = inlined_call_operand.hbm [shape: bf16[128,384], index: 1, kind: input, shape index: {}]
  %s2 = inlined_call_operand.hbm [shape: f32[1,384], index: 2, kind: input, shape index: {}]
  %s3 = inlined_call_operand.hbm [shape: bf16[128,384], index: 3, kind: input, shape index: {}]
  %s4 = inlined_call_operand.vmem [shape: f32[1,128], index: 4, kind: input, shape index: {}]
  %s5 = inlined_call_operand.vmem [shape: f32[2,128], index: 5, kind: input, shape index: {}]
  %s6 = inlined_call_operand.hbm [shape: bf16[8,2,128], index: 6, kind: output, shape index: {}]
  %s7 = sld [smem:[#allocation0]]
  $region54: #{tpu_custom_call.1} parent=0
    _
  %s9 = ssub.s32 1, %s7
  %s10 = scalar_select 0, %s9, %s7
  $region1: #{tpu_custom_call.1} parent=0
    #allocation4 [shape = 'u8[4096]{0}', space=vmem, size = 0x1000, scoped, tag = 'input window, operand 0, single buffered']
    #allocation5 [shape = 's32[1]{0}', space=sflag, size = 0x4, scoped, tag = 'scoped memory for tpu_custom_call.1']
    #allocation6 [shape = 's32[1]{0}', space=sflag, size = 0x4, scoped, tag = 'scoped memory for tpu_custom_call.1']
    #allocation7 [shape = 'u8[98304]{0}', space=vmem, size = 0x18000, scoped, tag = 'input window, operand 1, single buffered']
    #allocation8 [shape = 's32[1]{0}', space=sflag, size = 0x4, scoped, tag = 'scoped memory for tpu_custom_call.1']
    #allocation9 [shape = 'u8[1536]{0}', space=vmem, size = 0x800, scoped, tag = 'input window, operand 2, single buffered']
    #allocation10 [shape = 'u8[98304]{0}', space=vmem, size = 0x18000, scoped, tag = 'input window, operand 3, single buffered']
    #allocation11 [shape = 's32[1]{0}', space=sflag, size = 0x4, scoped, tag = 'scoped memory for tpu_custom_call.1']
    #allocation12 [shape = 'u8[4096]{0}', space=vmem, size = 0x1000, scoped, tag = 'output window, operand 0, single buffered']
    %11 = vsyncpa [#allocation5], 0
    %12 = vsyncpa [#allocation8], 0
    %13 = vsyncpa [#allocation11], 0
    %14 = vsyncpa [#allocation6], 0
    // Predicated region
    $region2: #{tpu_custom_call.1} parent=1 // pred_check
      _
    $region3: #{tpu_custom_call.1} parent=1 // pred_check_branch
      %16 = sbr.rel (0) target = $region5
    $region4: #{tpu_custom_call.1} parent=1 // pred_region
      %18 = vsyncadd [#allocation5], 0
      %s19 = sshll.u32 %s0, 4
      %s20 = int_to_ptr.hbm [resolvable:$true] %s19
      %s21 = sshll.u32 [#allocation4], 4
      %s22 = int_to_ptr.vmem [resolvable:$true] %s21
      %27 = dma.hbm_to_vmem [thread:$0]  %s20, 128, %s22, [#allocation5], 16, 16, 1
    $region5: #{tpu_custom_call.1} parent=1 // pred_fallthru
      _
    // Predicated region
    $region6: #{tpu_custom_call.1} parent=1 // pred_check
      _
    $region7: #{tpu_custom_call.1} parent=1 // pred_check_branch
      %29 = sbr.rel (0) target = $region9
    $region8: #{tpu_custom_call.1} parent=1 // pred_region
      %31 = vsyncadd [#allocation8], 0
      %s32 = sshll.u32 %s1, 4
      %s33 = int_to_ptr.hbm [resolvable:$true] %s32
      %s34 = sshll.u32 [#allocation7], 4
      %s35 = int_to_ptr.vmem [resolvable:$true] %s34
      %40 = dma.hbm_to_vmem [thread:$0]  %s33, 3072, %s35, [#allocation8], 192, 192, 12
    $region9: #{tpu_custom_call.1} parent=1 // pred_fallthru
      _
    // Predicated region
    $region10: #{tpu_custom_call.1} parent=1 // pred_check
      _
    $region11: #{tpu_custom_call.1} parent=1 // pred_check_branch
      %42 = sbr.rel (0) target = $region13
    $region12: #{tpu_custom_call.1} parent=1 // pred_region
      %44 = vsyncadd [#allocation8], 0
      %s46 = sshll.u32 %s2, 4
      %s47 = int_to_ptr.hbm [resolvable:$true] %s46
      %s48 = sshll.u32 [#allocation9], 4
      %s49 = int_to_ptr.vmem [resolvable:$true] %s48
      %51 = dma.hbm_to_vmem [thread:$0]  %s47, 48, %s49, [#allocation8]
    $region13: #{tpu_custom_call.1} parent=1 // pred_fallthru
      _
    // Predicated region
    $region14: #{tpu_custom_call.1} parent=1 // pred_check
      _
    $region15: #{tpu_custom_call.1} parent=1 // pred_check_branch
      %53 = sbr.rel (0) target = $region17
    $region16: #{tpu_custom_call.1} parent=1 // pred_region
      %55 = vsyncadd [#allocation11], 0
      %s56 = sshll.u32 %s3, 4
      %s57 = int_to_ptr.hbm [resolvable:$true] %s56
      %s58 = sshll.u32 [#allocation10], 4
      %s59 = int_to_ptr.vmem [resolvable:$true] %s58
      %64 = dma.hbm_to_vmem [thread:$0]  %s57, 3072, %s59, [#allocation11], 192, 192, 12
    $region17: #{tpu_custom_call.1} parent=1 // pred_fallthru
      _
    // Predicated region
    $region18: #{tpu_custom_call.1} parent=1 // pred_check
      _
    $region19: #{tpu_custom_call.1} parent=1 // pred_check_branch
      %66 = sbr.rel (0) target = $region21
    $region20: #{tpu_custom_call.1} parent=1 // pred_region
      _
    $region21: #{tpu_custom_call.1} parent=1 // pred_fallthru
      _
    // Predicated region
    $region22: #{tpu_custom_call.1} parent=1 // pred_check
      _
    $region23: #{tpu_custom_call.1} parent=1 // pred_check_branch
      %68 = sbr.rel (0) target = $region25
    $region24: #{tpu_custom_call.1} parent=1 // pred_region
      _
    $region25: #{tpu_custom_call.1} parent=1 // pred_fallthru
      _
    // Predicated region
    $region26: #{tpu_custom_call.1} parent=1 // pred_check
      _
    $region27: #{tpu_custom_call.1} parent=1 // pred_check_branch
      %70 = sbr.rel (0) target = $region29
    $region28: #{tpu_custom_call.1} parent=1 // pred_region
      %72 = dma.done [#allocation5], 128
    $region29: #{tpu_custom_call.1} parent=1 // pred_fallthru
      _
    // Predicated region
    $region30: #{tpu_custom_call.1} parent=1 // pred_check
      _
    $region31: #{tpu_custom_call.1} parent=1 // pred_check_branch
      %74 = sbr.rel (0) target = $region33
    $region32: #{tpu_custom_call.1} parent=1 // pred_region
      %76 = dma.done [#allocation8], 3072
    $region33: #{tpu_custom_call.1} parent=1 // pred_fallthru
      _
    // Predicated region
    $region34: #{tpu_custom_call.1} parent=1 // pred_check
      _
    $region35: #{tpu_custom_call.1} parent=1 // pred_check_branch
      %78 = sbr.rel (0) target = $region37
    $region36: #{tpu_custom_call.1} parent=1 // pred_region
      %80 = dma.done [#allocation8], 48
    $region37: #{tpu_custom_call.1} parent=1 // pred_fallthru
      _
    // Predicated region
    $region38: #{tpu_custom_call.1} parent=1 // pred_check
      _
    $region39: #{tpu_custom_call.1} parent=1 // pred_check_branch
      %82 = sbr.rel (0) target = $region41
    $region40: #{tpu_custom_call.1} parent=1 // pred_region
      %84 = dma.done [#allocation11], 3072
    $region41: #{tpu_custom_call.1} parent=1 // pred_fallthru
      _
    %p85 = scmp.eq.s32.totalorder 0, 0
    // Predicated region
    $region42: #{tpu_custom_call.1} parent=1 // pred_check
      %p86 = pneg %p85
    $region43: #{tpu_custom_call.1} parent=1 // pred_check_branch
      %88 = sbr.rel (%p86) target = $region45
    $region44: #{tpu_custom_call.1} parent=1 // pred_region
      %v89 = vld [vmem:[%s5] sm:$0x3]
      %90 = vst [vmem:[#allocation3] sm:$0x3] %v89
    $region45: #{tpu_custom_call.1} parent=1 // pred_fallthru
      _
    %v91 = vld [vmem:[#allocation9] sm:$0x7]
    %v92 = vld [vmem:[%s4] sm:$0x1]
    %v93 = vld [vmem:[#allocation4] sm:$0x1]
    %v94 = vld [vmem:[#allocation7] sm:$0xff]
    %v95 = vld [vmem:[#allocation7 + $0x8] sm:$0xf]
    %v96 = vld [vmem:[#allocation7 + $0xc] sm:$0xff]
    %v97 = vld [vmem:[#allocation7 + $0x14] sm:$0xf]
    %v98 = vld [vmem:[#allocation7 + $0x18] sm:$0xff]
    %v99 = vld [vmem:[#allocation7 + $0x20] sm:$0xf]
    %v100 = vld [vmem:[#allocation7 + $0x24] sm:$0xff]
    %v101 = vld [vmem:[#allocation7 + $0x2c] sm:$0xf]
    %v102 = vld [vmem:[#allocation7 + $0x30] sm:$0xff]
    %v103 = vld [vmem:[#allocation7 + $0x38] sm:$0xf]
    %v104 = vld [vmem:[#allocation7 + $0x3c] sm:$0xff]
    %v105 = vld [vmem:[#allocation7 + $0x44] sm:$0xf]
    %v106 = vld [vmem:[#allocation7 + $0x48] sm:$0xff]
    %v107 = vld [vmem:[#allocation7 + $0x50] sm:$0xf]
    %v108 = vld [vmem:[#allocation7 + $0x54] sm:$0xff]
    %v109 = vld [vmem:[#allocation7 + $0x5c] sm:$0xf]
    %v110 = vld [vmem:[#allocation7 + $0x60] sm:$0xff]
    %v111 = vld [vmem:[#allocation7 + $0x68] sm:$0xf]
    %v112 = vld [vmem:[#allocation7 + $0x6c] sm:$0xff]
    %v113 = vld [vmem:[#allocation7 + $0x74] sm:$0xf]
    %v114 = vld [vmem:[#allocation7 + $0x78] sm:$0xff]
    %v115 = vld [vmem:[#allocation7 + $0x80] sm:$0xf]
    %v116 = vld [vmem:[#allocation7 + $0x84] sm:$0xff]
    %v117 = vld [vmem:[#allocation7 + $0x8c] sm:$0xf]
    %v118 = vld [vmem:[#allocation7 + $0x90] sm:$0xff]
    %v119 = vld [vmem:[#allocation7 + $0x98] sm:$0xf]
    %v120 = vld [vmem:[#allocation7 + $0x9c] sm:$0xff]
    %v121 = vld [vmem:[#allocation7 + $0xa4] sm:$0xf]
    %v122 = vld [vmem:[#allocation7 + $0xa8] sm:$0xff]
    %v123 = vld [vmem:[#allocation7 + $0xb0] sm:$0xf]
    %v124 = vld [vmem:[#allocation7 + $0xb4] sm:$0xff]
    %v125 = vld [vmem:[#allocation7 + $0xbc] sm:$0xf]
    %v127 = vperm.slane %v91, 0
    %v128 = vperm.slane %v91, 1
    %v129 = vperm.slane %v91, 2
    %v165 = vunpack.c.l.b16 %v94
    %v166 = vunpack.c.h.b16 %v94
    %v167 = vunpack.c.l.b16 %v95
    %v168 = vunpack.c.l.b16 %v96
    %v169 = vunpack.c.h.b16 %v96
    %v170 = vunpack.c.l.b16 %v97
    %v171 = vunpack.c.l.b16 %v98
    %v172 = vunpack.c.h.b16 %v98
    %v173 = vunpack.c.l.b16 %v99
    %v174 = vunpack.c.l.b16 %v100
    %v175 = vunpack.c.h.b16 %v100
    %v176 = vunpack.c.l.b16 %v101
    %v177 = vunpack.c.l.b16 %v102
    %v178 = vunpack.c.h.b16 %v102
    %v179 = vunpack.c.l.b16 %v103
    %v180 = vunpack.c.l.b16 %v104
    %v181 = vunpack.c.h.b16 %v104
    %v182 = vunpack.c.l.b16 %v105
    %v183 = vunpack.c.l.b16 %v106
    %v184 = vunpack.c.h.b16 %v106
    %v185 = vunpack.c.l.b16 %v107
    %v186 = vunpack.c.l.b16 %v108
    %v187 = vunpack.c.h.b16 %v108
    %v188 = vunpack.c.l.b16 %v109
    %v189 = vunpack.c.l.b16 %v110
    %v190 = vunpack.c.h.b16 %v110
    %v191 = vunpack.c.l.b16 %v111
    %v192 = vunpack.c.l.b16 %v112
    %v193 = vunpack.c.h.b16 %v112
    %v194 = vunpack.c.l.b16 %v113
    %v195 = vunpack.c.l.b16 %v114
    %v196 = vunpack.c.h.b16 %v114
    %v197 = vunpack.c.l.b16 %v115
    %v198 = vunpack.c.l.b16 %v116
    %v199 = vunpack.c.h.b16 %v116
    %v200 = vunpack.c.l.b16 %v117
    %v201 = vunpack.c.l.b16 %v118
    %v202 = vunpack.c.h.b16 %v118
    %v203 = vunpack.c.l.b16 %v119
    %v204 = vunpack.c.l.b16 %v120
    %v205 = vunpack.c.h.b16 %v120
    %v206 = vunpack.c.l.b16 %v121
    %v207 = vunpack.c.l.b16 %v122
    %v208 = vunpack.c.h.b16 %v122
    %v209 = vunpack.c.l.b16 %v123
    %v210 = vunpack.c.l.b16 %v124
    %v211 = vunpack.c.h.b16 %v124
    %v212 = vunpack.c.l.b16 %v125
    %v213 = vpack.c.b16 %v168, %v165
    %v214 = vpack.c.b16 %v169, %v166
    %v215 = vpack.c.b16 %v170, %v167
    %v216 = vpack.c.b16 %v174, %v171
    %v217 = vpack.c.b16 %v175, %v172
    %v218 = vpack.c.b16 %v176, %v173
    %v219 = vpack.c.b16 %v180, %v177
    %v220 = vpack.c.b16 %v181, %v178
    %v221 = vpack.c.b16 %v182, %v179
    %v222 = vpack.c.b16 %v186, %v183
    %v223 = vpack.c.b16 %v187, %v184
    %v224 = vpack.c.b16 %v188, %v185
    %v225 = vpack.c.b16 %v192, %v189
    %v226 = vpack.c.b16 %v193, %v190
    %v227 = vpack.c.b16 %v194, %v191
    %v228 = vpack.c.b16 %v198, %v195
    %v229 = vpack.c.b16 %v199, %v196
    %v230 = vpack.c.b16 %v200, %v197
    %v231 = vpack.c.b16 %v204, %v201
    %v232 = vpack.c.b16 %v205, %v202
    %v233 = vpack.c.b16 %v206, %v203
    %v234 = vpack.c.b16 %v210, %v207
    %v235 = vpack.c.b16 %v211, %v208
    %v236 = vpack.c.b16 %v212, %v209
    %261 = vmatpush.bf16.msra.mxu0 %v234
    %262 = vmatpush.bf16.msra.mxu0 %v231
    %263 = vmatpush.bf16.msra.mxu0 %v228
    %264 = vmatpush.bf16.msra.mxu0 %v225
    %265 = vmatpush.bf16.msra.mxu0 %v222
    %266 = vmatpush.bf16.msra.mxu0 %v219
    %267 = vmatpush.bf16.msra.mxu0 %v216
    %268 = vmatpush.bf16.msra.mxu0 %v213
    %269 = vmatmul.bf16.gmra.mxu0 %v93
    %v270 = vpop.f32.mrf.mxu0
    %v271 = vadd.f32 %v127, %v270
    %v272 = vpop.f32.mrf.mxu0
    %273 = vdwg.mxu0
    %274 = vmatpush.bf16.msra.mxu0 %v235
    %275 = vmatpush.bf16.msra.mxu0 %v232
    %276 = vmatpush.bf16.msra.mxu0 %v229
    %277 = vmatpush.bf16.msra.mxu0 %v226
    %278 = vmatpush.bf16.msra.mxu0 %v223
    %279 = vmatpush.bf16.msra.mxu0 %v220
    %280 = vmatpush.bf16.msra.mxu0 %v217
    %281 = vmatpush.bf16.msra.mxu0 %v214
    %282 = vmatmul.bf16.gmra.mxu0 %v93
    %v283 = vpop.f32.mrf.mxu0
    %v284 = vadd.f32 %v128, %v283
    %v285 = vpop.f32.mrf.mxu0
    %286 = vdwg.mxu0
    %287 = vmatpush.bf16.msra.mxu0 %v236
    %288 = vmatpush.bf16.msra.mxu0 %v233
    %289 = vmatpush.bf16.msra.mxu0 %v230
    %290 = vmatpush.bf16.msra.mxu0 %v227
    %291 = vmatpush.bf16.msra.mxu0 %v224
    %292 = vmatpush.bf16.msra.mxu0 %v221
    %293 = vmatpush.bf16.msra.mxu0 %v218
    %294 = vmatpush.bf16.msra.mxu0 %v215
    %295 = vmatmul.bf16.gmra.mxu0 %v93
    %v296 = vpop.f32.mrf.mxu0
    %v297 = vadd.f32 %v129, %v296
    %v298 = vpop.f32.mrf.mxu0
    %299 = vdwg.mxu0
    %v303 = vrot.slane %v284, 6
    %v304 = vrot.slane %v297, 4
    %vm305 = vcmask 1041408
    %v306 = vsel %vm305, %v271, %v303
    %vm307 = vcmask 1043456
    %v308 = vsel %vm307, %v306, %v304
    %310 = vst [vmem:[#allocation2] sm:$0x3f] %v308
    %s311 = scalar_lea.vmem [#allocation4], 1
    %v312 = vld [vmem:[%s311] sm:$0x1]
    %v313 = vld [vmem:[#allocation7] sm:$0xff]
    %v314 = vld [vmem:[#allocation7 + $0x8] sm:$0xf]
    %v315 = vld [vmem:[#allocation7 + $0xc] sm:$0xff]
    %v316 = vld [vmem:[#allocation7 + $0x14] sm:$0xf]
    %v317 = vld [vmem:[#allocation7 + $0x18] sm:$0xff]
    %v318 = vld [vmem:[#allocation7 + $0x20] sm:$0xf]
    %v319 = vld [vmem:[#allocation7 + $0x24] sm:$0xff]
    %v320 = vld [vmem:[#allocation7 + $0x2c] sm:$0xf]
    %v321 = vld [vmem:[#allocation7 + $0x30] sm:$0xff]
    %v322 = vld [vmem:[#allocation7 + $0x38] sm:$0xf]
    %v323 = vld [vmem:[#allocation7 + $0x3c] sm:$0xff]
    %v324 = vld [vmem:[#allocation7 + $0x44] sm:$0xf]
    %v325 = vld [vmem:[#allocation7 + $0x48] sm:$0xff]
    %v326 = vld [vmem:[#allocation7 + $0x50] sm:$0xf]
    %v327 = vld [vmem:[#allocation7 + $0x54] sm:$0xff]
    %v328 = vld [vmem:[#allocation7 + $0x5c] sm:$0xf]
    %v329 = vld [vmem:[#allocation7 + $0x60] sm:$0xff]
    %v330 = vld [vmem:[#allocation7 + $0x68] sm:$0xf]
    %v331 = vld [vmem:[#allocation7 + $0x6c] sm:$0xff]
    %v332 = vld [vmem:[#allocation7 + $0x74] sm:$0xf]
    %v333 = vld [vmem:[#allocation7 + $0x78] sm:$0xff]
    %v334 = vld [vmem:[#allocation7 + $0x80] sm:$0xf]
    %v335 = vld [vmem:[#allocation7 + $0x84] sm:$0xff]
    %v336 = vld [vmem:[#allocation7 + $0x8c] sm:$0xf]
    %v337 = vld [vmem:[#allocation7 + $0x90] sm:$0xff]
    %v338 = vld [vmem:[#allocation7 + $0x98] sm:$0xf]
    %v339 = vld [vmem:[#allocation7 + $0x9c] sm:$0xff]
    %v340 = vld [vmem:[#allocation7 + $0xa4] sm:$0xf]
    %v341 = vld [vmem:[#allocation7 + $0xa8] sm:$0xff]
    %v342 = vld [vmem:[#allocation7 + $0xb0] sm:$0xf]
    %v343 = vld [vmem:[#allocation7 + $0xb4] sm:$0xff]
    %v344 = vld [vmem:[#allocation7 + $0xbc] sm:$0xf]
    %v377 = vunpack.c.l.b16 %v313
    %v378 = vunpack.c.h.b16 %v313
    %v379 = vunpack.c.l.b16 %v314
    %v380 = vunpack.c.l.b16 %v315
    %v381 = vunpack.c.h.b16 %v315
    %v382 = vunpack.c.l.b16 %v316
    %v383 = vunpack.c.l.b16 %v317
    %v384 = vunpack.c.h.b16 %v317
    %v385 = vunpack.c.l.b16 %v318
    %v386 = vunpack.c.l.b16 %v319
    %v387 = vunpack.c.h.b16 %v319
    %v388 = vunpack.c.l.b16 %v320
    %v389 = vunpack.c.l.b16 %v321
    %v390 = vunpack.c.h.b16 %v321
    %v391 = vunpack.c.l.b16 %v322
    %v392 = vunpack.c.l.b16 %v323
    %v393 = vunpack.c.h.b16 %v323
    %v394 = vunpack.c.l.b16 %v324
    %v395 = vunpack.c.l.b16 %v325
    %v396 = vunpack.c.h.b16 %v325
    %v397 = vunpack.c.l.b16 %v326
    %v398 = vunpack.c.l.b16 %v327
    %v399 = vunpack.c.h.b16 %v327
    %v400 = vunpack.c.l.b16 %v328
    %v401 = vunpack.c.l.b16 %v329
    %v402 = vunpack.c.h.b16 %v329
    %v403 = vunpack.c.l.b16 %v330
    %v404 = vunpack.c.l.b16 %v331
    %v405 = vunpack.c.h.b16 %v331
    %v406 = vunpack.c.l.b16 %v332
    %v407 = vunpack.c.l.b16 %v333
    %v408 = vunpack.c.h.b16 %v333
    %v409 = vunpack.c.l.b16 %v334
    %v410 = vunpack.c.l.b16 %v335
    %v411 = vunpack.c.h.b16 %v335
    %v412 = vunpack.c.l.b16 %v336
    %v413 = vunpack.c.l.b16 %v337
    %v414 = vunpack.c.h.b16 %v337
    %v415 = vunpack.c.l.b16 %v338
    %v416 = vunpack.c.l.b16 %v339
    %v417 = vunpack.c.h.b16 %v339
    %v418 = vunpack.c.l.b16 %v340
    %v419 = vunpack.c.l.b16 %v341
    %v420 = vunpack.c.h.b16 %v341
    %v421 = vunpack.c.l.b16 %v342
    %v422 = vunpack.c.l.b16 %v343
    %v423 = vunpack.c.h.b16 %v343
    %v424 = vunpack.c.l.b16 %v344
    %v425 = vpack.c.b16 %v380, %v377
    %v426 = vpack.c.b16 %v381, %v378
    %v427 = vpack.c.b16 %v382, %v379
    %v428 = vpack.c.b16 %v386, %v383
    %v429 = vpack.c.b16 %v387, %v384
    %v430 = vpack.c.b16 %v388, %v385
    %v431 = vpack.c.b16 %v392, %v389
    %v432 = vpack.c.b16 %v393, %v390
    %v433 = vpack.c.b16 %v394, %v391
    %v434 = vpack.c.b16 %v398, %v395
    %v435 = vpack.c.b16 %v399, %v396
    %v436 = vpack.c.b16 %v400, %v397
    %v437 = vpack.c.b16 %v404, %v401
    %v438 = vpack.c.b16 %v405, %v402
    %v439 = vpack.c.b16 %v406, %v403
    %v440 = vpack.c.b16 %v410, %v407
    %v441 = vpack.c.b16 %v411, %v408
    %v442 = vpack.c.b16 %v412, %v409
    %v443 = vpack.c.b16 %v416, %v413
    %v444 = vpack.c.b16 %v417, %v414
    %v445 = vpack.c.b16 %v418, %v415
    %v446 = vpack.c.b16 %v422, %v419
    %v447 = vpack.c.b16 %v423, %v420
    %v448 = vpack.c.b16 %v424, %v421
    %473 = vmatpush.bf16.msra.mxu0 %v446
    %474 = vmatpush.bf16.msra.mxu0 %v443
    %475 = vmatpush.bf16.msra.mxu0 %v440
    %476 = vmatpush.bf16.msra.mxu0 %v437
    %477 = vmatpush.bf16.msra.mxu0 %v434
    %478 = vmatpush.bf16.msra.mxu0 %v431
    %479 = vmatpush.bf16.msra.mxu0 %v428
    %480 = vmatpush.bf16.msra.mxu0 %v425
    %481 = vmatmul.bf16.gmra.mxu0 %v312
    %v482 = vpop.f32.mrf.mxu0
    %v483 = vadd.f32 %v127, %v482
    %v484 = vpop.f32.mrf.mxu0
    %485 = vdwg.mxu0
    %486 = vmatpush.bf16.msra.mxu0 %v447
    %487 = vmatpush.bf16.msra.mxu0 %v444
    %488 = vmatpush.bf16.msra.mxu0 %v441
    %489 = vmatpush.bf16.msra.mxu0 %v438
    %490 = vmatpush.bf16.msra.mxu0 %v435
    %491 = vmatpush.bf16.msra.mxu0 %v432
    %492 = vmatpush.bf16.msra.mxu0 %v429
    %493 = vmatpush.bf16.msra.mxu0 %v426
    %494 = vmatmul.bf16.gmra.mxu0 %v312
    %v495 = vpop.f32.mrf.mxu0
    %v496 = vadd.f32 %v128, %v495
    %v497 = vpop.f32.mrf.mxu0
    %498 = vdwg.mxu0
    %499 = vmatpush.bf16.msra.mxu0 %v448
    %500 = vmatpush.bf16.msra.mxu0 %v445
    %501 = vmatpush.bf16.msra.mxu0 %v442
    %502 = vmatpush.bf16.msra.mxu0 %v439
    %503 = vmatpush.bf16.msra.mxu0 %v436
    %504 = vmatpush.bf16.msra.mxu0 %v433
    %505 = vmatpush.bf16.msra.mxu0 %v430
    %506 = vmatpush.bf16.msra.mxu0 %v427
    %507 = vmatmul.bf16.gmra.mxu0 %v312
    %v508 = vpop.f32.mrf.mxu0
    %v509 = vadd.f32 %v129, %v508
    %v510 = vpop.f32.mrf.mxu0
    %511 = vdwg.mxu0
    %v515 = vrot.slane %v496, 6
    %v516 = vrot.slane %v509, 4
    %v517 = vsel %vm305, %v483, %v515
    %v518 = vsel %vm307, %v517, %v516
    %s520 = scalar_lea.vmem [#allocation2], 6
    %521 = vst [vmem:[%s520] sm:$0x3f] %v518
    %s522 = scalar_lea.vmem [#allocation4], 2
    %v523 = vld [vmem:[%s522] sm:$0x1]
    %v524 = vld [vmem:[#allocation7] sm:$0xff]
    %v525 = vld [vmem:[#allocation7 + $0x8] sm:$0xf]
    %v526 = vld [vmem:[#allocation7 + $0xc] sm:$0xff]
    %v527 = vld [vmem:[#allocation7 + $0x14] sm:$0xf]
    %v528 = vld [vmem:[#allocation7 + $0x18] sm:$0xff]
    %v529 = vld [vmem:[#allocation7 + $0x20] sm:$0xf]
    %v530 = vld [vmem:[#allocation7 + $0x24] sm:$0xff]
    %v531 = vld [vmem:[#allocation7 + $0x2c] sm:$0xf]
    %v532 = vld [vmem:[#allocation7 + $0x30] sm:$0xff]
    %v533 = vld [vmem:[#allocation7 + $0x38] sm:$0xf]
    %v534 = vld [vmem:[#allocation7 + $0x3c] sm:$0xff]
    %v535 = vld [vmem:[#allocation7 + $0x44] sm:$0xf]
    %v536 = vld [vmem:[#allocation7 + $0x48] sm:$0xff]
    %v537 = vld [vmem:[#allocation7 + $0x50] sm:$0xf]
    %v538 = vld [vmem:[#allocation7 + $0x54] sm:$0xff]
    %v539 = vld [vmem:[#allocation7 + $0x5c] sm:$0xf]
    %v540 = vld [vmem:[#allocation7 + $0x60] sm:$0xff]
    %v541 = vld [vmem:[#allocation7 + $0x68] sm:$0xf]
    %v542 = vld [vmem:[#allocation7 + $0x6c] sm:$0xff]
    %v543 = vld [vmem:[#allocation7 + $0x74] sm:$0xf]
    %v544 = vld [vmem:[#allocation7 + $0x78] sm:$0xff]
    %v545 = vld [vmem:[#allocation7 + $0x80] sm:$0xf]
    %v546 = vld [vmem:[#allocation7 + $0x84] sm:$0xff]
    %v547 = vld [vmem:[#allocation7 + $0x8c] sm:$0xf]
    %v548 = vld [vmem:[#allocation7 + $0x90] sm:$0xff]
    %v549 = vld [vmem:[#allocation7 + $0x98] sm:$0xf]
    %v550 = vld [vmem:[#allocation7 + $0x9c] sm:$0xff]
    %v551 = vld [vmem:[#allocation7 + $0xa4] sm:$0xf]
    %v552 = vld [vmem:[#allocation7 + $0xa8] sm:$0xff]
    %v553 = vld [vmem:[#allocation7 + $0xb0] sm:$0xf]
    %v554 = vld [vmem:[#allocation7 + $0xb4] sm:$0xff]
    %v555 = vld [vmem:[#allocation7 + $0xbc] sm:$0xf]
    %v588 = vunpack.c.l.b16 %v524
    %v589 = vunpack.c.h.b16 %v524
    %v590 = vunpack.c.l.b16 %v525
    %v591 = vunpack.c.l.b16 %v526
    %v592 = vunpack.c.h.b16 %v526
    %v593 = vunpack.c.l.b16 %v527
    %v594 = vunpack.c.l.b16 %v528
    %v595 = vunpack.c.h.b16 %v528
    %v596 = vunpack.c.l.b16 %v529
    %v597 = vunpack.c.l.b16 %v530
    %v598 = vunpack.c.h.b16 %v530
    %v599 = vunpack.c.l.b16 %v531
    %v600 = vunpack.c.l.b16 %v532
    %v601 = vunpack.c.h.b16 %v532
    %v602 = vunpack.c.l.b16 %v533
    %v603 = vunpack.c.l.b16 %v534
    %v604 = vunpack.c.h.b16 %v534
    %v605 = vunpack.c.l.b16 %v535
    %v606 = vunpack.c.l.b16 %v536
    %v607 = vunpack.c.h.b16 %v536
    %v608 = vunpack.c.l.b16 %v537
    %v609 = vunpack.c.l.b16 %v538
    %v610 = vunpack.c.h.b16 %v538
    %v611 = vunpack.c.l.b16 %v539
    %v612 = vunpack.c.l.b16 %v540
    %v613 = vunpack.c.h.b16 %v540
    %v614 = vunpack.c.l.b16 %v541
    %v615 = vunpack.c.l.b16 %v542
    %v616 = vunpack.c.h.b16 %v542
    %v617 = vunpack.c.l.b16 %v543
    %v618 = vunpack.c.l.b16 %v544
    %v619 = vunpack.c.h.b16 %v544
    %v620 = vunpack.c.l.b16 %v545
    %v621 = vunpack.c.l.b16 %v546
    %v622 = vunpack.c.h.b16 %v546
    %v623 = vunpack.c.l.b16 %v547
    %v624 = vunpack.c.l.b16 %v548
    %v625 = vunpack.c.h.b16 %v548
    %v626 = vunpack.c.l.b16 %v549
    %v627 = vunpack.c.l.b16 %v550
    %v628 = vunpack.c.h.b16 %v550
    %v629 = vunpack.c.l.b16 %v551
    %v630 = vunpack.c.l.b16 %v552
    %v631 = vunpack.c.h.b16 %v552
    %v632 = vunpack.c.l.b16 %v553
    %v633 = vunpack.c.l.b16 %v554
    %v634 = vunpack.c.h.b16 %v554
    %v635 = vunpack.c.l.b16 %v555
    %v636 = vpack.c.b16 %v591, %v588
    %v637 = vpack.c.b16 %v592, %v589
    %v638 = vpack.c.b16 %v593, %v590
    %v639 = vpack.c.b16 %v597, %v594
    %v640 = vpack.c.b16 %v598, %v595
    %v641 = vpack.c.b16 %v599, %v596
    %v642 = vpack.c.b16 %v603, %v600
    %v643 = vpack.c.b16 %v604, %v601
    %v644 = vpack.c.b16 %v605, %v602
    %v645 = vpack.c.b16 %v609, %v606
    %v646 = vpack.c.b16 %v610, %v607
    %v647 = vpack.c.b16 %v611, %v608
    %v648 = vpack.c.b16 %v615, %v612
    %v649 = vpack.c.b16 %v616, %v613
    %v650 = vpack.c.b16 %v617, %v614
    %v651 = vpack.c.b16 %v621, %v618
    %v652 = vpack.c.b16 %v622, %v619
    %v653 = vpack.c.b16 %v623, %v620
    %v654 = vpack.c.b16 %v627, %v624
    %v655 = vpack.c.b16 %v628, %v625
    %v656 = vpack.c.b16 %v629, %v626
    %v657 = vpack.c.b16 %v633, %v630
    %v658 = vpack.c.b16 %v634, %v631
    %v659 = vpack.c.b16 %v635, %v632
    %684 = vmatpush.bf16.msra.mxu0 %v657
    %685 = vmatpush.bf16.msra.mxu0 %v654
    %686 = vmatpush.bf16.msra.mxu0 %v651
    %687 = vmatpush.bf16.msra.mxu0 %v648
    %688 = vmatpush.bf16.msra.mxu0 %v645
    %689 = vmatpush.bf16.msra.mxu0 %v642
    %690 = vmatpush.bf16.msra.mxu0 %v639
    %691 = vmatpush.bf16.msra.mxu0 %v636
    %692 = vmatmul.bf16.gmra.mxu0 %v523
    %v693 = vpop.f32.mrf.mxu0
    %v694 = vadd.f32 %v127, %v693
    %v695 = vpop.f32.mrf.mxu0
    %696 = vdwg.mxu0
    %697 = vmatpush.bf16.msra.mxu0 %v658
    %698 = vmatpush.bf16.msra.mxu0 %v655
    %699 = vmatpush.bf16.msra.mxu0 %v652
    %700 = vmatpush.bf16.msra.mxu0 %v649
    %701 = vmatpush.bf16.msra.mxu0 %v646
    %702 = vmatpush.bf16.msra.mxu0 %v643
    %703 = vmatpush.bf16.msra.mxu0 %v640
    %704 = vmatpush.bf16.msra.mxu0 %v637
    %705 = vmatmul.bf16.gmra.mxu0 %v523
    %v706 = vpop.f32.mrf.mxu0
    %v707 = vadd.f32 %v128, %v706
    %v708 = vpop.f32.mrf.mxu0
    %709 = vdwg.mxu0
    %710 = vmatpush.bf16.msra.mxu0 %v659
    %711 = vmatpush.bf16.msra.mxu0 %v656
    %712 = vmatpush.bf16.msra.mxu0 %v653
    %713 = vmatpush.bf16.msra.mxu0 %v650
    %714 = vmatpush.bf16.msra.mxu0 %v647
    %715 = vmatpush.bf16.msra.mxu0 %v644
    %716 = vmatpush.bf16.msra.mxu0 %v641
    %717 = vmatpush.bf16.msra.mxu0 %v638
    %718 = vmatmul.bf16.gmra.mxu0 %v523
    %v719 = vpop.f32.mrf.mxu0
    %v720 = vadd.f32 %v129, %v719
    %v721 = vpop.f32.mrf.mxu0
    %722 = vdwg.mxu0
    %v726 = vrot.slane %v707, 6
    %v727 = vrot.slane %v720, 4
    %v728 = vsel %vm305, %v694, %v726
    %v729 = vsel %vm307, %v728, %v727
    %s731 = scalar_lea.vmem [#allocation2], 12
    %732 = vst [vmem:[%s731] sm:$0x3f] %v729
    %s733 = scalar_lea.vmem [#allocation4], 3
    %v734 = vld [vmem:[%s733] sm:$0x1]
    %v735 = vld [vmem:[#allocation7] sm:$0xff]
    %v736 = vld [vmem:[#allocation7 + $0x8] sm:$0xf]
    %v737 = vld [vmem:[#allocation7 + $0xc] sm:$0xff]
    %v738 = vld [vmem:[#allocation7 + $0x14] sm:$0xf]
    %v739 = vld [vmem:[#allocation7 + $0x18] sm:$0xff]
    %v740 = vld [vmem:[#allocation7 + $0x20] sm:$0xf]
    %v741 = vld [vmem:[#allocation7 + $0x24] sm:$0xff]
    %v742 = vld [vmem:[#allocation7 + $0x2c] sm:$0xf]
    %v743 = vld [vmem:[#allocation7 + $0x30] sm:$0xff]
    %v744 = vld [vmem:[#allocation7 + $0x38] sm:$0xf]
    %v745 = vld [vmem:[#allocation7 + $0x3c] sm:$0xff]
    %v746 = vld [vmem:[#allocation7 + $0x44] sm:$0xf]
    %v747 = vld [vmem:[#allocation7 + $0x48] sm:$0xff]
    %v748 = vld [vmem:[#allocation7 + $0x50] sm:$0xf]
    %v749 = vld [vmem:[#allocation7 + $0x54] sm:$0xff]
    %v750 = vld [vmem:[#allocation7 + $0x5c] sm:$0xf]
    %v751 = vld [vmem:[#allocation7 + $0x60] sm:$0xff]
    %v752 = vld [vmem:[#allocation7 + $0x68] sm:$0xf]
    %v753 = vld [vmem:[#allocation7 + $0x6c] sm:$0xff]
    %v754 = vld [vmem:[#allocation7 + $0x74] sm:$0xf]
    %v755 = vld [vmem:[#allocation7 + $0x78] sm:$0xff]
    %v756 = vld [vmem:[#allocation7 + $0x80] sm:$0xf]
    %v757 = vld [vmem:[#allocation7 + $0x84] sm:$0xff]
    %v758 = vld [vmem:[#allocation7 + $0x8c] sm:$0xf]
    %v759 = vld [vmem:[#allocation7 + $0x90] sm:$0xff]
    %v760 = vld [vmem:[#allocation7 + $0x98] sm:$0xf]
    %v761 = vld [vmem:[#allocation7 + $0x9c] sm:$0xff]
    %v762 = vld [vmem:[#allocation7 + $0xa4] sm:$0xf]
    %v763 = vld [vmem:[#allocation7 + $0xa8] sm:$0xff]
    %v764 = vld [vmem:[#allocation7 + $0xb0] sm:$0xf]
    %v765 = vld [vmem:[#allocation7 + $0xb4] sm:$0xff]
    %v766 = vld [vmem:[#allocation7 + $0xbc] sm:$0xf]
    %v799 = vunpack.c.l.b16 %v735
    %v800 = vunpack.c.h.b16 %v735
    %v801 = vunpack.c.l.b16 %v736
    %v802 = vunpack.c.l.b16 %v737
    %v803 = vunpack.c.h.b16 %v737
    %v804 = vunpack.c.l.b16 %v738
    %v805 = vunpack.c.l.b16 %v739
    %v806 = vunpack.c.h.b16 %v739
    %v807 = vunpack.c.l.b16 %v740
    %v808 = vunpack.c.l.b16 %v741
    %v809 = vunpack.c.h.b16 %v741
    %v810 = vunpack.c.l.b16 %v742
    %v811 = vunpack.c.l.b16 %v743
    %v812 = vunpack.c.h.b16 %v743
    %v813 = vunpack.c.l.b16 %v744
    %v814 = vunpack.c.l.b16 %v745
    %v815 = vunpack.c.h.b16 %v745
    %v816 = vunpack.c.l.b16 %v746
    %v817 = vunpack.c.l.b16 %v747
    %v818 = vunpack.c.h.b16 %v747
    %v819 = vunpack.c.l.b16 %v748
    %v820 = vunpack.c.l.b16 %v749
    %v821 = vunpack.c.h.b16 %v749
    %v822 = vunpack.c.l.b16 %v750
    %v823 = vunpack.c.l.b16 %v751
    %v824 = vunpack.c.h.b16 %v751
    %v825 = vunpack.c.l.b16 %v752
    %v826 = vunpack.c.l.b16 %v753
    %v827 = vunpack.c.h.b16 %v753
    %v828 = vunpack.c.l.b16 %v754
    %v829 = vunpack.c.l.b16 %v755
    %v830 = vunpack.c.h.b16 %v755
    %v831 = vunpack.c.l.b16 %v756
    %v832 = vunpack.c.l.b16 %v757
    %v833 = vunpack.c.h.b16 %v757
    %v834 = vunpack.c.l.b16 %v758
    %v835 = vunpack.c.l.b16 %v759
    %v836 = vunpack.c.h.b16 %v759
    %v837 = vunpack.c.l.b16 %v760
    %v838 = vunpack.c.l.b16 %v761
    %v839 = vunpack.c.h.b16 %v761
    %v840 = vunpack.c.l.b16 %v762
    %v841 = vunpack.c.l.b16 %v763
    %v842 = vunpack.c.h.b16 %v763
    %v843 = vunpack.c.l.b16 %v764
    %v844 = vunpack.c.l.b16 %v765
    %v845 = vunpack.c.h.b16 %v765
    %v846 = vunpack.c.l.b16 %v766
    %v847 = vpack.c.b16 %v802, %v799
    %v848 = vpack.c.b16 %v803, %v800
    %v849 = vpack.c.b16 %v804, %v801
    %v850 = vpack.c.b16 %v808, %v805
    %v851 = vpack.c.b16 %v809, %v806
    %v852 = vpack.c.b16 %v810, %v807
    %v853 = vpack.c.b16 %v814, %v811
    %v854 = vpack.c.b16 %v815, %v812
    %v855 = vpack.c.b16 %v816, %v813
    %v856 = vpack.c.b16 %v820, %v817
    %v857 = vpack.c.b16 %v821, %v818
    %v858 = vpack.c.b16 %v822, %v819
    %v859 = vpack.c.b16 %v826, %v823
    %v860 = vpack.c.b16 %v827, %v824
    %v861 = vpack.c.b16 %v828, %v825
    %v862 = vpack.c.b16 %v832, %v829
    %v863 = vpack.c.b16 %v833, %v830
    %v864 = vpack.c.b16 %v834, %v831
    %v865 = vpack.c.b16 %v838, %v835
    %v866 = vpack.c.b16 %v839, %v836
    %v867 = vpack.c.b16 %v840, %v837
    %v868 = vpack.c.b16 %v844, %v841
    %v869 = vpack.c.b16 %v845, %v842
    %v870 = vpack.c.b16 %v846, %v843
    %895 = vmatpush.bf16.msra.mxu0 %v868
    %896 = vmatpush.bf16.msra.mxu0 %v865
    %897 = vmatpush.bf16.msra.mxu0 %v862
    %898 = vmatpush.bf16.msra.mxu0 %v859
    %899 = vmatpush.bf16.msra.mxu0 %v856
    %900 = vmatpush.bf16.msra.mxu0 %v853
    %901 = vmatpush.bf16.msra.mxu0 %v850
    %902 = vmatpush.bf16.msra.mxu0 %v847
    %903 = vmatmul.bf16.gmra.mxu0 %v734
    %v904 = vpop.f32.mrf.mxu0
    %v905 = vadd.f32 %v127, %v904
    %v906 = vpop.f32.mrf.mxu0
    %907 = vdwg.mxu0
    %908 = vmatpush.bf16.msra.mxu0 %v869
    %909 = vmatpush.bf16.msra.mxu0 %v866
    %910 = vmatpush.bf16.msra.mxu0 %v863
    %911 = vmatpush.bf16.msra.mxu0 %v860
    %912 = vmatpush.bf16.msra.mxu0 %v857
    %913 = vmatpush.bf16.msra.mxu0 %v854
    %914 = vmatpush.bf16.msra.mxu0 %v851
    %915 = vmatpush.bf16.msra.mxu0 %v848
    %916 = vmatmul.bf16.gmra.mxu0 %v734
    %v917 = vpop.f32.mrf.mxu0
    %v918 = vadd.f32 %v128, %v917
    %v919 = vpop.f32.mrf.mxu0
    %920 = vdwg.mxu0
    %921 = vmatpush.bf16.msra.mxu0 %v870
    %922 = vmatpush.bf16.msra.mxu0 %v867
    %923 = vmatpush.bf16.msra.mxu0 %v864
    %924 = vmatpush.bf16.msra.mxu0 %v861
    %925 = vmatpush.bf16.msra.mxu0 %v858
    %926 = vmatpush.bf16.msra.mxu0 %v855
    %927 = vmatpush.bf16.msra.mxu0 %v852
    %928 = vmatpush.bf16.msra.mxu0 %v849
    %929 = vmatmul.bf16.gmra.mxu0 %v734
    %v930 = vpop.f32.mrf.mxu0
    %v931 = vadd.f32 %v129, %v930
    %v932 = vpop.f32.mrf.mxu0
    %933 = vdwg.mxu0
    %v937 = vrot.slane %v918, 6
    %v938 = vrot.slane %v931, 4
    %v939 = vsel %vm305, %v905, %v937
    %v940 = vsel %vm307, %v939, %v938
    %s942 = scalar_lea.vmem [#allocation2], 18
    %943 = vst [vmem:[%s942] sm:$0x3f] %v940
    %s944 = scalar_lea.vmem [#allocation4], 4
    %v945 = vld [vmem:[%s944] sm:$0x1]
    %v946 = vld [vmem:[#allocation7] sm:$0xff]
    %v947 = vld [vmem:[#allocation7 + $0x8] sm:$0xf]
    %v948 = vld [vmem:[#allocation7 + $0xc] sm:$0xff]
    %v949 = vld [vmem:[#allocation7 + $0x14] sm:$0xf]
    %v950 = vld [vmem:[#allocation7 + $0x18] sm:$0xff]
    %v951 = vld [vmem:[#allocation7 + $0x20] sm:$0xf]
    %v952 = vld [vmem:[#allocation7 + $0x24] sm:$0xff]
    %v953 = vld [vmem:[#allocation7 + $0x2c] sm:$0xf]
    %v954 = vld [vmem:[#allocation7 + $0x30] sm:$0xff]
    %v955 = vld [vmem:[#allocation7 + $0x38] sm:$0xf]
    %v956 = vld [vmem:[#allocation7 + $0x3c] sm:$0xff]
    %v957 = vld [vmem:[#allocation7 + $0x44] sm:$0xf]
    %v958 = vld [vmem:[#allocation7 + $0x48] sm:$0xff]
    %v959 = vld [vmem:[#allocation7 + $0x50] sm:$0xf]
    %v960 = vld [vmem:[#allocation7 + $0x54] sm:$0xff]
    %v961 = vld [vmem:[#allocation7 + $0x5c] sm:$0xf]
    %v962 = vld [vmem:[#allocation7 + $0x60] sm:$0xff]
    %v963 = vld [vmem:[#allocation7 + $0x68] sm:$0xf]
    %v964 = vld [vmem:[#allocation7 + $0x6c] sm:$0xff]
    %v965 = vld [vmem:[#allocation7 + $0x74] sm:$0xf]
    %v966 = vld [vmem:[#allocation7 + $0x78] sm:$0xff]
    %v967 = vld [vmem:[#allocation7 + $0x80] sm:$0xf]
    %v968 = vld [vmem:[#allocation7 + $0x84] sm:$0xff]
    %v969 = vld [vmem:[#allocation7 + $0x8c] sm:$0xf]
    %v970 = vld [vmem:[#allocation7 + $0x90] sm:$0xff]
    %v971 = vld [vmem:[#allocation7 + $0x98] sm:$0xf]
    %v972 = vld [vmem:[#allocation7 + $0x9c] sm:$0xff]
    %v973 = vld [vmem:[#allocation7 + $0xa4] sm:$0xf]
    %v974 = vld [vmem:[#allocation7 + $0xa8] sm:$0xff]
    %v975 = vld [vmem:[#allocation7 + $0xb0] sm:$0xf]
    %v976 = vld [vmem:[#allocation7 + $0xb4] sm:$0xff]
    %v977 = vld [vmem:[#allocation7 + $0xbc] sm:$0xf]
    %v1010 = vunpack.c.l.b16 %v946
    %v1011 = vunpack.c.h.b16 %v946
    %v1012 = vunpack.c.l.b16 %v947
    %v1013 = vunpack.c.l.b16 %v948
    %v1014 = vunpack.c.h.b16 %v948
    %v1015 = vunpack.c.l.b16 %v949
    %v1016 = vunpack.c.l.b16 %v950
    %v1017 = vunpack.c.h.b16 %v950
    %v1018 = vunpack.c.l.b16 %v951
    %v1019 = vunpack.c.l.b16 %v952
    %v1020 = vunpack.c.h.b16 %v952
    %v1021 = vunpack.c.l.b16 %v953
    %v1022 = vunpack.c.l.b16 %v954
    %v1023 = vunpack.c.h.b16 %v954
    %v1024 = vunpack.c.l.b16 %v955
    %v1025 = vunpack.c.l.b16 %v956
    %v1026 = vunpack.c.h.b16 %v956
    %v1027 = vunpack.c.l.b16 %v957
    %v1028 = vunpack.c.l.b16 %v958
    %v1029 = vunpack.c.h.b16 %v958
    %v1030 = vunpack.c.l.b16 %v959
    %v1031 = vunpack.c.l.b16 %v960
    %v1032 = vunpack.c.h.b16 %v960
    %v1033 = vunpack.c.l.b16 %v961
    %v1034 = vunpack.c.l.b16 %v962
    %v1035 = vunpack.c.h.b16 %v962
    %v1036 = vunpack.c.l.b16 %v963
    %v1037 = vunpack.c.l.b16 %v964
    %v1038 = vunpack.c.h.b16 %v964
    %v1039 = vunpack.c.l.b16 %v965
    %v1040 = vunpack.c.l.b16 %v966
    %v1041 = vunpack.c.h.b16 %v966
    %v1042 = vunpack.c.l.b16 %v967
    %v1043 = vunpack.c.l.b16 %v968
    %v1044 = vunpack.c.h.b16 %v968
    %v1045 = vunpack.c.l.b16 %v969
    %v1046 = vunpack.c.l.b16 %v970
    %v1047 = vunpack.c.h.b16 %v970
    %v1048 = vunpack.c.l.b16 %v971
    %v1049 = vunpack.c.l.b16 %v972
    %v1050 = vunpack.c.h.b16 %v972
    %v1051 = vunpack.c.l.b16 %v973
    %v1052 = vunpack.c.l.b16 %v974
    %v1053 = vunpack.c.h.b16 %v974
    %v1054 = vunpack.c.l.b16 %v975
    %v1055 = vunpack.c.l.b16 %v976
    %v1056 = vunpack.c.h.b16 %v976
    %v1057 = vunpack.c.l.b16 %v977
    %v1058 = vpack.c.b16 %v1013, %v1010
    %v1059 = vpack.c.b16 %v1014, %v1011
    %v1060 = vpack.c.b16 %v1015, %v1012
    %v1061 = vpack.c.b16 %v1019, %v1016
    %v1062 = vpack.c.b16 %v1020, %v1017
    %v1063 = vpack.c.b16 %v1021, %v1018
    %v1064 = vpack.c.b16 %v1025, %v1022
    %v1065 = vpack.c.b16 %v1026, %v1023
    %v1066 = vpack.c.b16 %v1027, %v1024
    %v1067 = vpack.c.b16 %v1031, %v1028
    %v1068 = vpack.c.b16 %v1032, %v1029
    %v1069 = vpack.c.b16 %v1033, %v1030
    %v1070 = vpack.c.b16 %v1037, %v1034
    %v1071 = vpack.c.b16 %v1038, %v1035
    %v1072 = vpack.c.b16 %v1039, %v1036
    %v1073 = vpack.c.b16 %v1043, %v1040
    %v1074 = vpack.c.b16 %v1044, %v1041
    %v1075 = vpack.c.b16 %v1045, %v1042
    %v1076 = vpack.c.b16 %v1049, %v1046
    %v1077 = vpack.c.b16 %v1050, %v1047
    %v1078 = vpack.c.b16 %v1051, %v1048
    %v1079 = vpack.c.b16 %v1055, %v1052
    %v1080 = vpack.c.b16 %v1056, %v1053
    %v1081 = vpack.c.b16 %v1057, %v1054
    %1106 = vmatpush.bf16.msra.mxu0 %v1079
    %1107 = vmatpush.bf16.msra.mxu0 %v1076
    %1108 = vmatpush.bf16.msra.mxu0 %v1073
    %1109 = vmatpush.bf16.msra.mxu0 %v1070
    %1110 = vmatpush.bf16.msra.mxu0 %v1067
    %1111 = vmatpush.bf16.msra.mxu0 %v1064
    %1112 = vmatpush.bf16.msra.mxu0 %v1061
    %1113 = vmatpush.bf16.msra.mxu0 %v1058
    %1114 = vmatmul.bf16.gmra.mxu0 %v945
    %v1115 = vpop.f32.mrf.mxu0
    %v1116 = vadd.f32 %v127, %v1115
    %v1117 = vpop.f32.mrf.mxu0
    %1118 = vdwg.mxu0
    %1119 = vmatpush.bf16.msra.mxu0 %v1080
    %1120 = vmatpush.bf16.msra.mxu0 %v1077
    %1121 = vmatpush.bf16.msra.mxu0 %v1074
    %1122 = vmatpush.bf16.msra.mxu0 %v1071
    %1123 = vmatpush.bf16.msra.mxu0 %v1068
    %1124 = vmatpush.bf16.msra.mxu0 %v1065
    %1125 = vmatpush.bf16.msra.mxu0 %v1062
    %1126 = vmatpush.bf16.msra.mxu0 %v1059
    %1127 = vmatmul.bf16.gmra.mxu0 %v945
    %v1128 = vpop.f32.mrf.mxu0
    %v1129 = vadd.f32 %v128, %v1128
    %v1130 = vpop.f32.mrf.mxu0
    %1131 = vdwg.mxu0
    %1132 = vmatpush.bf16.msra.mxu0 %v1081
    %1133 = vmatpush.bf16.msra.mxu0 %v1078
    %1134 = vmatpush.bf16.msra.mxu0 %v1075
    %1135 = vmatpush.bf16.msra.mxu0 %v1072
    %1136 = vmatpush.bf16.msra.mxu0 %v1069
    %1137 = vmatpush.bf16.msra.mxu0 %v1066
    %1138 = vmatpush.bf16.msra.mxu0 %v1063
    %1139 = vmatpush.bf16.msra.mxu0 %v1060
    %1140 = vmatmul.bf16.gmra.mxu0 %v945
    %v1141 = vpop.f32.mrf.mxu0
    %v1142 = vadd.f32 %v129, %v1141
    %v1143 = vpop.f32.mrf.mxu0
    %1144 = vdwg.mxu0
    %v1148 = vrot.slane %v1129, 6
    %v1149 = vrot.slane %v1142, 4
    %v1150 = vsel %vm305, %v1116, %v1148
    %v1151 = vsel %vm307, %v1150, %v1149
    %s1153 = scalar_lea.vmem [#allocation2], 24
    %1154 = vst [vmem:[%s1153] sm:$0x3f] %v1151
    %s1155 = scalar_lea.vmem [#allocation4], 5
    %v1156 = vld [vmem:[%s1155] sm:$0x1]
    %v1157 = vld [vmem:[#allocation7] sm:$0xff]
    %v1158 = vld [vmem:[#allocation7 + $0x8] sm:$0xf]
    %v1159 = vld [vmem:[#allocation7 + $0xc] sm:$0xff]
    %v1160 = vld [vmem:[#allocation7 + $0x14] sm:$0xf]
    %v1161 = vld [vmem:[#allocation7 + $0x18] sm:$0xff]
    %v1162 = vld [vmem:[#allocation7 + $0x20] sm:$0xf]
    %v1163 = vld [vmem:[#allocation7 + $0x24] sm:$0xff]
    %v1164 = vld [vmem:[#allocation7 + $0x2c] sm:$0xf]
    %v1165 = vld [vmem:[#allocation7 + $0x30] sm:$0xff]
    %v1166 = vld [vmem:[#allocation7 + $0x38] sm:$0xf]
    %v1167 = vld [vmem:[#allocation7 + $0x3c] sm:$0xff]
    %v1168 = vld [vmem:[#allocation7 + $0x44] sm:$0xf]
    %v1169 = vld [vmem:[#allocation7 + $0x48] sm:$0xff]
    %v1170 = vld [vmem:[#allocation7 + $0x50] sm:$0xf]
    %v1171 = vld [vmem:[#allocation7 + $0x54] sm:$0xff]
    %v1172 = vld [vmem:[#allocation7 + $0x5c] sm:$0xf]
    %v1173 = vld [vmem:[#allocation7 + $0x60] sm:$0xff]
    %v1174 = vld [vmem:[#allocation7 + $0x68] sm:$0xf]
    %v1175 = vld [vmem:[#allocation7 + $0x6c] sm:$0xff]
    %v1176 = vld [vmem:[#allocation7 + $0x74] sm:$0xf]
    %v1177 = vld [vmem:[#allocation7 + $0x78] sm:$0xff]
    %v1178 = vld [vmem:[#allocation7 + $0x80] sm:$0xf]
    %v1179 = vld [vmem:[#allocation7 + $0x84] sm:$0xff]
    %v1180 = vld [vmem:[#allocation7 + $0x8c] sm:$0xf]
    %v1181 = vld [vmem:[#allocation7 + $0x90] sm:$0xff]
    %v1182 = vld [vmem:[#allocation7 + $0x98] sm:$0xf]
    %v1183 = vld [vmem:[#allocation7 + $0x9c] sm:$0xff]
    %v1184 = vld [vmem:[#allocation7 + $0xa4] sm:$0xf]
    %v1185 = vld [vmem:[#allocation7 + $0xa8] sm:$0xff]
    %v1186 = vld [vmem:[#allocation7 + $0xb0] sm:$0xf]
    %v1187 = vld [vmem:[#allocation7 + $0xb4] sm:$0xff]
    %v1188 = vld [vmem:[#allocation7 + $0xbc] sm:$0xf]
    %v1221 = vunpack.c.l.b16 %v1157
    %v1222 = vunpack.c.h.b16 %v1157
    %v1223 = vunpack.c.l.b16 %v1158
    %v1224 = vunpack.c.l.b16 %v1159
    %v1225 = vunpack.c.h.b16 %v1159
    %v1226 = vunpack.c.l.b16 %v1160
    %v1227 = vunpack.c.l.b16 %v1161
    %v1228 = vunpack.c.h.b16 %v1161
    %v1229 = vunpack.c.l.b16 %v1162
    %v1230 = vunpack.c.l.b16 %v1163
    %v1231 = vunpack.c.h.b16 %v1163
    %v1232 = vunpack.c.l.b16 %v1164
    %v1233 = vunpack.c.l.b16 %v1165
    %v1234 = vunpack.c.h.b16 %v1165
    %v1235 = vunpack.c.l.b16 %v1166
    %v1236 = vunpack.c.l.b16 %v1167
    %v1237 = vunpack.c.h.b16 %v1167
    %v1238 = vunpack.c.l.b16 %v1168
    %v1239 = vunpack.c.l.b16 %v1169
    %v1240 = vunpack.c.h.b16 %v1169
    %v1241 = vunpack.c.l.b16 %v1170
    %v1242 = vunpack.c.l.b16 %v1171
    %v1243 = vunpack.c.h.b16 %v1171
    %v1244 = vunpack.c.l.b16 %v1172
    %v1245 = vunpack.c.l.b16 %v1173
    %v1246 = vunpack.c.h.b16 %v1173
    %v1247 = vunpack.c.l.b16 %v1174
    %v1248 = vunpack.c.l.b16 %v1175
    %v1249 = vunpack.c.h.b16 %v1175
    %v1250 = vunpack.c.l.b16 %v1176
    %v1251 = vunpack.c.l.b16 %v1177
    %v1252 = vunpack.c.h.b16 %v1177
    %v1253 = vunpack.c.l.b16 %v1178
    %v1254 = vunpack.c.l.b16 %v1179
    %v1255 = vunpack.c.h.b16 %v1179
    %v1256 = vunpack.c.l.b16 %v1180
    %v1257 = vunpack.c.l.b16 %v1181
    %v1258 = vunpack.c.h.b16 %v1181
    %v1259 = vunpack.c.l.b16 %v1182
    %v1260 = vunpack.c.l.b16 %v1183
    %v1261 = vunpack.c.h.b16 %v1183
    %v1262 = vunpack.c.l.b16 %v1184
    %v1263 = vunpack.c.l.b16 %v1185
    %v1264 = vunpack.c.h.b16 %v1185
    %v1265 = vunpack.c.l.b16 %v1186
    %v1266 = vunpack.c.l.b16 %v1187
    %v1267 = vunpack.c.h.b16 %v1187
    %v1268 = vunpack.c.l.b16 %v1188
    %v1269 = vpack.c.b16 %v1224, %v1221
    %v1270 = vpack.c.b16 %v1225, %v1222
    %v1271 = vpack.c.b16 %v1226, %v1223
    %v1272 = vpack.c.b16 %v1230, %v1227
    %v1273 = vpack.c.b16 %v1231, %v1228
    %v1274 = vpack.c.b16 %v1232, %v1229
    %v1275 = vpack.c.b16 %v1236, %v1233
    %v1276 = vpack.c.b16 %v1237, %v1234
    %v1277 = vpack.c.b16 %v1238, %v1235
    %v1278 = vpack.c.b16 %v1242, %v1239
    %v1279 = vpack.c.b16 %v1243, %v1240
    %v1280 = vpack.c.b16 %v1244, %v1241
    %v1281 = vpack.c.b16 %v1248, %v1245
    %v1282 = vpack.c.b16 %v1249, %v1246
    %v1283 = vpack.c.b16 %v1250, %v1247
    %v1284 = vpack.c.b16 %v1254, %v1251
    %v1285 = vpack.c.b16 %v1255, %v1252
    %v1286 = vpack.c.b16 %v1256, %v1253
    %v1287 = vpack.c.b16 %v1260, %v1257
    %v1288 = vpack.c.b16 %v1261, %v1258
    %v1289 = vpack.c.b16 %v1262, %v1259
    %v1290 = vpack.c.b16 %v1266, %v1263
    %v1291 = vpack.c.b16 %v1267, %v1264
    %v1292 = vpack.c.b16 %v1268, %v1265
    %1317 = vmatpush.bf16.msra.mxu0 %v1290
    %1318 = vmatpush.bf16.msra.mxu0 %v1287
    %1319 = vmatpush.bf16.msra.mxu0 %v1284
    %1320 = vmatpush.bf16.msra.mxu0 %v1281
    %1321 = vmatpush.bf16.msra.mxu0 %v1278
    %1322 = vmatpush.bf16.msra.mxu0 %v1275
    %1323 = vmatpush.bf16.msra.mxu0 %v1272
    %1324 = vmatpush.bf16.msra.mxu0 %v1269
    %1325 = vmatmul.bf16.gmra.mxu0 %v1156
    %v1326 = vpop.f32.mrf.mxu0
    %v1327 = vadd.f32 %v127, %v1326
    %v1328 = vpop.f32.mrf.mxu0
    %1329 = vdwg.mxu0
    %1330 = vmatpush.bf16.msra.mxu0 %v1291
    %1331 = vmatpush.bf16.msra.mxu0 %v1288
    %1332 = vmatpush.bf16.msra.mxu0 %v1285
    %1333 = vmatpush.bf16.msra.mxu0 %v1282
    %1334 = vmatpush.bf16.msra.mxu0 %v1279
    %1335 = vmatpush.bf16.msra.mxu0 %v1276
    %1336 = vmatpush.bf16.msra.mxu0 %v1273
    %1337 = vmatpush.bf16.msra.mxu0 %v1270
    %1338 = vmatmul.bf16.gmra.mxu0 %v1156
    %v1339 = vpop.f32.mrf.mxu0
    %v1340 = vadd.f32 %v128, %v1339
    %v1341 = vpop.f32.mrf.mxu0
    %1342 = vdwg.mxu0
    %1343 = vmatpush.bf16.msra.mxu0 %v1292
    %1344 = vmatpush.bf16.msra.mxu0 %v1289
    %1345 = vmatpush.bf16.msra.mxu0 %v1286
    %1346 = vmatpush.bf16.msra.mxu0 %v1283
    %1347 = vmatpush.bf16.msra.mxu0 %v1280
    %1348 = vmatpush.bf16.msra.mxu0 %v1277
    %1349 = vmatpush.bf16.msra.mxu0 %v1274
    %1350 = vmatpush.bf16.msra.mxu0 %v1271
    %1351 = vmatmul.bf16.gmra.mxu0 %v1156
    %v1352 = vpop.f32.mrf.mxu0
    %v1353 = vadd.f32 %v129, %v1352
    %v1354 = vpop.f32.mrf.mxu0
    %1355 = vdwg.mxu0
    %v1359 = vrot.slane %v1340, 6
    %v1360 = vrot.slane %v1353, 4
    %v1361 = vsel %vm305, %v1327, %v1359
    %v1362 = vsel %vm307, %v1361, %v1360
    %s1364 = scalar_lea.vmem [#allocation2], 30
    %1365 = vst [vmem:[%s1364] sm:$0x3f] %v1362
    %s1366 = scalar_lea.vmem [#allocation4], 6
    %v1367 = vld [vmem:[%s1366] sm:$0x1]
    %v1368 = vld [vmem:[#allocation7] sm:$0xff]
    %v1369 = vld [vmem:[#allocation7 + $0x8] sm:$0xf]
    %v1370 = vld [vmem:[#allocation7 + $0xc] sm:$0xff]
    %v1371 = vld [vmem:[#allocation7 + $0x14] sm:$0xf]
    %v1372 = vld [vmem:[#allocation7 + $0x18] sm:$0xff]
    %v1373 = vld [vmem:[#allocation7 + $0x20] sm:$0xf]
    %v1374 = vld [vmem:[#allocation7 + $0x24] sm:$0xff]
    %v1375 = vld [vmem:[#allocation7 + $0x2c] sm:$0xf]
    %v1376 = vld [vmem:[#allocation7 + $0x30] sm:$0xff]
    %v1377 = vld [vmem:[#allocation7 + $0x38] sm:$0xf]
    %v1378 = vld [vmem:[#allocation7 + $0x3c] sm:$0xff]
    %v1379 = vld [vmem:[#allocation7 + $0x44] sm:$0xf]
    %v1380 = vld [vmem:[#allocation7 + $0x48] sm:$0xff]
    %v1381 = vld [vmem:[#allocation7 + $0x50] sm:$0xf]
    %v1382 = vld [vmem:[#allocation7 + $0x54] sm:$0xff]
    %v1383 = vld [vmem:[#allocation7 + $0x5c] sm:$0xf]
    %v1384 = vld [vmem:[#allocation7 + $0x60] sm:$0xff]
    %v1385 = vld [vmem:[#allocation7 + $0x68] sm:$0xf]
    %v1386 = vld [vmem:[#allocation7 + $0x6c] sm:$0xff]
    %v1387 = vld [vmem:[#allocation7 + $0x74] sm:$0xf]
    %v1388 = vld [vmem:[#allocation7 + $0x78] sm:$0xff]
    %v1389 = vld [vmem:[#allocation7 + $0x80] sm:$0xf]
    %v1390 = vld [vmem:[#allocation7 + $0x84] sm:$0xff]
    %v1391 = vld [vmem:[#allocation7 + $0x8c] sm:$0xf]
    %v1392 = vld [vmem:[#allocation7 + $0x90] sm:$0xff]
    %v1393 = vld [vmem:[#allocation7 + $0x98] sm:$0xf]
    %v1394 = vld [vmem:[#allocation7 + $0x9c] sm:$0xff]
    %v1395 = vld [vmem:[#allocation7 + $0xa4] sm:$0xf]
    %v1396 = vld [vmem:[#allocation7 + $0xa8] sm:$0xff]
    %v1397 = vld [vmem:[#allocation7 + $0xb0] sm:$0xf]
    %v1398 = vld [vmem:[#allocation7 + $0xb4] sm:$0xff]
    %v1399 = vld [vmem:[#allocation7 + $0xbc] sm:$0xf]
    %v1432 = vunpack.c.l.b16 %v1368
    %v1433 = vunpack.c.h.b16 %v1368
    %v1434 = vunpack.c.l.b16 %v1369
    %v1435 = vunpack.c.l.b16 %v1370
    %v1436 = vunpack.c.h.b16 %v1370
    %v1437 = vunpack.c.l.b16 %v1371
    %v1438 = vunpack.c.l.b16 %v1372
    %v1439 = vunpack.c.h.b16 %v1372
    %v1440 = vunpack.c.l.b16 %v1373
    %v1441 = vunpack.c.l.b16 %v1374
    %v1442 = vunpack.c.h.b16 %v1374
    %v1443 = vunpack.c.l.b16 %v1375
    %v1444 = vunpack.c.l.b16 %v1376
    %v1445 = vunpack.c.h.b16 %v1376
    %v1446 = vunpack.c.l.b16 %v1377
    %v1447 = vunpack.c.l.b16 %v1378
    %v1448 = vunpack.c.h.b16 %v1378
    %v1449 = vunpack.c.l.b16 %v1379
    %v1450 = vunpack.c.l.b16 %v1380
    %v1451 = vunpack.c.h.b16 %v1380
    %v1452 = vunpack.c.l.b16 %v1381
    %v1453 = vunpack.c.l.b16 %v1382
    %v1454 = vunpack.c.h.b16 %v1382
    %v1455 = vunpack.c.l.b16 %v1383
    %v1456 = vunpack.c.l.b16 %v1384
    %v1457 = vunpack.c.h.b16 %v1384
    %v1458 = vunpack.c.l.b16 %v1385
    %v1459 = vunpack.c.l.b16 %v1386
    %v1460 = vunpack.c.h.b16 %v1386
    %v1461 = vunpack.c.l.b16 %v1387
    %v1462 = vunpack.c.l.b16 %v1388
    %v1463 = vunpack.c.h.b16 %v1388
    %v1464 = vunpack.c.l.b16 %v1389
    %v1465 = vunpack.c.l.b16 %v1390
    %v1466 = vunpack.c.h.b16 %v1390
    %v1467 = vunpack.c.l.b16 %v1391
    %v1468 = vunpack.c.l.b16 %v1392
    %v1469 = vunpack.c.h.b16 %v1392
    %v1470 = vunpack.c.l.b16 %v1393
    %v1471 = vunpack.c.l.b16 %v1394
    %v1472 = vunpack.c.h.b16 %v1394
    %v1473 = vunpack.c.l.b16 %v1395
    %v1474 = vunpack.c.l.b16 %v1396
    %v1475 = vunpack.c.h.b16 %v1396
    %v1476 = vunpack.c.l.b16 %v1397
    %v1477 = vunpack.c.l.b16 %v1398
    %v1478 = vunpack.c.h.b16 %v1398
    %v1479 = vunpack.c.l.b16 %v1399
    %v1480 = vpack.c.b16 %v1435, %v1432
    %v1481 = vpack.c.b16 %v1436, %v1433
    %v1482 = vpack.c.b16 %v1437, %v1434
    %v1483 = vpack.c.b16 %v1441, %v1438
    %v1484 = vpack.c.b16 %v1442, %v1439
    %v1485 = vpack.c.b16 %v1443, %v1440
    %v1486 = vpack.c.b16 %v1447, %v1444
    %v1487 = vpack.c.b16 %v1448, %v1445
    %v1488 = vpack.c.b16 %v1449, %v1446
    %v1489 = vpack.c.b16 %v1453, %v1450
    %v1490 = vpack.c.b16 %v1454, %v1451
    %v1491 = vpack.c.b16 %v1455, %v1452
    %v1492 = vpack.c.b16 %v1459, %v1456
    %v1493 = vpack.c.b16 %v1460, %v1457
    %v1494 = vpack.c.b16 %v1461, %v1458
    %v1495 = vpack.c.b16 %v1465, %v1462
    %v1496 = vpack.c.b16 %v1466, %v1463
    %v1497 = vpack.c.b16 %v1467, %v1464
    %v1498 = vpack.c.b16 %v1471, %v1468
    %v1499 = vpack.c.b16 %v1472, %v1469
    %v1500 = vpack.c.b16 %v1473, %v1470
    %v1501 = vpack.c.b16 %v1477, %v1474
    %v1502 = vpack.c.b16 %v1478, %v1475
    %v1503 = vpack.c.b16 %v1479, %v1476
    %1528 = vmatpush.bf16.msra.mxu0 %v1501
    %1529 = vmatpush.bf16.msra.mxu0 %v1498
    %1530 = vmatpush.bf16.msra.mxu0 %v1495
    %1531 = vmatpush.bf16.msra.mxu0 %v1492
    %1532 = vmatpush.bf16.msra.mxu0 %v1489
    %1533 = vmatpush.bf16.msra.mxu0 %v1486
    %1534 = vmatpush.bf16.msra.mxu0 %v1483
    %1535 = vmatpush.bf16.msra.mxu0 %v1480
    %1536 = vmatmul.bf16.gmra.mxu0 %v1367
    %v1537 = vpop.f32.mrf.mxu0
    %v1538 = vadd.f32 %v127, %v1537
    %v1539 = vpop.f32.mrf.mxu0
    %1540 = vdwg.mxu0
    %1541 = vmatpush.bf16.msra.mxu0 %v1502
    %1542 = vmatpush.bf16.msra.mxu0 %v1499
    %1543 = vmatpush.bf16.msra.mxu0 %v1496
    %1544 = vmatpush.bf16.msra.mxu0 %v1493
    %1545 = vmatpush.bf16.msra.mxu0 %v1490
    %1546 = vmatpush.bf16.msra.mxu0 %v1487
    %1547 = vmatpush.bf16.msra.mxu0 %v1484
    %1548 = vmatpush.bf16.msra.mxu0 %v1481
    %1549 = vmatmul.bf16.gmra.mxu0 %v1367
    %v1550 = vpop.f32.mrf.mxu0
    %v1551 = vadd.f32 %v128, %v1550
    %v1552 = vpop.f32.mrf.mxu0
    %1553 = vdwg.mxu0
    %1554 = vmatpush.bf16.msra.mxu0 %v1503
    %1555 = vmatpush.bf16.msra.mxu0 %v1500
    %1556 = vmatpush.bf16.msra.mxu0 %v1497
    %1557 = vmatpush.bf16.msra.mxu0 %v1494
    %1558 = vmatpush.bf16.msra.mxu0 %v1491
    %1559 = vmatpush.bf16.msra.mxu0 %v1488
    %1560 = vmatpush.bf16.msra.mxu0 %v1485
    %1561 = vmatpush.bf16.msra.mxu0 %v1482
    %1562 = vmatmul.bf16.gmra.mxu0 %v1367
    %v1563 = vpop.f32.mrf.mxu0
    %v1564 = vadd.f32 %v129, %v1563
    %v1565 = vpop.f32.mrf.mxu0
    %1566 = vdwg.mxu0
    %v1570 = vrot.slane %v1551, 6
    %v1571 = vrot.slane %v1564, 4
    %v1572 = vsel %vm305, %v1538, %v1570
    %v1573 = vsel %vm307, %v1572, %v1571
    %s1575 = scalar_lea.vmem [#allocation2], 36
    %1576 = vst [vmem:[%s1575] sm:$0x3f] %v1573
    %s1577 = scalar_lea.vmem [#allocation4], 7
    %v1578 = vld [vmem:[%s1577] sm:$0x1]
    %v1579 = vld [vmem:[#allocation7] sm:$0xff]
    %v1580 = vld [vmem:[#allocation7 + $0x8] sm:$0xf]
    %v1581 = vld [vmem:[#allocation7 + $0xc] sm:$0xff]
    %v1582 = vld [vmem:[#allocation7 + $0x14] sm:$0xf]
    %v1583 = vld [vmem:[#allocation7 + $0x18] sm:$0xff]
    %v1584 = vld [vmem:[#allocation7 + $0x20] sm:$0xf]
    %v1585 = vld [vmem:[#allocation7 + $0x24] sm:$0xff]
    %v1586 = vld [vmem:[#allocation7 + $0x2c] sm:$0xf]
    %v1587 = vld [vmem:[#allocation7 + $0x30] sm:$0xff]
    %v1588 = vld [vmem:[#allocation7 + $0x38] sm:$0xf]
    %v1589 = vld [vmem:[#allocation7 + $0x3c] sm:$0xff]
    %v1590 = vld [vmem:[#allocation7 + $0x44] sm:$0xf]
    %v1591 = vld [vmem:[#allocation7 + $0x48] sm:$0xff]
    %v1592 = vld [vmem:[#allocation7 + $0x50] sm:$0xf]
    %v1593 = vld [vmem:[#allocation7 + $0x54] sm:$0xff]
    %v1594 = vld [vmem:[#allocation7 + $0x5c] sm:$0xf]
    %v1595 = vld [vmem:[#allocation7 + $0x60] sm:$0xff]
    %v1596 = vld [vmem:[#allocation7 + $0x68] sm:$0xf]
    %v1597 = vld [vmem:[#allocation7 + $0x6c] sm:$0xff]
    %v1598 = vld [vmem:[#allocation7 + $0x74] sm:$0xf]
    %v1599 = vld [vmem:[#allocation7 + $0x78] sm:$0xff]
    %v1600 = vld [vmem:[#allocation7 + $0x80] sm:$0xf]
    %v1601 = vld [vmem:[#allocation7 + $0x84] sm:$0xff]
    %v1602 = vld [vmem:[#allocation7 + $0x8c] sm:$0xf]
    %v1603 = vld [vmem:[#allocation7 + $0x90] sm:$0xff]
    %v1604 = vld [vmem:[#allocation7 + $0x98] sm:$0xf]
    %v1605 = vld [vmem:[#allocation7 + $0x9c] sm:$0xff]
    %v1606 = vld [vmem:[#allocation7 + $0xa4] sm:$0xf]
    %v1607 = vld [vmem:[#allocation7 + $0xa8] sm:$0xff]
    %v1608 = vld [vmem:[#allocation7 + $0xb0] sm:$0xf]
    %v1609 = vld [vmem:[#allocation7 + $0xb4] sm:$0xff]
    %v1610 = vld [vmem:[#allocation7 + $0xbc] sm:$0xf]
    %v1643 = vunpack.c.l.b16 %v1579
    %v1644 = vunpack.c.h.b16 %v1579
    %v1645 = vunpack.c.l.b16 %v1580
    %v1646 = vunpack.c.l.b16 %v1581
    %v1647 = vunpack.c.h.b16 %v1581
    %v1648 = vunpack.c.l.b16 %v1582
    %v1649 = vunpack.c.l.b16 %v1583
    %v1650 = vunpack.c.h.b16 %v1583
    %v1651 = vunpack.c.l.b16 %v1584
    %v1652 = vunpack.c.l.b16 %v1585
    %v1653 = vunpack.c.h.b16 %v1585
    %v1654 = vunpack.c.l.b16 %v1586
    %v1655 = vunpack.c.l.b16 %v1587
    %v1656 = vunpack.c.h.b16 %v1587
    %v1657 = vunpack.c.l.b16 %v1588
    %v1658 = vunpack.c.l.b16 %v1589
    %v1659 = vunpack.c.h.b16 %v1589
    %v1660 = vunpack.c.l.b16 %v1590
    %v1661 = vunpack.c.l.b16 %v1591
    %v1662 = vunpack.c.h.b16 %v1591
    %v1663 = vunpack.c.l.b16 %v1592
    %v1664 = vunpack.c.l.b16 %v1593
    %v1665 = vunpack.c.h.b16 %v1593
    %v1666 = vunpack.c.l.b16 %v1594
    %v1667 = vunpack.c.l.b16 %v1595
    %v1668 = vunpack.c.h.b16 %v1595
    %v1669 = vunpack.c.l.b16 %v1596
    %v1670 = vunpack.c.l.b16 %v1597
    %v1671 = vunpack.c.h.b16 %v1597
    %v1672 = vunpack.c.l.b16 %v1598
    %v1673 = vunpack.c.l.b16 %v1599
    %v1674 = vunpack.c.h.b16 %v1599
    %v1675 = vunpack.c.l.b16 %v1600
    %v1676 = vunpack.c.l.b16 %v1601
    %v1677 = vunpack.c.h.b16 %v1601
    %v1678 = vunpack.c.l.b16 %v1602
    %v1679 = vunpack.c.l.b16 %v1603
    %v1680 = vunpack.c.h.b16 %v1603
    %v1681 = vunpack.c.l.b16 %v1604
    %v1682 = vunpack.c.l.b16 %v1605
    %v1683 = vunpack.c.h.b16 %v1605
    %v1684 = vunpack.c.l.b16 %v1606
    %v1685 = vunpack.c.l.b16 %v1607
    %v1686 = vunpack.c.h.b16 %v1607
    %v1687 = vunpack.c.l.b16 %v1608
    %v1688 = vunpack.c.l.b16 %v1609
    %v1689 = vunpack.c.h.b16 %v1609
    %v1690 = vunpack.c.l.b16 %v1610
    %v1691 = vpack.c.b16 %v1646, %v1643
    %v1692 = vpack.c.b16 %v1647, %v1644
    %v1693 = vpack.c.b16 %v1648, %v1645
    %v1694 = vpack.c.b16 %v1652, %v1649
    %v1695 = vpack.c.b16 %v1653, %v1650
    %v1696 = vpack.c.b16 %v1654, %v1651
    %v1697 = vpack.c.b16 %v1658, %v1655
    %v1698 = vpack.c.b16 %v1659, %v1656
    %v1699 = vpack.c.b16 %v1660, %v1657
    %v1700 = vpack.c.b16 %v1664, %v1661
    %v1701 = vpack.c.b16 %v1665, %v1662
    %v1702 = vpack.c.b16 %v1666, %v1663
    %v1703 = vpack.c.b16 %v1670, %v1667
    %v1704 = vpack.c.b16 %v1671, %v1668
    %v1705 = vpack.c.b16 %v1672, %v1669
    %v1706 = vpack.c.b16 %v1676, %v1673
    %v1707 = vpack.c.b16 %v1677, %v1674
    %v1708 = vpack.c.b16 %v1678, %v1675
    %v1709 = vpack.c.b16 %v1682, %v1679
    %v1710 = vpack.c.b16 %v1683, %v1680
    %v1711 = vpack.c.b16 %v1684, %v1681
    %v1712 = vpack.c.b16 %v1688, %v1685
    %v1713 = vpack.c.b16 %v1689, %v1686
    %v1714 = vpack.c.b16 %v1690, %v1687
    %1739 = vmatpush.bf16.msra.mxu0 %v1712
    %1740 = vmatpush.bf16.msra.mxu0 %v1709
    %1741 = vmatpush.bf16.msra.mxu0 %v1706
    %1742 = vmatpush.bf16.msra.mxu0 %v1703
    %1743 = vmatpush.bf16.msra.mxu0 %v1700
    %1744 = vmatpush.bf16.msra.mxu0 %v1697
    %1745 = vmatpush.bf16.msra.mxu0 %v1694
    %1746 = vmatpush.bf16.msra.mxu0 %v1691
    %1747 = vmatmul.bf16.gmra.mxu0 %v1578
    %v1748 = vpop.f32.mrf.mxu0
    %v1749 = vadd.f32 %v127, %v1748
    %v1750 = vpop.f32.mrf.mxu0
    %1751 = vdwg.mxu0
    %1752 = vmatpush.bf16.msra.mxu0 %v1713
    %1753 = vmatpush.bf16.msra.mxu0 %v1710
    %1754 = vmatpush.bf16.msra.mxu0 %v1707
    %1755 = vmatpush.bf16.msra.mxu0 %v1704
    %1756 = vmatpush.bf16.msra.mxu0 %v1701
    %1757 = vmatpush.bf16.msra.mxu0 %v1698
    %1758 = vmatpush.bf16.msra.mxu0 %v1695
    %1759 = vmatpush.bf16.msra.mxu0 %v1692
    %1760 = vmatmul.bf16.gmra.mxu0 %v1578
    %v1761 = vpop.f32.mrf.mxu0
    %v1762 = vadd.f32 %v128, %v1761
    %v1763 = vpop.f32.mrf.mxu0
    %1764 = vdwg.mxu0
    %1765 = vmatpush.bf16.msra.mxu0 %v1714
    %1766 = vmatpush.bf16.msra.mxu0 %v1711
    %1767 = vmatpush.bf16.msra.mxu0 %v1708
    %1768 = vmatpush.bf16.msra.mxu0 %v1705
    %1769 = vmatpush.bf16.msra.mxu0 %v1702
    %1770 = vmatpush.bf16.msra.mxu0 %v1699
    %1771 = vmatpush.bf16.msra.mxu0 %v1696
    %1772 = vmatpush.bf16.msra.mxu0 %v1693
    %1773 = vmatmul.bf16.gmra.mxu0 %v1578
    %v1774 = vpop.f32.mrf.mxu0
    %v1775 = vadd.f32 %v129, %v1774
    %v1776 = vpop.f32.mrf.mxu0
    %1777 = vdwg.mxu0
    %v1781 = vrot.slane %v1762, 6
    %v1782 = vrot.slane %v1775, 4
    %v1783 = vsel %vm305, %v1749, %v1781
    %v1784 = vsel %vm307, %v1783, %v1782
    %s1786 = scalar_lea.vmem [#allocation2], 42
    %1787 = vst [vmem:[%s1786] sm:$0x3f] %v1784
    %v1788 = vld [vmem:[#allocation3] sm:$0x3]
    %v1789 = vpack.c.bf16 %v1788, %v1788
    %v1790 = vld [vmem:[#allocation10] sm:$0xff]
    %v1791 = vld [vmem:[#allocation10 + $0x8] sm:$0xf]
    %v1792 = vld [vmem:[#allocation10 + $0xc] sm:$0xff]
    %v1793 = vld [vmem:[#allocation10 + $0x14] sm:$0xf]
    %v1794 = vld [vmem:[#allocation10 + $0x18] sm:$0xff]
    %v1795 = vld [vmem:[#allocation10 + $0x20] sm:$0xf]
    %v1796 = vld [vmem:[#allocation10 + $0x24] sm:$0xff]
    %v1797 = vld [vmem:[#allocation10 + $0x2c] sm:$0xf]
    %v1798 = vld [vmem:[#allocation10 + $0x30] sm:$0xff]
    %v1799 = vld [vmem:[#allocation10 + $0x38] sm:$0xf]
    %v1800 = vld [vmem:[#allocation10 + $0x3c] sm:$0xff]
    %v1801 = vld [vmem:[#allocation10 + $0x44] sm:$0xf]
    %v1802 = vld [vmem:[#allocation10 + $0x48] sm:$0xff]
    %v1803 = vld [vmem:[#allocation10 + $0x50] sm:$0xf]
    %v1804 = vld [vmem:[#allocation10 + $0x54] sm:$0xff]
    %v1805 = vld [vmem:[#allocation10 + $0x5c] sm:$0xf]
    %v1806 = vld [vmem:[#allocation10 + $0x60] sm:$0xff]
    %v1807 = vld [vmem:[#allocation10 + $0x68] sm:$0xf]
    %v1808 = vld [vmem:[#allocation10 + $0x6c] sm:$0xff]
    %v1809 = vld [vmem:[#allocation10 + $0x74] sm:$0xf]
    %v1810 = vld [vmem:[#allocation10 + $0x78] sm:$0xff]
    %v1811 = vld [vmem:[#allocation10 + $0x80] sm:$0xf]
    %v1812 = vld [vmem:[#allocation10 + $0x84] sm:$0xff]
    %v1813 = vld [vmem:[#allocation10 + $0x8c] sm:$0xf]
    %v1814 = vld [vmem:[#allocation10 + $0x90] sm:$0xff]
    %v1815 = vld [vmem:[#allocation10 + $0x98] sm:$0xf]
    %v1816 = vld [vmem:[#allocation10 + $0x9c] sm:$0xff]
    %v1817 = vld [vmem:[#allocation10 + $0xa4] sm:$0xf]
    %v1818 = vld [vmem:[#allocation10 + $0xa8] sm:$0xff]
    %v1819 = vld [vmem:[#allocation10 + $0xb0] sm:$0xf]
    %v1820 = vld [vmem:[#allocation10 + $0xb4] sm:$0xff]
    %v1821 = vld [vmem:[#allocation10 + $0xbc] sm:$0xf]
    %v1854 = vunpack.c.l.b16 %v1790
    %v1855 = vunpack.c.h.b16 %v1790
    %v1856 = vunpack.c.l.b16 %v1791
    %v1857 = vunpack.c.l.b16 %v1792
    %v1858 = vunpack.c.h.b16 %v1792
    %v1859 = vunpack.c.l.b16 %v1793
    %v1860 = vunpack.c.l.b16 %v1794
    %v1861 = vunpack.c.h.b16 %v1794
    %v1862 = vunpack.c.l.b16 %v1795
    %v1863 = vunpack.c.l.b16 %v1796
    %v1864 = vunpack.c.h.b16 %v1796
    %v1865 = vunpack.c.l.b16 %v1797
    %v1866 = vunpack.c.l.b16 %v1798
    %v1867 = vunpack.c.h.b16 %v1798
    %v1868 = vunpack.c.l.b16 %v1799
    %v1869 = vunpack.c.l.b16 %v1800
    %v1870 = vunpack.c.h.b16 %v1800
    %v1871 = vunpack.c.l.b16 %v1801
    %v1872 = vunpack.c.l.b16 %v1802
    %v1873 = vunpack.c.h.b16 %v1802
    %v1874 = vunpack.c.l.b16 %v1803
    %v1875 = vunpack.c.l.b16 %v1804
    %v1876 = vunpack.c.h.b16 %v1804
    %v1877 = vunpack.c.l.b16 %v1805
    %v1878 = vunpack.c.l.b16 %v1806
    %v1879 = vunpack.c.h.b16 %v1806
    %v1880 = vunpack.c.l.b16 %v1807
    %v1881 = vunpack.c.l.b16 %v1808
    %v1882 = vunpack.c.h.b16 %v1808
    %v1883 = vunpack.c.l.b16 %v1809
    %v1884 = vunpack.c.l.b16 %v1810
    %v1885 = vunpack.c.h.b16 %v1810
    %v1886 = vunpack.c.l.b16 %v1811
    %v1887 = vunpack.c.l.b16 %v1812
    %v1888 = vunpack.c.h.b16 %v1812
    %v1889 = vunpack.c.l.b16 %v1813
    %v1890 = vunpack.c.l.b16 %v1814
    %v1891 = vunpack.c.h.b16 %v1814
    %v1892 = vunpack.c.l.b16 %v1815
    %v1893 = vunpack.c.l.b16 %v1816
    %v1894 = vunpack.c.h.b16 %v1816
    %v1895 = vunpack.c.l.b16 %v1817
    %v1896 = vunpack.c.l.b16 %v1818
    %v1897 = vunpack.c.h.b16 %v1818
    %v1898 = vunpack.c.l.b16 %v1819
    %v1899 = vunpack.c.l.b16 %v1820
    %v1900 = vunpack.c.h.b16 %v1820
    %v1901 = vunpack.c.l.b16 %v1821
    %v1902 = vpack.c.b16 %v1857, %v1854
    %v1903 = vpack.c.b16 %v1858, %v1855
    %v1904 = vpack.c.b16 %v1859, %v1856
    %v1905 = vpack.c.b16 %v1863, %v1860
    %v1906 = vpack.c.b16 %v1864, %v1861
    %v1907 = vpack.c.b16 %v1865, %v1862
    %v1908 = vpack.c.b16 %v1869, %v1866
    %v1909 = vpack.c.b16 %v1870, %v1867
    %v1910 = vpack.c.b16 %v1871, %v1868
    %v1911 = vpack.c.b16 %v1875, %v1872
    %v1912 = vpack.c.b16 %v1876, %v1873
    %v1913 = vpack.c.b16 %v1877, %v1874
    %v1914 = vpack.c.b16 %v1881, %v1878
    %v1915 = vpack.c.b16 %v1882, %v1879
    %v1916 = vpack.c.b16 %v1883, %v1880
    %v1917 = vpack.c.b16 %v1887, %v1884
    %v1918 = vpack.c.b16 %v1888, %v1885
    %v1919 = vpack.c.b16 %v1889, %v1886
    %v1920 = vpack.c.b16 %v1893, %v1890
    %v1921 = vpack.c.b16 %v1894, %v1891
    %v1922 = vpack.c.b16 %v1895, %v1892
    %v1923 = vpack.c.b16 %v1899, %v1896
    %v1924 = vpack.c.b16 %v1900, %v1897
    %v1925 = vpack.c.b16 %v1901, %v1898
    %1950 = vmatpush.bf16.msra.mxu0 %v1923
    %1951 = vmatpush.bf16.msra.mxu0 %v1920
    %1952 = vmatpush.bf16.msra.mxu0 %v1917
    %1953 = vmatpush.bf16.msra.mxu0 %v1914
    %1954 = vmatpush.bf16.msra.mxu0 %v1911
    %1955 = vmatpush.bf16.msra.mxu0 %v1908
    %1956 = vmatpush.bf16.msra.mxu0 %v1905
    %1957 = vmatpush.bf16.msra.mxu0 %v1902
    %1958 = vmatmul.bf16.gmra.mxu0 %v1789
    %v1959 = vpop.f32.mrf.mxu0
    %v1960 = vadd.f32 0.0, %v1959
    %v1961 = vpop.f32.mrf.mxu0
    %1962 = vdwg.mxu0
    %1963 = vmatpush.bf16.msra.mxu0 %v1924
    %1964 = vmatpush.bf16.msra.mxu0 %v1921
    %1965 = vmatpush.bf16.msra.mxu0 %v1918
    %1966 = vmatpush.bf16.msra.mxu0 %v1915
    %1967 = vmatpush.bf16.msra.mxu0 %v1912
    %1968 = vmatpush.bf16.msra.mxu0 %v1909
    %1969 = vmatpush.bf16.msra.mxu0 %v1906
    %1970 = vmatpush.bf16.msra.mxu0 %v1903
    %1971 = vmatmul.bf16.gmra.mxu0 %v1789
    %v1972 = vpop.f32.mrf.mxu0
    %v1973 = vadd.f32 0.0, %v1972
    %v1974 = vpop.f32.mrf.mxu0
    %1975 = vdwg.mxu0
    %1976 = vmatpush.bf16.msra.mxu0 %v1925
    %1977 = vmatpush.bf16.msra.mxu0 %v1922
    %1978 = vmatpush.bf16.msra.mxu0 %v1919
    %1979 = vmatpush.bf16.msra.mxu0 %v1916
    %1980 = vmatpush.bf16.msra.mxu0 %v1913
    %1981 = vmatpush.bf16.msra.mxu0 %v1910
    %1982 = vmatpush.bf16.msra.mxu0 %v1907
    %1983 = vmatpush.bf16.msra.mxu0 %v1904
    %1984 = vmatmul.bf16.gmra.mxu0 %v1789
    %v1985 = vpop.f32.mrf.mxu0
    %v1986 = vadd.f32 0.0, %v1985
    %v1987 = vpop.f32.mrf.mxu0
    %1988 = vdwg.mxu0
    %v1989 = vld [vmem:[#allocation2] sm:$0x3f]
    %v1990 = vadd.f32 %v1989, %v1960
    %v1991 = vxor.u32 %v1990, 2147483648
    %v1992 = vmul.f32 %v1991, 1.442695
    %v1993 = vpow.pop %v1992
    %v1994 = vadd.f32 %v1993, 1.0
    %v1995 = vrcp.pop %v1994
    %v1996 = vmul.f32 %v1994, %v1995
    %v1997 = vsub.f32 1.0, %v1996
    %v1998 = vmul.f32 %v1995, %v1997
    %v1999 = vadd.f32 %v1995, %v1998
    %vm2000 = vweird.f32 %v1994
    %vm2001 = vweird.f32 %v1995
    %vm2002 = vmor %vm2000, %vm2001
    %v2003 = vsel %vm2002, %v1995, %v1999
    %v2004 = vand.u32 2147483647, %v1994
    %vm2005 = vcmp.eq.f32.partialorder %v2004, 8.507059e+37
    %v2006 = vand.u32 %v1994, 2147483648
    %v2007 = vor.u32 1.1754944e-38, %v2006
    %v2008 = vsel %vm2005, %v2007, %v2003
    %v2009 = vmul.f32 1.0, %v2008
    %v2011 = vrot.slane %v1989, 2
    %v2013 = vadd.f32 %v2011, %v1973
    %v2014 = vxor.u32 %v2013, 2147483648
    %v2015 = vmul.f32 %v2014, 1.442695
    %v2016 = vpow.pop %v2015
    %v2017 = vadd.f32 %v2016, 1.0
    %v2018 = vrcp.pop %v2017
    %v2019 = vmul.f32 %v2017, %v2018
    %v2020 = vsub.f32 1.0, %v2019
    %v2021 = vmul.f32 %v2018, %v2020
    %v2022 = vadd.f32 %v2018, %v2021
    %vm2023 = vweird.f32 %v2017
    %vm2024 = vweird.f32 %v2018
    %vm2025 = vmor %vm2023, %vm2024
    %v2026 = vsel %vm2025, %v2018, %v2022
    %v2027 = vand.u32 2147483647, %v2017
    %vm2028 = vcmp.eq.f32.partialorder %v2027, 8.507059e+37
    %v2029 = vand.u32 %v2017, 2147483648
    %v2030 = vor.u32 1.1754944e-38, %v2029
    %v2031 = vsel %vm2028, %v2030, %v2026
    %v2032 = vmul.f32 1.0, %v2031
    %v2034 = vperm.slane %v92, 0
    %v2036 = vadd.f32 %v1986, %v2034
    %v2037 = vmul.f32 %v2009, %v2036
    %v2038 = vrot.slane %v1989, 4
    %v2040 = vadd.f32 %v2038, %v2037
    %v2041 = vtanh.pop %v2040
    %v2042 = vsub.f32 1.0, %v2032
    %v2043 = vmul.f32 %v2042, %v2041
    %v2044 = vmul.f32 %v2032, %v1788
    %v2045 = vadd.f32 %v2043, %v2044
    %v2046 = vpack.c.bf16 %v2045, %v2045
    %2047 = vst [vmem:[#allocation12] sm:$0x1] %v2046
    %v2048 = vld [vmem:[#allocation10] sm:$0xff]
    %v2049 = vld [vmem:[#allocation10 + $0x8] sm:$0xf]
    %v2050 = vld [vmem:[#allocation10 + $0xc] sm:$0xff]
    %v2051 = vld [vmem:[#allocation10 + $0x14] sm:$0xf]
    %v2052 = vld [vmem:[#allocation10 + $0x18] sm:$0xff]
    %v2053 = vld [vmem:[#allocation10 + $0x20] sm:$0xf]
    %v2054 = vld [vmem:[#allocation10 + $0x24] sm:$0xff]
    %v2055 = vld [vmem:[#allocation10 + $0x2c] sm:$0xf]
    %v2056 = vld [vmem:[#allocation10 + $0x30] sm:$0xff]
    %v2057 = vld [vmem:[#allocation10 + $0x38] sm:$0xf]
    %v2058 = vld [vmem:[#allocation10 + $0x3c] sm:$0xff]
    %v2059 = vld [vmem:[#allocation10 + $0x44] sm:$0xf]
    %v2060 = vld [vmem:[#allocation10 + $0x48] sm:$0xff]
    %v2061 = vld [vmem:[#allocation10 + $0x50] sm:$0xf]
    %v2062 = vld [vmem:[#allocation10 + $0x54] sm:$0xff]
    %v2063 = vld [vmem:[#allocation10 + $0x5c] sm:$0xf]
    %v2064 = vld [vmem:[#allocation10 + $0x60] sm:$0xff]
    %v2065 = vld [vmem:[#allocation10 + $0x68] sm:$0xf]
    %v2066 = vld [vmem:[#allocation10 + $0x6c] sm:$0xff]
    %v2067 = vld [vmem:[#allocation10 + $0x74] sm:$0xf]
    %v2068 = vld [vmem:[#allocation10 + $0x78] sm:$0xff]
    %v2069 = vld [vmem:[#allocation10 + $0x80] sm:$0xf]
    %v2070 = vld [vmem:[#allocation10 + $0x84] sm:$0xff]
    %v2071 = vld [vmem:[#allocation10 + $0x8c] sm:$0xf]
    %v2072 = vld [vmem:[#allocation10 + $0x90] sm:$0xff]
    %v2073 = vld [vmem:[#allocation10 + $0x98] sm:$0xf]
    %v2074 = vld [vmem:[#allocation10 + $0x9c] sm:$0xff]
    %v2075 = vld [vmem:[#allocation10 + $0xa4] sm:$0xf]
    %v2076 = vld [vmem:[#allocation10 + $0xa8] sm:$0xff]
    %v2077 = vld [vmem:[#allocation10 + $0xb0] sm:$0xf]
    %v2078 = vld [vmem:[#allocation10 + $0xb4] sm:$0xff]
    %v2079 = vld [vmem:[#allocation10 + $0xbc] sm:$0xf]
    %v2112 = vunpack.c.l.b16 %v2048
    %v2113 = vunpack.c.h.b16 %v2048
    %v2114 = vunpack.c.l.b16 %v2049
    %v2115 = vunpack.c.l.b16 %v2050
    %v2116 = vunpack.c.h.b16 %v2050
    %v2117 = vunpack.c.l.b16 %v2051
    %v2118 = vunpack.c.l.b16 %v2052
    %v2119 = vunpack.c.h.b16 %v2052
    %v2120 = vunpack.c.l.b16 %v2053
    %v2121 = vunpack.c.l.b16 %v2054
    %v2122 = vunpack.c.h.b16 %v2054
    %v2123 = vunpack.c.l.b16 %v2055
    %v2124 = vunpack.c.l.b16 %v2056
    %v2125 = vunpack.c.h.b16 %v2056
    %v2126 = vunpack.c.l.b16 %v2057
    %v2127 = vunpack.c.l.b16 %v2058
    %v2128 = vunpack.c.h.b16 %v2058
    %v2129 = vunpack.c.l.b16 %v2059
    %v2130 = vunpack.c.l.b16 %v2060
    %v2131 = vunpack.c.h.b16 %v2060
    %v2132 = vunpack.c.l.b16 %v2061
    %v2133 = vunpack.c.l.b16 %v2062
    %v2134 = vunpack.c.h.b16 %v2062
    %v2135 = vunpack.c.l.b16 %v2063
    %v2136 = vunpack.c.l.b16 %v2064
    %v2137 = vunpack.c.h.b16 %v2064
    %v2138 = vunpack.c.l.b16 %v2065
    %v2139 = vunpack.c.l.b16 %v2066
    %v2140 = vunpack.c.h.b16 %v2066
    %v2141 = vunpack.c.l.b16 %v2067
    %v2142 = vunpack.c.l.b16 %v2068
    %v2143 = vunpack.c.h.b16 %v2068
    %v2144 = vunpack.c.l.b16 %v2069
    %v2145 = vunpack.c.l.b16 %v2070
    %v2146 = vunpack.c.h.b16 %v2070
    %v2147 = vunpack.c.l.b16 %v2071
    %v2148 = vunpack.c.l.b16 %v2072
    %v2149 = vunpack.c.h.b16 %v2072
    %v2150 = vunpack.c.l.b16 %v2073
    %v2151 = vunpack.c.l.b16 %v2074
    %v2152 = vunpack.c.h.b16 %v2074
    %v2153 = vunpack.c.l.b16 %v2075
    %v2154 = vunpack.c.l.b16 %v2076
    %v2155 = vunpack.c.h.b16 %v2076
    %v2156 = vunpack.c.l.b16 %v2077
    %v2157 = vunpack.c.l.b16 %v2078
    %v2158 = vunpack.c.h.b16 %v2078
    %v2159 = vunpack.c.l.b16 %v2079
    %v2160 = vpack.c.b16 %v2115, %v2112
    %v2161 = vpack.c.b16 %v2116, %v2113
    %v2162 = vpack.c.b16 %v2117, %v2114
    %v2163 = vpack.c.b16 %v2121, %v2118
    %v2164 = vpack.c.b16 %v2122, %v2119
    %v2165 = vpack.c.b16 %v2123, %v2120
    %v2166 = vpack.c.b16 %v2127, %v2124
    %v2167 = vpack.c.b16 %v2128, %v2125
    %v2168 = vpack.c.b16 %v2129, %v2126
    %v2169 = vpack.c.b16 %v2133, %v2130
    %v2170 = vpack.c.b16 %v2134, %v2131
    %v2171 = vpack.c.b16 %v2135, %v2132
    %v2172 = vpack.c.b16 %v2139, %v2136
    %v2173 = vpack.c.b16 %v2140, %v2137
    %v2174 = vpack.c.b16 %v2141, %v2138
    %v2175 = vpack.c.b16 %v2145, %v2142
    %v2176 = vpack.c.b16 %v2146, %v2143
    %v2177 = vpack.c.b16 %v2147, %v2144
    %v2178 = vpack.c.b16 %v2151, %v2148
    %v2179 = vpack.c.b16 %v2152, %v2149
    %v2180 = vpack.c.b16 %v2153, %v2150
    %v2181 = vpack.c.b16 %v2157, %v2154
    %v2182 = vpack.c.b16 %v2158, %v2155
    %v2183 = vpack.c.b16 %v2159, %v2156
    %2208 = vmatpush.bf16.msra.mxu0 %v2181
    %2209 = vmatpush.bf16.msra.mxu0 %v2178
    %2210 = vmatpush.bf16.msra.mxu0 %v2175
    %2211 = vmatpush.bf16.msra.mxu0 %v2172
    %2212 = vmatpush.bf16.msra.mxu0 %v2169
    %2213 = vmatpush.bf16.msra.mxu0 %v2166
    %2214 = vmatpush.bf16.msra.mxu0 %v2163
    %2215 = vmatpush.bf16.msra.mxu0 %v2160
    %2216 = vmatmul.bf16.gmra.mxu0 %v2046
    %v2217 = vpop.f32.mrf.mxu0
    %v2218 = vadd.f32 0.0, %v2217
    %v2219 = vpop.f32.mrf.mxu0
    %2220 = vdwg.mxu0
    %2221 = vmatpush.bf16.msra.mxu0 %v2182
    %2222 = vmatpush.bf16.msra.mxu0 %v2179
    %2223 = vmatpush.bf16.msra.mxu0 %v2176
    %2224 = vmatpush.bf16.msra.mxu0 %v2173
    %2225 = vmatpush.bf16.msra.mxu0 %v2170
    %2226 = vmatpush.bf16.msra.mxu0 %v2167
    %2227 = vmatpush.bf16.msra.mxu0 %v2164
    %2228 = vmatpush.bf16.msra.mxu0 %v2161
    %2229 = vmatmul.bf16.gmra.mxu0 %v2046
    %v2230 = vpop.f32.mrf.mxu0
    %v2231 = vadd.f32 0.0, %v2230
    %v2232 = vpop.f32.mrf.mxu0
    %2233 = vdwg.mxu0
    %2234 = vmatpush.bf16.msra.mxu0 %v2183
    %2235 = vmatpush.bf16.msra.mxu0 %v2180
    %2236 = vmatpush.bf16.msra.mxu0 %v2177
    %2237 = vmatpush.bf16.msra.mxu0 %v2174
    %2238 = vmatpush.bf16.msra.mxu0 %v2171
    %2239 = vmatpush.bf16.msra.mxu0 %v2168
    %2240 = vmatpush.bf16.msra.mxu0 %v2165
    %2241 = vmatpush.bf16.msra.mxu0 %v2162
    %2242 = vmatmul.bf16.gmra.mxu0 %v2046
    %v2243 = vpop.f32.mrf.mxu0
    %v2244 = vadd.f32 0.0, %v2243
    %v2245 = vpop.f32.mrf.mxu0
    %2246 = vdwg.mxu0
    %v2247 = vld [vmem:[%s520] sm:$0x3f]
    %v2248 = vadd.f32 %v2247, %v2218
    %v2249 = vxor.u32 %v2248, 2147483648
    %v2250 = vmul.f32 %v2249, 1.442695
    %v2251 = vpow.pop %v2250
    %v2252 = vadd.f32 %v2251, 1.0
    %v2253 = vrcp.pop %v2252
    %v2254 = vmul.f32 %v2252, %v2253
    %v2255 = vsub.f32 1.0, %v2254
    %v2256 = vmul.f32 %v2253, %v2255
    %v2257 = vadd.f32 %v2253, %v2256
    %vm2258 = vweird.f32 %v2252
    %vm2259 = vweird.f32 %v2253
    %vm2260 = vmor %vm2258, %vm2259
    %v2261 = vsel %vm2260, %v2253, %v2257
    %v2262 = vand.u32 2147483647, %v2252
    %vm2263 = vcmp.eq.f32.partialorder %v2262, 8.507059e+37
    %v2264 = vand.u32 %v2252, 2147483648
    %v2265 = vor.u32 1.1754944e-38, %v2264
    %v2266 = vsel %vm2263, %v2265, %v2261
    %v2267 = vmul.f32 1.0, %v2266
    %v2269 = vrot.slane %v2247, 2
    %v2271 = vadd.f32 %v2269, %v2231
    %v2272 = vxor.u32 %v2271, 2147483648
    %v2273 = vmul.f32 %v2272, 1.442695
    %v2274 = vpow.pop %v2273
    %v2275 = vadd.f32 %v2274, 1.0
    %v2276 = vrcp.pop %v2275
    %v2277 = vmul.f32 %v2275, %v2276
    %v2278 = vsub.f32 1.0, %v2277
    %v2279 = vmul.f32 %v2276, %v2278
    %v2280 = vadd.f32 %v2276, %v2279
    %vm2281 = vweird.f32 %v2275
    %vm2282 = vweird.f32 %v2276
    %vm2283 = vmor %vm2281, %vm2282
    %v2284 = vsel %vm2283, %v2276, %v2280
    %v2285 = vand.u32 2147483647, %v2275
    %vm2286 = vcmp.eq.f32.partialorder %v2285, 8.507059e+37
    %v2287 = vand.u32 %v2275, 2147483648
    %v2288 = vor.u32 1.1754944e-38, %v2287
    %v2289 = vsel %vm2286, %v2288, %v2284
    %v2290 = vmul.f32 1.0, %v2289
    %v2291 = vadd.f32 %v2244, %v2034
    %v2292 = vmul.f32 %v2267, %v2291
    %v2293 = vrot.slane %v2247, 4
    %v2295 = vadd.f32 %v2293, %v2292
    %v2296 = vtanh.pop %v2295
    %v2297 = vsub.f32 1.0, %v2290
    %v2298 = vmul.f32 %v2297, %v2296
    %v2299 = vmul.f32 %v2290, %v2045
    %v2300 = vadd.f32 %v2298, %v2299
    %v2301 = vpack.c.bf16 %v2300, %v2300
    %s2302 = scalar_lea.vmem [#allocation12], 1
    %2303 = vst [vmem:[%s2302] sm:$0x1] %v2301
    %v2304 = vld [vmem:[#allocation10] sm:$0xff]
    %v2305 = vld [vmem:[#allocation10 + $0x8] sm:$0xf]
    %v2306 = vld [vmem:[#allocation10 + $0xc] sm:$0xff]
    %v2307 = vld [vmem:[#allocation10 + $0x14] sm:$0xf]
    %v2308 = vld [vmem:[#allocation10 + $0x18] sm:$0xff]
    %v2309 = vld [vmem:[#allocation10 + $0x20] sm:$0xf]
    %v2310 = vld [vmem:[#allocation10 + $0x24] sm:$0xff]
    %v2311 = vld [vmem:[#allocation10 + $0x2c] sm:$0xf]
    %v2312 = vld [vmem:[#allocation10 + $0x30] sm:$0xff]
    %v2313 = vld [vmem:[#allocation10 + $0x38] sm:$0xf]
    %v2314 = vld [vmem:[#allocation10 + $0x3c] sm:$0xff]
    %v2315 = vld [vmem:[#allocation10 + $0x44] sm:$0xf]
    %v2316 = vld [vmem:[#allocation10 + $0x48] sm:$0xff]
    %v2317 = vld [vmem:[#allocation10 + $0x50] sm:$0xf]
    %v2318 = vld [vmem:[#allocation10 + $0x54] sm:$0xff]
    %v2319 = vld [vmem:[#allocation10 + $0x5c] sm:$0xf]
    %v2320 = vld [vmem:[#allocation10 + $0x60] sm:$0xff]
    %v2321 = vld [vmem:[#allocation10 + $0x68] sm:$0xf]
    %v2322 = vld [vmem:[#allocation10 + $0x6c] sm:$0xff]
    %v2323 = vld [vmem:[#allocation10 + $0x74] sm:$0xf]
    %v2324 = vld [vmem:[#allocation10 + $0x78] sm:$0xff]
    %v2325 = vld [vmem:[#allocation10 + $0x80] sm:$0xf]
    %v2326 = vld [vmem:[#allocation10 + $0x84] sm:$0xff]
    %v2327 = vld [vmem:[#allocation10 + $0x8c] sm:$0xf]
    %v2328 = vld [vmem:[#allocation10 + $0x90] sm:$0xff]
    %v2329 = vld [vmem:[#allocation10 + $0x98] sm:$0xf]
    %v2330 = vld [vmem:[#allocation10 + $0x9c] sm:$0xff]
    %v2331 = vld [vmem:[#allocation10 + $0xa4] sm:$0xf]
    %v2332 = vld [vmem:[#allocation10 + $0xa8] sm:$0xff]
    %v2333 = vld [vmem:[#allocation10 + $0xb0] sm:$0xf]
    %v2334 = vld [vmem:[#allocation10 + $0xb4] sm:$0xff]
    %v2335 = vld [vmem:[#allocation10 + $0xbc] sm:$0xf]
    %v2368 = vunpack.c.l.b16 %v2304
    %v2369 = vunpack.c.h.b16 %v2304
    %v2370 = vunpack.c.l.b16 %v2305
    %v2371 = vunpack.c.l.b16 %v2306
    %v2372 = vunpack.c.h.b16 %v2306
    %v2373 = vunpack.c.l.b16 %v2307
    %v2374 = vunpack.c.l.b16 %v2308
    %v2375 = vunpack.c.h.b16 %v2308
    %v2376 = vunpack.c.l.b16 %v2309
    %v2377 = vunpack.c.l.b16 %v2310
    %v2378 = vunpack.c.h.b16 %v2310
    %v2379 = vunpack.c.l.b16 %v2311
    %v2380 = vunpack.c.l.b16 %v2312
    %v2381 = vunpack.c.h.b16 %v2312
    %v2382 = vunpack.c.l.b16 %v2313
    %v2383 = vunpack.c.l.b16 %v2314
    %v2384 = vunpack.c.h.b16 %v2314
    %v2385 = vunpack.c.l.b16 %v2315
    %v2386 = vunpack.c.l.b16 %v2316
    %v2387 = vunpack.c.h.b16 %v2316
    %v2388 = vunpack.c.l.b16 %v2317
    %v2389 = vunpack.c.l.b16 %v2318
    %v2390 = vunpack.c.h.b16 %v2318
    %v2391 = vunpack.c.l.b16 %v2319
    %v2392 = vunpack.c.l.b16 %v2320
    %v2393 = vunpack.c.h.b16 %v2320
    %v2394 = vunpack.c.l.b16 %v2321
    %v2395 = vunpack.c.l.b16 %v2322
    %v2396 = vunpack.c.h.b16 %v2322
    %v2397 = vunpack.c.l.b16 %v2323
    %v2398 = vunpack.c.l.b16 %v2324
    %v2399 = vunpack.c.h.b16 %v2324
    %v2400 = vunpack.c.l.b16 %v2325
    %v2401 = vunpack.c.l.b16 %v2326
    %v2402 = vunpack.c.h.b16 %v2326
    %v2403 = vunpack.c.l.b16 %v2327
    %v2404 = vunpack.c.l.b16 %v2328
    %v2405 = vunpack.c.h.b16 %v2328
    %v2406 = vunpack.c.l.b16 %v2329
    %v2407 = vunpack.c.l.b16 %v2330
    %v2408 = vunpack.c.h.b16 %v2330
    %v2409 = vunpack.c.l.b16 %v2331
    %v2410 = vunpack.c.l.b16 %v2332
    %v2411 = vunpack.c.h.b16 %v2332
    %v2412 = vunpack.c.l.b16 %v2333
    %v2413 = vunpack.c.l.b16 %v2334
    %v2414 = vunpack.c.h.b16 %v2334
    %v2415 = vunpack.c.l.b16 %v2335
    %v2416 = vpack.c.b16 %v2371, %v2368
    %v2417 = vpack.c.b16 %v2372, %v2369
    %v2418 = vpack.c.b16 %v2373, %v2370
    %v2419 = vpack.c.b16 %v2377, %v2374
    %v2420 = vpack.c.b16 %v2378, %v2375
    %v2421 = vpack.c.b16 %v2379, %v2376
    %v2422 = vpack.c.b16 %v2383, %v2380
    %v2423 = vpack.c.b16 %v2384, %v2381
    %v2424 = vpack.c.b16 %v2385, %v2382
    %v2425 = vpack.c.b16 %v2389, %v2386
    %v2426 = vpack.c.b16 %v2390, %v2387
    %v2427 = vpack.c.b16 %v2391, %v2388
    %v2428 = vpack.c.b16 %v2395, %v2392
    %v2429 = vpack.c.b16 %v2396, %v2393
    %v2430 = vpack.c.b16 %v2397, %v2394
    %v2431 = vpack.c.b16 %v2401, %v2398
    %v2432 = vpack.c.b16 %v2402, %v2399
    %v2433 = vpack.c.b16 %v2403, %v2400
    %v2434 = vpack.c.b16 %v2407, %v2404
    %v2435 = vpack.c.b16 %v2408, %v2405
    %v2436 = vpack.c.b16 %v2409, %v2406
    %v2437 = vpack.c.b16 %v2413, %v2410
    %v2438 = vpack.c.b16 %v2414, %v2411
    %v2439 = vpack.c.b16 %v2415, %v2412
    %2464 = vmatpush.bf16.msra.mxu0 %v2437
    %2465 = vmatpush.bf16.msra.mxu0 %v2434
    %2466 = vmatpush.bf16.msra.mxu0 %v2431
    %2467 = vmatpush.bf16.msra.mxu0 %v2428
    %2468 = vmatpush.bf16.msra.mxu0 %v2425
    %2469 = vmatpush.bf16.msra.mxu0 %v2422
    %2470 = vmatpush.bf16.msra.mxu0 %v2419
    %2471 = vmatpush.bf16.msra.mxu0 %v2416
    %2472 = vmatmul.bf16.gmra.mxu0 %v2301
    %v2473 = vpop.f32.mrf.mxu0
    %v2474 = vadd.f32 0.0, %v2473
    %v2475 = vpop.f32.mrf.mxu0
    %2476 = vdwg.mxu0
    %2477 = vmatpush.bf16.msra.mxu0 %v2438
    %2478 = vmatpush.bf16.msra.mxu0 %v2435
    %2479 = vmatpush.bf16.msra.mxu0 %v2432
    %2480 = vmatpush.bf16.msra.mxu0 %v2429
    %2481 = vmatpush.bf16.msra.mxu0 %v2426
    %2482 = vmatpush.bf16.msra.mxu0 %v2423
    %2483 = vmatpush.bf16.msra.mxu0 %v2420
    %2484 = vmatpush.bf16.msra.mxu0 %v2417
    %2485 = vmatmul.bf16.gmra.mxu0 %v2301
    %v2486 = vpop.f32.mrf.mxu0
    %v2487 = vadd.f32 0.0, %v2486
    %v2488 = vpop.f32.mrf.mxu0
    %2489 = vdwg.mxu0
    %2490 = vmatpush.bf16.msra.mxu0 %v2439
    %2491 = vmatpush.bf16.msra.mxu0 %v2436
    %2492 = vmatpush.bf16.msra.mxu0 %v2433
    %2493 = vmatpush.bf16.msra.mxu0 %v2430
    %2494 = vmatpush.bf16.msra.mxu0 %v2427
    %2495 = vmatpush.bf16.msra.mxu0 %v2424
    %2496 = vmatpush.bf16.msra.mxu0 %v2421
    %2497 = vmatpush.bf16.msra.mxu0 %v2418
    %2498 = vmatmul.bf16.gmra.mxu0 %v2301
    %v2499 = vpop.f32.mrf.mxu0
    %v2500 = vadd.f32 0.0, %v2499
    %v2501 = vpop.f32.mrf.mxu0
    %2502 = vdwg.mxu0
    %v2503 = vld [vmem:[%s731] sm:$0x3f]
    %v2504 = vadd.f32 %v2503, %v2474
    %v2505 = vxor.u32 %v2504, 2147483648
    %v2506 = vmul.f32 %v2505, 1.442695
    %v2507 = vpow.pop %v2506
    %v2508 = vadd.f32 %v2507, 1.0
    %v2509 = vrcp.pop %v2508
    %v2510 = vmul.f32 %v2508, %v2509
    %v2511 = vsub.f32 1.0, %v2510
    %v2512 = vmul.f32 %v2509, %v2511
    %v2513 = vadd.f32 %v2509, %v2512
    %vm2514 = vweird.f32 %v2508
    %vm2515 = vweird.f32 %v2509
    %vm2516 = vmor %vm2514, %vm2515
    %v2517 = vsel %vm2516, %v2509, %v2513
    %v2518 = vand.u32 2147483647, %v2508
    %vm2519 = vcmp.eq.f32.partialorder %v2518, 8.507059e+37
    %v2520 = vand.u32 %v2508, 2147483648
    %v2521 = vor.u32 1.1754944e-38, %v2520
    %v2522 = vsel %vm2519, %v2521, %v2517
    %v2523 = vmul.f32 1.0, %v2522
    %v2525 = vrot.slane %v2503, 2
    %v2527 = vadd.f32 %v2525, %v2487
    %v2528 = vxor.u32 %v2527, 2147483648
    %v2529 = vmul.f32 %v2528, 1.442695
    %v2530 = vpow.pop %v2529
    %v2531 = vadd.f32 %v2530, 1.0
    %v2532 = vrcp.pop %v2531
    %v2533 = vmul.f32 %v2531, %v2532
    %v2534 = vsub.f32 1.0, %v2533
    %v2535 = vmul.f32 %v2532, %v2534
    %v2536 = vadd.f32 %v2532, %v2535
    %vm2537 = vweird.f32 %v2531
    %vm2538 = vweird.f32 %v2532
    %vm2539 = vmor %vm2537, %vm2538
    %v2540 = vsel %vm2539, %v2532, %v2536
    %v2541 = vand.u32 2147483647, %v2531
    %vm2542 = vcmp.eq.f32.partialorder %v2541, 8.507059e+37
    %v2543 = vand.u32 %v2531, 2147483648
    %v2544 = vor.u32 1.1754944e-38, %v2543
    %v2545 = vsel %vm2542, %v2544, %v2540
    %v2546 = vmul.f32 1.0, %v2545
    %v2547 = vadd.f32 %v2500, %v2034
    %v2548 = vmul.f32 %v2523, %v2547
    %v2549 = vrot.slane %v2503, 4
    %v2551 = vadd.f32 %v2549, %v2548
    %v2552 = vtanh.pop %v2551
    %v2553 = vsub.f32 1.0, %v2546
    %v2554 = vmul.f32 %v2553, %v2552
    %v2555 = vmul.f32 %v2546, %v2300
    %v2556 = vadd.f32 %v2554, %v2555
    %v2557 = vpack.c.bf16 %v2556, %v2556
    %s2558 = scalar_lea.vmem [#allocation12], 2
    %2559 = vst [vmem:[%s2558] sm:$0x1] %v2557
    %v2560 = vld [vmem:[#allocation10] sm:$0xff]
    %v2561 = vld [vmem:[#allocation10 + $0x8] sm:$0xf]
    %v2562 = vld [vmem:[#allocation10 + $0xc] sm:$0xff]
    %v2563 = vld [vmem:[#allocation10 + $0x14] sm:$0xf]
    %v2564 = vld [vmem:[#allocation10 + $0x18] sm:$0xff]
    %v2565 = vld [vmem:[#allocation10 + $0x20] sm:$0xf]
    %v2566 = vld [vmem:[#allocation10 + $0x24] sm:$0xff]
    %v2567 = vld [vmem:[#allocation10 + $0x2c] sm:$0xf]
    %v2568 = vld [vmem:[#allocation10 + $0x30] sm:$0xff]
    %v2569 = vld [vmem:[#allocation10 + $0x38] sm:$0xf]
    %v2570 = vld [vmem:[#allocation10 + $0x3c] sm:$0xff]
    %v2571 = vld [vmem:[#allocation10 + $0x44] sm:$0xf]
    %v2572 = vld [vmem:[#allocation10 + $0x48] sm:$0xff]
    %v2573 = vld [vmem:[#allocation10 + $0x50] sm:$0xf]
    %v2574 = vld [vmem:[#allocation10 + $0x54] sm:$0xff]
    %v2575 = vld [vmem:[#allocation10 + $0x5c] sm:$0xf]
    %v2576 = vld [vmem:[#allocation10 + $0x60] sm:$0xff]
    %v2577 = vld [vmem:[#allocation10 + $0x68] sm:$0xf]
    %v2578 = vld [vmem:[#allocation10 + $0x6c] sm:$0xff]
    %v2579 = vld [vmem:[#allocation10 + $0x74] sm:$0xf]
    %v2580 = vld [vmem:[#allocation10 + $0x78] sm:$0xff]
    %v2581 = vld [vmem:[#allocation10 + $0x80] sm:$0xf]
    %v2582 = vld [vmem:[#allocation10 + $0x84] sm:$0xff]
    %v2583 = vld [vmem:[#allocation10 + $0x8c] sm:$0xf]
    %v2584 = vld [vmem:[#allocation10 + $0x90] sm:$0xff]
    %v2585 = vld [vmem:[#allocation10 + $0x98] sm:$0xf]
    %v2586 = vld [vmem:[#allocation10 + $0x9c] sm:$0xff]
    %v2587 = vld [vmem:[#allocation10 + $0xa4] sm:$0xf]
    %v2588 = vld [vmem:[#allocation10 + $0xa8] sm:$0xff]
    %v2589 = vld [vmem:[#allocation10 + $0xb0] sm:$0xf]
    %v2590 = vld [vmem:[#allocation10 + $0xb4] sm:$0xff]
    %v2591 = vld [vmem:[#allocation10 + $0xbc] sm:$0xf]
    %v2624 = vunpack.c.l.b16 %v2560
    %v2625 = vunpack.c.h.b16 %v2560
    %v2626 = vunpack.c.l.b16 %v2561
    %v2627 = vunpack.c.l.b16 %v2562
    %v2628 = vunpack.c.h.b16 %v2562
    %v2629 = vunpack.c.l.b16 %v2563
    %v2630 = vunpack.c.l.b16 %v2564
    %v2631 = vunpack.c.h.b16 %v2564
    %v2632 = vunpack.c.l.b16 %v2565
    %v2633 = vunpack.c.l.b16 %v2566
    %v2634 = vunpack.c.h.b16 %v2566
    %v2635 = vunpack.c.l.b16 %v2567
    %v2636 = vunpack.c.l.b16 %v2568
    %v2637 = vunpack.c.h.b16 %v2568
    %v2638 = vunpack.c.l.b16 %v2569
    %v2639 = vunpack.c.l.b16 %v2570
    %v2640 = vunpack.c.h.b16 %v2570
    %v2641 = vunpack.c.l.b16 %v2571
    %v2642 = vunpack.c.l.b16 %v2572
    %v2643 = vunpack.c.h.b16 %v2572
    %v2644 = vunpack.c.l.b16 %v2573
    %v2645 = vunpack.c.l.b16 %v2574
    %v2646 = vunpack.c.h.b16 %v2574
    %v2647 = vunpack.c.l.b16 %v2575
    %v2648 = vunpack.c.l.b16 %v2576
    %v2649 = vunpack.c.h.b16 %v2576
    %v2650 = vunpack.c.l.b16 %v2577
    %v2651 = vunpack.c.l.b16 %v2578
    %v2652 = vunpack.c.h.b16 %v2578
    %v2653 = vunpack.c.l.b16 %v2579
    %v2654 = vunpack.c.l.b16 %v2580
    %v2655 = vunpack.c.h.b16 %v2580
    %v2656 = vunpack.c.l.b16 %v2581
    %v2657 = vunpack.c.l.b16 %v2582
    %v2658 = vunpack.c.h.b16 %v2582
    %v2659 = vunpack.c.l.b16 %v2583
    %v2660 = vunpack.c.l.b16 %v2584
    %v2661 = vunpack.c.h.b16 %v2584
    %v2662 = vunpack.c.l.b16 %v2585
    %v2663 = vunpack.c.l.b16 %v2586
    %v2664 = vunpack.c.h.b16 %v2586
    %v2665 = vunpack.c.l.b16 %v2587
    %v2666 = vunpack.c.l.b16 %v2588
    %v2667 = vunpack.c.h.b16 %v2588
    %v2668 = vunpack.c.l.b16 %v2589
    %v2669 = vunpack.c.l.b16 %v2590
    %v2670 = vunpack.c.h.b16 %v2590
    %v2671 = vunpack.c.l.b16 %v2591
    %v2672 = vpack.c.b16 %v2627, %v2624
    %v2673 = vpack.c.b16 %v2628, %v2625
    %v2674 = vpack.c.b16 %v2629, %v2626
    %v2675 = vpack.c.b16 %v2633, %v2630
    %v2676 = vpack.c.b16 %v2634, %v2631
    %v2677 = vpack.c.b16 %v2635, %v2632
    %v2678 = vpack.c.b16 %v2639, %v2636
    %v2679 = vpack.c.b16 %v2640, %v2637
    %v2680 = vpack.c.b16 %v2641, %v2638
    %v2681 = vpack.c.b16 %v2645, %v2642
    %v2682 = vpack.c.b16 %v2646, %v2643
    %v2683 = vpack.c.b16 %v2647, %v2644
    %v2684 = vpack.c.b16 %v2651, %v2648
    %v2685 = vpack.c.b16 %v2652, %v2649
    %v2686 = vpack.c.b16 %v2653, %v2650
    %v2687 = vpack.c.b16 %v2657, %v2654
    %v2688 = vpack.c.b16 %v2658, %v2655
    %v2689 = vpack.c.b16 %v2659, %v2656
    %v2690 = vpack.c.b16 %v2663, %v2660
    %v2691 = vpack.c.b16 %v2664, %v2661
    %v2692 = vpack.c.b16 %v2665, %v2662
    %v2693 = vpack.c.b16 %v2669, %v2666
    %v2694 = vpack.c.b16 %v2670, %v2667
    %v2695 = vpack.c.b16 %v2671, %v2668
    %2720 = vmatpush.bf16.msra.mxu0 %v2693
    %2721 = vmatpush.bf16.msra.mxu0 %v2690
    %2722 = vmatpush.bf16.msra.mxu0 %v2687
    %2723 = vmatpush.bf16.msra.mxu0 %v2684
    %2724 = vmatpush.bf16.msra.mxu0 %v2681
    %2725 = vmatpush.bf16.msra.mxu0 %v2678
    %2726 = vmatpush.bf16.msra.mxu0 %v2675
    %2727 = vmatpush.bf16.msra.mxu0 %v2672
    %2728 = vmatmul.bf16.gmra.mxu0 %v2557
    %v2729 = vpop.f32.mrf.mxu0
    %v2730 = vadd.f32 0.0, %v2729
    %v2731 = vpop.f32.mrf.mxu0
    %2732 = vdwg.mxu0
    %2733 = vmatpush.bf16.msra.mxu0 %v2694
    %2734 = vmatpush.bf16.msra.mxu0 %v2691
    %2735 = vmatpush.bf16.msra.mxu0 %v2688
    %2736 = vmatpush.bf16.msra.mxu0 %v2685
    %2737 = vmatpush.bf16.msra.mxu0 %v2682
    %2738 = vmatpush.bf16.msra.mxu0 %v2679
    %2739 = vmatpush.bf16.msra.mxu0 %v2676
    %2740 = vmatpush.bf16.msra.mxu0 %v2673
    %2741 = vmatmul.bf16.gmra.mxu0 %v2557
    %v2742 = vpop.f32.mrf.mxu0
    %v2743 = vadd.f32 0.0, %v2742
    %v2744 = vpop.f32.mrf.mxu0
    %2745 = vdwg.mxu0
    %2746 = vmatpush.bf16.msra.mxu0 %v2695
    %2747 = vmatpush.bf16.msra.mxu0 %v2692
    %2748 = vmatpush.bf16.msra.mxu0 %v2689
    %2749 = vmatpush.bf16.msra.mxu0 %v2686
    %2750 = vmatpush.bf16.msra.mxu0 %v2683
    %2751 = vmatpush.bf16.msra.mxu0 %v2680
    %2752 = vmatpush.bf16.msra.mxu0 %v2677
    %2753 = vmatpush.bf16.msra.mxu0 %v2674
    %2754 = vmatmul.bf16.gmra.mxu0 %v2557
    %v2755 = vpop.f32.mrf.mxu0
    %v2756 = vadd.f32 0.0, %v2755
    %v2757 = vpop.f32.mrf.mxu0
    %2758 = vdwg.mxu0
    %v2759 = vld [vmem:[%s942] sm:$0x3f]
    %v2760 = vadd.f32 %v2759, %v2730
    %v2761 = vxor.u32 %v2760, 2147483648
    %v2762 = vmul.f32 %v2761, 1.442695
    %v2763 = vpow.pop %v2762
    %v2764 = vadd.f32 %v2763, 1.0
    %v2765 = vrcp.pop %v2764
    %v2766 = vmul.f32 %v2764, %v2765
    %v2767 = vsub.f32 1.0, %v2766
    %v2768 = vmul.f32 %v2765, %v2767
    %v2769 = vadd.f32 %v2765, %v2768
    %vm2770 = vweird.f32 %v2764
    %vm2771 = vweird.f32 %v2765
    %vm2772 = vmor %vm2770, %vm2771
    %v2773 = vsel %vm2772, %v2765, %v2769
    %v2774 = vand.u32 2147483647, %v2764
    %vm2775 = vcmp.eq.f32.partialorder %v2774, 8.507059e+37
    %v2776 = vand.u32 %v2764, 2147483648
    %v2777 = vor.u32 1.1754944e-38, %v2776
    %v2778 = vsel %vm2775, %v2777, %v2773
    %v2779 = vmul.f32 1.0, %v2778
    %v2781 = vrot.slane %v2759, 2
    %v2783 = vadd.f32 %v2781, %v2743
    %v2784 = vxor.u32 %v2783, 2147483648
    %v2785 = vmul.f32 %v2784, 1.442695
    %v2786 = vpow.pop %v2785
    %v2787 = vadd.f32 %v2786, 1.0
    %v2788 = vrcp.pop %v2787
    %v2789 = vmul.f32 %v2787, %v2788
    %v2790 = vsub.f32 1.0, %v2789
    %v2791 = vmul.f32 %v2788, %v2790
    %v2792 = vadd.f32 %v2788, %v2791
    %vm2793 = vweird.f32 %v2787
    %vm2794 = vweird.f32 %v2788
    %vm2795 = vmor %vm2793, %vm2794
    %v2796 = vsel %vm2795, %v2788, %v2792
    %v2797 = vand.u32 2147483647, %v2787
    %vm2798 = vcmp.eq.f32.partialorder %v2797, 8.507059e+37
    %v2799 = vand.u32 %v2787, 2147483648
    %v2800 = vor.u32 1.1754944e-38, %v2799
    %v2801 = vsel %vm2798, %v2800, %v2796
    %v2802 = vmul.f32 1.0, %v2801
    %v2803 = vadd.f32 %v2756, %v2034
    %v2804 = vmul.f32 %v2779, %v2803
    %v2805 = vrot.slane %v2759, 4
    %v2807 = vadd.f32 %v2805, %v2804
    %v2808 = vtanh.pop %v2807
    %v2809 = vsub.f32 1.0, %v2802
    %v2810 = vmul.f32 %v2809, %v2808
    %v2811 = vmul.f32 %v2802, %v2556
    %v2812 = vadd.f32 %v2810, %v2811
    %v2813 = vpack.c.bf16 %v2812, %v2812
    %s2814 = scalar_lea.vmem [#allocation12], 3
    %2815 = vst [vmem:[%s2814] sm:$0x1] %v2813
    %v2816 = vld [vmem:[#allocation10] sm:$0xff]
    %v2817 = vld [vmem:[#allocation10 + $0x8] sm:$0xf]
    %v2818 = vld [vmem:[#allocation10 + $0xc] sm:$0xff]
    %v2819 = vld [vmem:[#allocation10 + $0x14] sm:$0xf]
    %v2820 = vld [vmem:[#allocation10 + $0x18] sm:$0xff]
    %v2821 = vld [vmem:[#allocation10 + $0x20] sm:$0xf]
    %v2822 = vld [vmem:[#allocation10 + $0x24] sm:$0xff]
    %v2823 = vld [vmem:[#allocation10 + $0x2c] sm:$0xf]
    %v2824 = vld [vmem:[#allocation10 + $0x30] sm:$0xff]
    %v2825 = vld [vmem:[#allocation10 + $0x38] sm:$0xf]
    %v2826 = vld [vmem:[#allocation10 + $0x3c] sm:$0xff]
    %v2827 = vld [vmem:[#allocation10 + $0x44] sm:$0xf]
    %v2828 = vld [vmem:[#allocation10 + $0x48] sm:$0xff]
    %v2829 = vld [vmem:[#allocation10 + $0x50] sm:$0xf]
    %v2830 = vld [vmem:[#allocation10 + $0x54] sm:$0xff]
    %v2831 = vld [vmem:[#allocation10 + $0x5c] sm:$0xf]
    %v2832 = vld [vmem:[#allocation10 + $0x60] sm:$0xff]
    %v2833 = vld [vmem:[#allocation10 + $0x68] sm:$0xf]
    %v2834 = vld [vmem:[#allocation10 + $0x6c] sm:$0xff]
    %v2835 = vld [vmem:[#allocation10 + $0x74] sm:$0xf]
    %v2836 = vld [vmem:[#allocation10 + $0x78] sm:$0xff]
    %v2837 = vld [vmem:[#allocation10 + $0x80] sm:$0xf]
    %v2838 = vld [vmem:[#allocation10 + $0x84] sm:$0xff]
    %v2839 = vld [vmem:[#allocation10 + $0x8c] sm:$0xf]
    %v2840 = vld [vmem:[#allocation10 + $0x90] sm:$0xff]
    %v2841 = vld [vmem:[#allocation10 + $0x98] sm:$0xf]
    %v2842 = vld [vmem:[#allocation10 + $0x9c] sm:$0xff]
    %v2843 = vld [vmem:[#allocation10 + $0xa4] sm:$0xf]
    %v2844 = vld [vmem:[#allocation10 + $0xa8] sm:$0xff]
    %v2845 = vld [vmem:[#allocation10 + $0xb0] sm:$0xf]
    %v2846 = vld [vmem:[#allocation10 + $0xb4] sm:$0xff]
    %v2847 = vld [vmem:[#allocation10 + $0xbc] sm:$0xf]
    %v2880 = vunpack.c.l.b16 %v2816
    %v2881 = vunpack.c.h.b16 %v2816
    %v2882 = vunpack.c.l.b16 %v2817
    %v2883 = vunpack.c.l.b16 %v2818
    %v2884 = vunpack.c.h.b16 %v2818
    %v2885 = vunpack.c.l.b16 %v2819
    %v2886 = vunpack.c.l.b16 %v2820
    %v2887 = vunpack.c.h.b16 %v2820
    %v2888 = vunpack.c.l.b16 %v2821
    %v2889 = vunpack.c.l.b16 %v2822
    %v2890 = vunpack.c.h.b16 %v2822
    %v2891 = vunpack.c.l.b16 %v2823
    %v2892 = vunpack.c.l.b16 %v2824
    %v2893 = vunpack.c.h.b16 %v2824
    %v2894 = vunpack.c.l.b16 %v2825
    %v2895 = vunpack.c.l.b16 %v2826
    %v2896 = vunpack.c.h.b16 %v2826
    %v2897 = vunpack.c.l.b16 %v2827
    %v2898 = vunpack.c.l.b16 %v2828
    %v2899 = vunpack.c.h.b16 %v2828
    %v2900 = vunpack.c.l.b16 %v2829
    %v2901 = vunpack.c.l.b16 %v2830
    %v2902 = vunpack.c.h.b16 %v2830
    %v2903 = vunpack.c.l.b16 %v2831
    %v2904 = vunpack.c.l.b16 %v2832
    %v2905 = vunpack.c.h.b16 %v2832
    %v2906 = vunpack.c.l.b16 %v2833
    %v2907 = vunpack.c.l.b16 %v2834
    %v2908 = vunpack.c.h.b16 %v2834
    %v2909 = vunpack.c.l.b16 %v2835
    %v2910 = vunpack.c.l.b16 %v2836
    %v2911 = vunpack.c.h.b16 %v2836
    %v2912 = vunpack.c.l.b16 %v2837
    %v2913 = vunpack.c.l.b16 %v2838
    %v2914 = vunpack.c.h.b16 %v2838
    %v2915 = vunpack.c.l.b16 %v2839
    %v2916 = vunpack.c.l.b16 %v2840
    %v2917 = vunpack.c.h.b16 %v2840
    %v2918 = vunpack.c.l.b16 %v2841
    %v2919 = vunpack.c.l.b16 %v2842
    %v2920 = vunpack.c.h.b16 %v2842
    %v2921 = vunpack.c.l.b16 %v2843
    %v2922 = vunpack.c.l.b16 %v2844
    %v2923 = vunpack.c.h.b16 %v2844
    %v2924 = vunpack.c.l.b16 %v2845
    %v2925 = vunpack.c.l.b16 %v2846
    %v2926 = vunpack.c.h.b16 %v2846
    %v2927 = vunpack.c.l.b16 %v2847
    %v2928 = vpack.c.b16 %v2883, %v2880
    %v2929 = vpack.c.b16 %v2884, %v2881
    %v2930 = vpack.c.b16 %v2885, %v2882
    %v2931 = vpack.c.b16 %v2889, %v2886
    %v2932 = vpack.c.b16 %v2890, %v2887
    %v2933 = vpack.c.b16 %v2891, %v2888
    %v2934 = vpack.c.b16 %v2895, %v2892
    %v2935 = vpack.c.b16 %v2896, %v2893
    %v2936 = vpack.c.b16 %v2897, %v2894
    %v2937 = vpack.c.b16 %v2901, %v2898
    %v2938 = vpack.c.b16 %v2902, %v2899
    %v2939 = vpack.c.b16 %v2903, %v2900
    %v2940 = vpack.c.b16 %v2907, %v2904
    %v2941 = vpack.c.b16 %v2908, %v2905
    %v2942 = vpack.c.b16 %v2909, %v2906
    %v2943 = vpack.c.b16 %v2913, %v2910
    %v2944 = vpack.c.b16 %v2914, %v2911
    %v2945 = vpack.c.b16 %v2915, %v2912
    %v2946 = vpack.c.b16 %v2919, %v2916
    %v2947 = vpack.c.b16 %v2920, %v2917
    %v2948 = vpack.c.b16 %v2921, %v2918
    %v2949 = vpack.c.b16 %v2925, %v2922
    %v2950 = vpack.c.b16 %v2926, %v2923
    %v2951 = vpack.c.b16 %v2927, %v2924
    %2976 = vmatpush.bf16.msra.mxu0 %v2949
    %2977 = vmatpush.bf16.msra.mxu0 %v2946
    %2978 = vmatpush.bf16.msra.mxu0 %v2943
    %2979 = vmatpush.bf16.msra.mxu0 %v2940
    %2980 = vmatpush.bf16.msra.mxu0 %v2937
    %2981 = vmatpush.bf16.msra.mxu0 %v2934
    %2982 = vmatpush.bf16.msra.mxu0 %v2931
    %2983 = vmatpush.bf16.msra.mxu0 %v2928
    %2984 = vmatmul.bf16.gmra.mxu0 %v2813
    %v2985 = vpop.f32.mrf.mxu0
    %v2986 = vadd.f32 0.0, %v2985
    %v2987 = vpop.f32.mrf.mxu0
    %2988 = vdwg.mxu0
    %2989 = vmatpush.bf16.msra.mxu0 %v2950
    %2990 = vmatpush.bf16.msra.mxu0 %v2947
    %2991 = vmatpush.bf16.msra.mxu0 %v2944
    %2992 = vmatpush.bf16.msra.mxu0 %v2941
    %2993 = vmatpush.bf16.msra.mxu0 %v2938
    %2994 = vmatpush.bf16.msra.mxu0 %v2935
    %2995 = vmatpush.bf16.msra.mxu0 %v2932
    %2996 = vmatpush.bf16.msra.mxu0 %v2929
    %2997 = vmatmul.bf16.gmra.mxu0 %v2813
    %v2998 = vpop.f32.mrf.mxu0
    %v2999 = vadd.f32 0.0, %v2998
    %v3000 = vpop.f32.mrf.mxu0
    %3001 = vdwg.mxu0
    %3002 = vmatpush.bf16.msra.mxu0 %v2951
    %3003 = vmatpush.bf16.msra.mxu0 %v2948
    %3004 = vmatpush.bf16.msra.mxu0 %v2945
    %3005 = vmatpush.bf16.msra.mxu0 %v2942
    %3006 = vmatpush.bf16.msra.mxu0 %v2939
    %3007 = vmatpush.bf16.msra.mxu0 %v2936
    %3008 = vmatpush.bf16.msra.mxu0 %v2933
    %3009 = vmatpush.bf16.msra.mxu0 %v2930
    %3010 = vmatmul.bf16.gmra.mxu0 %v2813
    %v3011 = vpop.f32.mrf.mxu0
    %v3012 = vadd.f32 0.0, %v3011
    %v3013 = vpop.f32.mrf.mxu0
    %3014 = vdwg.mxu0
    %v3015 = vld [vmem:[%s1153] sm:$0x3f]
    %v3016 = vadd.f32 %v3015, %v2986
    %v3017 = vxor.u32 %v3016, 2147483648
    %v3018 = vmul.f32 %v3017, 1.442695
    %v3019 = vpow.pop %v3018
    %v3020 = vadd.f32 %v3019, 1.0
    %v3021 = vrcp.pop %v3020
    %v3022 = vmul.f32 %v3020, %v3021
    %v3023 = vsub.f32 1.0, %v3022
    %v3024 = vmul.f32 %v3021, %v3023
    %v3025 = vadd.f32 %v3021, %v3024
    %vm3026 = vweird.f32 %v3020
    %vm3027 = vweird.f32 %v3021
    %vm3028 = vmor %vm3026, %vm3027
    %v3029 = vsel %vm3028, %v3021, %v3025
    %v3030 = vand.u32 2147483647, %v3020
    %vm3031 = vcmp.eq.f32.partialorder %v3030, 8.507059e+37
    %v3032 = vand.u32 %v3020, 2147483648
    %v3033 = vor.u32 1.1754944e-38, %v3032
    %v3034 = vsel %vm3031, %v3033, %v3029
    %v3035 = vmul.f32 1.0, %v3034
    %v3037 = vrot.slane %v3015, 2
    %v3039 = vadd.f32 %v3037, %v2999
    %v3040 = vxor.u32 %v3039, 2147483648
    %v3041 = vmul.f32 %v3040, 1.442695
    %v3042 = vpow.pop %v3041
    %v3043 = vadd.f32 %v3042, 1.0
    %v3044 = vrcp.pop %v3043
    %v3045 = vmul.f32 %v3043, %v3044
    %v3046 = vsub.f32 1.0, %v3045
    %v3047 = vmul.f32 %v3044, %v3046
    %v3048 = vadd.f32 %v3044, %v3047
    %vm3049 = vweird.f32 %v3043
    %vm3050 = vweird.f32 %v3044
    %vm3051 = vmor %vm3049, %vm3050
    %v3052 = vsel %vm3051, %v3044, %v3048
    %v3053 = vand.u32 2147483647, %v3043
    %vm3054 = vcmp.eq.f32.partialorder %v3053, 8.507059e+37
    %v3055 = vand.u32 %v3043, 2147483648
    %v3056 = vor.u32 1.1754944e-38, %v3055
    %v3057 = vsel %vm3054, %v3056, %v3052
    %v3058 = vmul.f32 1.0, %v3057
    %v3059 = vadd.f32 %v3012, %v2034
    %v3060 = vmul.f32 %v3035, %v3059
    %v3061 = vrot.slane %v3015, 4
    %v3063 = vadd.f32 %v3061, %v3060
    %v3064 = vtanh.pop %v3063
    %v3065 = vsub.f32 1.0, %v3058
    %v3066 = vmul.f32 %v3065, %v3064
    %v3067 = vmul.f32 %v3058, %v2812
    %v3068 = vadd.f32 %v3066, %v3067
    %v3069 = vpack.c.bf16 %v3068, %v3068
    %s3070 = scalar_lea.vmem [#allocation12], 4
    %3071 = vst [vmem:[%s3070] sm:$0x1] %v3069
    %v3072 = vld [vmem:[#allocation10] sm:$0xff]
    %v3073 = vld [vmem:[#allocation10 + $0x8] sm:$0xf]
    %v3074 = vld [vmem:[#allocation10 + $0xc] sm:$0xff]
    %v3075 = vld [vmem:[#allocation10 + $0x14] sm:$0xf]
    %v3076 = vld [vmem:[#allocation10 + $0x18] sm:$0xff]
    %v3077 = vld [vmem:[#allocation10 + $0x20] sm:$0xf]
    %v3078 = vld [vmem:[#allocation10 + $0x24] sm:$0xff]
    %v3079 = vld [vmem:[#allocation10 + $0x2c] sm:$0xf]
    %v3080 = vld [vmem:[#allocation10 + $0x30] sm:$0xff]
    %v3081 = vld [vmem:[#allocation10 + $0x38] sm:$0xf]
    %v3082 = vld [vmem:[#allocation10 + $0x3c] sm:$0xff]
    %v3083 = vld [vmem:[#allocation10 + $0x44] sm:$0xf]
    %v3084 = vld [vmem:[#allocation10 + $0x48] sm:$0xff]
    %v3085 = vld [vmem:[#allocation10 + $0x50] sm:$0xf]
    %v3086 = vld [vmem:[#allocation10 + $0x54] sm:$0xff]
    %v3087 = vld [vmem:[#allocation10 + $0x5c] sm:$0xf]
    %v3088 = vld [vmem:[#allocation10 + $0x60] sm:$0xff]
    %v3089 = vld [vmem:[#allocation10 + $0x68] sm:$0xf]
    %v3090 = vld [vmem:[#allocation10 + $0x6c] sm:$0xff]
    %v3091 = vld [vmem:[#allocation10 + $0x74] sm:$0xf]
    %v3092 = vld [vmem:[#allocation10 + $0x78] sm:$0xff]
    %v3093 = vld [vmem:[#allocation10 + $0x80] sm:$0xf]
    %v3094 = vld [vmem:[#allocation10 + $0x84] sm:$0xff]
    %v3095 = vld [vmem:[#allocation10 + $0x8c] sm:$0xf]
    %v3096 = vld [vmem:[#allocation10 + $0x90] sm:$0xff]
    %v3097 = vld [vmem:[#allocation10 + $0x98] sm:$0xf]
    %v3098 = vld [vmem:[#allocation10 + $0x9c] sm:$0xff]
    %v3099 = vld [vmem:[#allocation10 + $0xa4] sm:$0xf]
    %v3100 = vld [vmem:[#allocation10 + $0xa8] sm:$0xff]
    %v3101 = vld [vmem:[#allocation10 + $0xb0] sm:$0xf]
    %v3102 = vld [vmem:[#allocation10 + $0xb4] sm:$0xff]
    %v3103 = vld [vmem:[#allocation10 + $0xbc] sm:$0xf]
    %v3136 = vunpack.c.l.b16 %v3072
    %v3137 = vunpack.c.h.b16 %v3072
    %v3138 = vunpack.c.l.b16 %v3073
    %v3139 = vunpack.c.l.b16 %v3074
    %v3140 = vunpack.c.h.b16 %v3074
    %v3141 = vunpack.c.l.b16 %v3075
    %v3142 = vunpack.c.l.b16 %v3076
    %v3143 = vunpack.c.h.b16 %v3076
    %v3144 = vunpack.c.l.b16 %v3077
    %v3145 = vunpack.c.l.b16 %v3078
    %v3146 = vunpack.c.h.b16 %v3078
    %v3147 = vunpack.c.l.b16 %v3079
    %v3148 = vunpack.c.l.b16 %v3080
    %v3149 = vunpack.c.h.b16 %v3080
    %v3150 = vunpack.c.l.b16 %v3081
    %v3151 = vunpack.c.l.b16 %v3082
    %v3152 = vunpack.c.h.b16 %v3082
    %v3153 = vunpack.c.l.b16 %v3083
    %v3154 = vunpack.c.l.b16 %v3084
    %v3155 = vunpack.c.h.b16 %v3084
    %v3156 = vunpack.c.l.b16 %v3085
    %v3157 = vunpack.c.l.b16 %v3086
    %v3158 = vunpack.c.h.b16 %v3086
    %v3159 = vunpack.c.l.b16 %v3087
    %v3160 = vunpack.c.l.b16 %v3088
    %v3161 = vunpack.c.h.b16 %v3088
    %v3162 = vunpack.c.l.b16 %v3089
    %v3163 = vunpack.c.l.b16 %v3090
    %v3164 = vunpack.c.h.b16 %v3090
    %v3165 = vunpack.c.l.b16 %v3091
    %v3166 = vunpack.c.l.b16 %v3092
    %v3167 = vunpack.c.h.b16 %v3092
    %v3168 = vunpack.c.l.b16 %v3093
    %v3169 = vunpack.c.l.b16 %v3094
    %v3170 = vunpack.c.h.b16 %v3094
    %v3171 = vunpack.c.l.b16 %v3095
    %v3172 = vunpack.c.l.b16 %v3096
    %v3173 = vunpack.c.h.b16 %v3096
    %v3174 = vunpack.c.l.b16 %v3097
    %v3175 = vunpack.c.l.b16 %v3098
    %v3176 = vunpack.c.h.b16 %v3098
    %v3177 = vunpack.c.l.b16 %v3099
    %v3178 = vunpack.c.l.b16 %v3100
    %v3179 = vunpack.c.h.b16 %v3100
    %v3180 = vunpack.c.l.b16 %v3101
    %v3181 = vunpack.c.l.b16 %v3102
    %v3182 = vunpack.c.h.b16 %v3102
    %v3183 = vunpack.c.l.b16 %v3103
    %v3184 = vpack.c.b16 %v3139, %v3136
    %v3185 = vpack.c.b16 %v3140, %v3137
    %v3186 = vpack.c.b16 %v3141, %v3138
    %v3187 = vpack.c.b16 %v3145, %v3142
    %v3188 = vpack.c.b16 %v3146, %v3143
    %v3189 = vpack.c.b16 %v3147, %v3144
    %v3190 = vpack.c.b16 %v3151, %v3148
    %v3191 = vpack.c.b16 %v3152, %v3149
    %v3192 = vpack.c.b16 %v3153, %v3150
    %v3193 = vpack.c.b16 %v3157, %v3154
    %v3194 = vpack.c.b16 %v3158, %v3155
    %v3195 = vpack.c.b16 %v3159, %v3156
    %v3196 = vpack.c.b16 %v3163, %v3160
    %v3197 = vpack.c.b16 %v3164, %v3161
    %v3198 = vpack.c.b16 %v3165, %v3162
    %v3199 = vpack.c.b16 %v3169, %v3166
    %v3200 = vpack.c.b16 %v3170, %v3167
    %v3201 = vpack.c.b16 %v3171, %v3168
    %v3202 = vpack.c.b16 %v3175, %v3172
    %v3203 = vpack.c.b16 %v3176, %v3173
    %v3204 = vpack.c.b16 %v3177, %v3174
    %v3205 = vpack.c.b16 %v3181, %v3178
    %v3206 = vpack.c.b16 %v3182, %v3179
    %v3207 = vpack.c.b16 %v3183, %v3180
    %3232 = vmatpush.bf16.msra.mxu0 %v3205
    %3233 = vmatpush.bf16.msra.mxu0 %v3202
    %3234 = vmatpush.bf16.msra.mxu0 %v3199
    %3235 = vmatpush.bf16.msra.mxu0 %v3196
    %3236 = vmatpush.bf16.msra.mxu0 %v3193
    %3237 = vmatpush.bf16.msra.mxu0 %v3190
    %3238 = vmatpush.bf16.msra.mxu0 %v3187
    %3239 = vmatpush.bf16.msra.mxu0 %v3184
    %3240 = vmatmul.bf16.gmra.mxu0 %v3069
    %v3241 = vpop.f32.mrf.mxu0
    %v3242 = vadd.f32 0.0, %v3241
    %v3243 = vpop.f32.mrf.mxu0
    %3244 = vdwg.mxu0
    %3245 = vmatpush.bf16.msra.mxu0 %v3206
    %3246 = vmatpush.bf16.msra.mxu0 %v3203
    %3247 = vmatpush.bf16.msra.mxu0 %v3200
    %3248 = vmatpush.bf16.msra.mxu0 %v3197
    %3249 = vmatpush.bf16.msra.mxu0 %v3194
    %3250 = vmatpush.bf16.msra.mxu0 %v3191
    %3251 = vmatpush.bf16.msra.mxu0 %v3188
    %3252 = vmatpush.bf16.msra.mxu0 %v3185
    %3253 = vmatmul.bf16.gmra.mxu0 %v3069
    %v3254 = vpop.f32.mrf.mxu0
    %v3255 = vadd.f32 0.0, %v3254
    %v3256 = vpop.f32.mrf.mxu0
    %3257 = vdwg.mxu0
    %3258 = vmatpush.bf16.msra.mxu0 %v3207
    %3259 = vmatpush.bf16.msra.mxu0 %v3204
    %3260 = vmatpush.bf16.msra.mxu0 %v3201
    %3261 = vmatpush.bf16.msra.mxu0 %v3198
    %3262 = vmatpush.bf16.msra.mxu0 %v3195
    %3263 = vmatpush.bf16.msra.mxu0 %v3192
    %3264 = vmatpush.bf16.msra.mxu0 %v3189
    %3265 = vmatpush.bf16.msra.mxu0 %v3186
    %3266 = vmatmul.bf16.gmra.mxu0 %v3069
    %v3267 = vpop.f32.mrf.mxu0
    %v3268 = vadd.f32 0.0, %v3267
    %v3269 = vpop.f32.mrf.mxu0
    %3270 = vdwg.mxu0
    %v3271 = vld [vmem:[%s1364] sm:$0x3f]
    %v3272 = vadd.f32 %v3271, %v3242
    %v3273 = vxor.u32 %v3272, 2147483648
    %v3274 = vmul.f32 %v3273, 1.442695
    %v3275 = vpow.pop %v3274
    %v3276 = vadd.f32 %v3275, 1.0
    %v3277 = vrcp.pop %v3276
    %v3278 = vmul.f32 %v3276, %v3277
    %v3279 = vsub.f32 1.0, %v3278
    %v3280 = vmul.f32 %v3277, %v3279
    %v3281 = vadd.f32 %v3277, %v3280
    %vm3282 = vweird.f32 %v3276
    %vm3283 = vweird.f32 %v3277
    %vm3284 = vmor %vm3282, %vm3283
    %v3285 = vsel %vm3284, %v3277, %v3281
    %v3286 = vand.u32 2147483647, %v3276
    %vm3287 = vcmp.eq.f32.partialorder %v3286, 8.507059e+37
    %v3288 = vand.u32 %v3276, 2147483648
    %v3289 = vor.u32 1.1754944e-38, %v3288
    %v3290 = vsel %vm3287, %v3289, %v3285
    %v3291 = vmul.f32 1.0, %v3290
    %v3293 = vrot.slane %v3271, 2
    %v3295 = vadd.f32 %v3293, %v3255
    %v3296 = vxor.u32 %v3295, 2147483648
    %v3297 = vmul.f32 %v3296, 1.442695
    %v3298 = vpow.pop %v3297
    %v3299 = vadd.f32 %v3298, 1.0
    %v3300 = vrcp.pop %v3299
    %v3301 = vmul.f32 %v3299, %v3300
    %v3302 = vsub.f32 1.0, %v3301
    %v3303 = vmul.f32 %v3300, %v3302
    %v3304 = vadd.f32 %v3300, %v3303
    %vm3305 = vweird.f32 %v3299
    %vm3306 = vweird.f32 %v3300
    %vm3307 = vmor %vm3305, %vm3306
    %v3308 = vsel %vm3307, %v3300, %v3304
    %v3309 = vand.u32 2147483647, %v3299
    %vm3310 = vcmp.eq.f32.partialorder %v3309, 8.507059e+37
    %v3311 = vand.u32 %v3299, 2147483648
    %v3312 = vor.u32 1.1754944e-38, %v3311
    %v3313 = vsel %vm3310, %v3312, %v3308
    %v3314 = vmul.f32 1.0, %v3313
    %v3315 = vadd.f32 %v3268, %v2034
    %v3316 = vmul.f32 %v3291, %v3315
    %v3317 = vrot.slane %v3271, 4
    %v3319 = vadd.f32 %v3317, %v3316
    %v3320 = vtanh.pop %v3319
    %v3321 = vsub.f32 1.0, %v3314
    %v3322 = vmul.f32 %v3321, %v3320
    %v3323 = vmul.f32 %v3314, %v3068
    %v3324 = vadd.f32 %v3322, %v3323
    %v3325 = vpack.c.bf16 %v3324, %v3324
    %s3326 = scalar_lea.vmem [#allocation12], 5
    %3327 = vst [vmem:[%s3326] sm:$0x1] %v3325
    %v3328 = vld [vmem:[#allocation10] sm:$0xff]
    %v3329 = vld [vmem:[#allocation10 + $0x8] sm:$0xf]
    %v3330 = vld [vmem:[#allocation10 + $0xc] sm:$0xff]
    %v3331 = vld [vmem:[#allocation10 + $0x14] sm:$0xf]
    %v3332 = vld [vmem:[#allocation10 + $0x18] sm:$0xff]
    %v3333 = vld [vmem:[#allocation10 + $0x20] sm:$0xf]
    %v3334 = vld [vmem:[#allocation10 + $0x24] sm:$0xff]
    %v3335 = vld [vmem:[#allocation10 + $0x2c] sm:$0xf]
    %v3336 = vld [vmem:[#allocation10 + $0x30] sm:$0xff]
    %v3337 = vld [vmem:[#allocation10 + $0x38] sm:$0xf]
    %v3338 = vld [vmem:[#allocation10 + $0x3c] sm:$0xff]
    %v3339 = vld [vmem:[#allocation10 + $0x44] sm:$0xf]
    %v3340 = vld [vmem:[#allocation10 + $0x48] sm:$0xff]
    %v3341 = vld [vmem:[#allocation10 + $0x50] sm:$0xf]
    %v3342 = vld [vmem:[#allocation10 + $0x54] sm:$0xff]
    %v3343 = vld [vmem:[#allocation10 + $0x5c] sm:$0xf]
    %v3344 = vld [vmem:[#allocation10 + $0x60] sm:$0xff]
    %v3345 = vld [vmem:[#allocation10 + $0x68] sm:$0xf]
    %v3346 = vld [vmem:[#allocation10 + $0x6c] sm:$0xff]
    %v3347 = vld [vmem:[#allocation10 + $0x74] sm:$0xf]
    %v3348 = vld [vmem:[#allocation10 + $0x78] sm:$0xff]
    %v3349 = vld [vmem:[#allocation10 + $0x80] sm:$0xf]
    %v3350 = vld [vmem:[#allocation10 + $0x84] sm:$0xff]
    %v3351 = vld [vmem:[#allocation10 + $0x8c] sm:$0xf]
    %v3352 = vld [vmem:[#allocation10 + $0x90] sm:$0xff]
    %v3353 = vld [vmem:[#allocation10 + $0x98] sm:$0xf]
    %v3354 = vld [vmem:[#allocation10 + $0x9c] sm:$0xff]
    %v3355 = vld [vmem:[#allocation10 + $0xa4] sm:$0xf]
    %v3356 = vld [vmem:[#allocation10 + $0xa8] sm:$0xff]
    %v3357 = vld [vmem:[#allocation10 + $0xb0] sm:$0xf]
    %v3358 = vld [vmem:[#allocation10 + $0xb4] sm:$0xff]
    %v3359 = vld [vmem:[#allocation10 + $0xbc] sm:$0xf]
    %v3392 = vunpack.c.l.b16 %v3328
    %v3393 = vunpack.c.h.b16 %v3328
    %v3394 = vunpack.c.l.b16 %v3329
    %v3395 = vunpack.c.l.b16 %v3330
    %v3396 = vunpack.c.h.b16 %v3330
    %v3397 = vunpack.c.l.b16 %v3331
    %v3398 = vunpack.c.l.b16 %v3332
    %v3399 = vunpack.c.h.b16 %v3332
    %v3400 = vunpack.c.l.b16 %v3333
    %v3401 = vunpack.c.l.b16 %v3334
    %v3402 = vunpack.c.h.b16 %v3334
    %v3403 = vunpack.c.l.b16 %v3335
    %v3404 = vunpack.c.l.b16 %v3336
    %v3405 = vunpack.c.h.b16 %v3336
    %v3406 = vunpack.c.l.b16 %v3337
    %v3407 = vunpack.c.l.b16 %v3338
    %v3408 = vunpack.c.h.b16 %v3338
    %v3409 = vunpack.c.l.b16 %v3339
    %v3410 = vunpack.c.l.b16 %v3340
    %v3411 = vunpack.c.h.b16 %v3340
    %v3412 = vunpack.c.l.b16 %v3341
    %v3413 = vunpack.c.l.b16 %v3342
    %v3414 = vunpack.c.h.b16 %v3342
    %v3415 = vunpack.c.l.b16 %v3343
    %v3416 = vunpack.c.l.b16 %v3344
    %v3417 = vunpack.c.h.b16 %v3344
    %v3418 = vunpack.c.l.b16 %v3345
    %v3419 = vunpack.c.l.b16 %v3346
    %v3420 = vunpack.c.h.b16 %v3346
    %v3421 = vunpack.c.l.b16 %v3347
    %v3422 = vunpack.c.l.b16 %v3348
    %v3423 = vunpack.c.h.b16 %v3348
    %v3424 = vunpack.c.l.b16 %v3349
    %v3425 = vunpack.c.l.b16 %v3350
    %v3426 = vunpack.c.h.b16 %v3350
    %v3427 = vunpack.c.l.b16 %v3351
    %v3428 = vunpack.c.l.b16 %v3352
    %v3429 = vunpack.c.h.b16 %v3352
    %v3430 = vunpack.c.l.b16 %v3353
    %v3431 = vunpack.c.l.b16 %v3354
    %v3432 = vunpack.c.h.b16 %v3354
    %v3433 = vunpack.c.l.b16 %v3355
    %v3434 = vunpack.c.l.b16 %v3356
    %v3435 = vunpack.c.h.b16 %v3356
    %v3436 = vunpack.c.l.b16 %v3357
    %v3437 = vunpack.c.l.b16 %v3358
    %v3438 = vunpack.c.h.b16 %v3358
    %v3439 = vunpack.c.l.b16 %v3359
    %v3440 = vpack.c.b16 %v3395, %v3392
    %v3441 = vpack.c.b16 %v3396, %v3393
    %v3442 = vpack.c.b16 %v3397, %v3394
    %v3443 = vpack.c.b16 %v3401, %v3398
    %v3444 = vpack.c.b16 %v3402, %v3399
    %v3445 = vpack.c.b16 %v3403, %v3400
    %v3446 = vpack.c.b16 %v3407, %v3404
    %v3447 = vpack.c.b16 %v3408, %v3405
    %v3448 = vpack.c.b16 %v3409, %v3406
    %v3449 = vpack.c.b16 %v3413, %v3410
    %v3450 = vpack.c.b16 %v3414, %v3411
    %v3451 = vpack.c.b16 %v3415, %v3412
    %v3452 = vpack.c.b16 %v3419, %v3416
    %v3453 = vpack.c.b16 %v3420, %v3417
    %v3454 = vpack.c.b16 %v3421, %v3418
    %v3455 = vpack.c.b16 %v3425, %v3422
    %v3456 = vpack.c.b16 %v3426, %v3423
    %v3457 = vpack.c.b16 %v3427, %v3424
    %v3458 = vpack.c.b16 %v3431, %v3428
    %v3459 = vpack.c.b16 %v3432, %v3429
    %v3460 = vpack.c.b16 %v3433, %v3430
    %v3461 = vpack.c.b16 %v3437, %v3434
    %v3462 = vpack.c.b16 %v3438, %v3435
    %v3463 = vpack.c.b16 %v3439, %v3436
    %3488 = vmatpush.bf16.msra.mxu0 %v3461
    %3489 = vmatpush.bf16.msra.mxu0 %v3458
    %3490 = vmatpush.bf16.msra.mxu0 %v3455
    %3491 = vmatpush.bf16.msra.mxu0 %v3452
    %3492 = vmatpush.bf16.msra.mxu0 %v3449
    %3493 = vmatpush.bf16.msra.mxu0 %v3446
    %3494 = vmatpush.bf16.msra.mxu0 %v3443
    %3495 = vmatpush.bf16.msra.mxu0 %v3440
    %3496 = vmatmul.bf16.gmra.mxu0 %v3325
    %v3497 = vpop.f32.mrf.mxu0
    %v3498 = vadd.f32 0.0, %v3497
    %v3499 = vpop.f32.mrf.mxu0
    %3500 = vdwg.mxu0
    %3501 = vmatpush.bf16.msra.mxu0 %v3462
    %3502 = vmatpush.bf16.msra.mxu0 %v3459
    %3503 = vmatpush.bf16.msra.mxu0 %v3456
    %3504 = vmatpush.bf16.msra.mxu0 %v3453
    %3505 = vmatpush.bf16.msra.mxu0 %v3450
    %3506 = vmatpush.bf16.msra.mxu0 %v3447
    %3507 = vmatpush.bf16.msra.mxu0 %v3444
    %3508 = vmatpush.bf16.msra.mxu0 %v3441
    %3509 = vmatmul.bf16.gmra.mxu0 %v3325
    %v3510 = vpop.f32.mrf.mxu0
    %v3511 = vadd.f32 0.0, %v3510
    %v3512 = vpop.f32.mrf.mxu0
    %3513 = vdwg.mxu0
    %3514 = vmatpush.bf16.msra.mxu0 %v3463
    %3515 = vmatpush.bf16.msra.mxu0 %v3460
    %3516 = vmatpush.bf16.msra.mxu0 %v3457
    %3517 = vmatpush.bf16.msra.mxu0 %v3454
    %3518 = vmatpush.bf16.msra.mxu0 %v3451
    %3519 = vmatpush.bf16.msra.mxu0 %v3448
    %3520 = vmatpush.bf16.msra.mxu0 %v3445
    %3521 = vmatpush.bf16.msra.mxu0 %v3442
    %3522 = vmatmul.bf16.gmra.mxu0 %v3325
    %v3523 = vpop.f32.mrf.mxu0
    %v3524 = vadd.f32 0.0, %v3523
    %v3525 = vpop.f32.mrf.mxu0
    %3526 = vdwg.mxu0
    %v3527 = vld [vmem:[%s1575] sm:$0x3f]
    %v3528 = vadd.f32 %v3527, %v3498
    %v3529 = vxor.u32 %v3528, 2147483648
    %v3530 = vmul.f32 %v3529, 1.442695
    %v3531 = vpow.pop %v3530
    %v3532 = vadd.f32 %v3531, 1.0
    %v3533 = vrcp.pop %v3532
    %v3534 = vmul.f32 %v3532, %v3533
    %v3535 = vsub.f32 1.0, %v3534
    %v3536 = vmul.f32 %v3533, %v3535
    %v3537 = vadd.f32 %v3533, %v3536
    %vm3538 = vweird.f32 %v3532
    %vm3539 = vweird.f32 %v3533
    %vm3540 = vmor %vm3538, %vm3539
    %v3541 = vsel %vm3540, %v3533, %v3537
    %v3542 = vand.u32 2147483647, %v3532
    %vm3543 = vcmp.eq.f32.partialorder %v3542, 8.507059e+37
    %v3544 = vand.u32 %v3532, 2147483648
    %v3545 = vor.u32 1.1754944e-38, %v3544
    %v3546 = vsel %vm3543, %v3545, %v3541
    %v3547 = vmul.f32 1.0, %v3546
    %v3549 = vrot.slane %v3527, 2
    %v3551 = vadd.f32 %v3549, %v3511
    %v3552 = vxor.u32 %v3551, 2147483648
    %v3553 = vmul.f32 %v3552, 1.442695
    %v3554 = vpow.pop %v3553
    %v3555 = vadd.f32 %v3554, 1.0
    %v3556 = vrcp.pop %v3555
    %v3557 = vmul.f32 %v3555, %v3556
    %v3558 = vsub.f32 1.0, %v3557
    %v3559 = vmul.f32 %v3556, %v3558
    %v3560 = vadd.f32 %v3556, %v3559
    %vm3561 = vweird.f32 %v3555
    %vm3562 = vweird.f32 %v3556
    %vm3563 = vmor %vm3561, %vm3562
    %v3564 = vsel %vm3563, %v3556, %v3560
    %v3565 = vand.u32 2147483647, %v3555
    %vm3566 = vcmp.eq.f32.partialorder %v3565, 8.507059e+37
    %v3567 = vand.u32 %v3555, 2147483648
    %v3568 = vor.u32 1.1754944e-38, %v3567
    %v3569 = vsel %vm3566, %v3568, %v3564
    %v3570 = vmul.f32 1.0, %v3569
    %v3571 = vadd.f32 %v3524, %v2034
    %v3572 = vmul.f32 %v3547, %v3571
    %v3573 = vrot.slane %v3527, 4
    %v3575 = vadd.f32 %v3573, %v3572
    %v3576 = vtanh.pop %v3575
    %v3577 = vsub.f32 1.0, %v3570
    %v3578 = vmul.f32 %v3577, %v3576
    %v3579 = vmul.f32 %v3570, %v3324
    %v3580 = vadd.f32 %v3578, %v3579
    %v3581 = vpack.c.bf16 %v3580, %v3580
    %s3582 = scalar_lea.vmem [#allocation12], 6
    %3583 = vst [vmem:[%s3582] sm:$0x1] %v3581
    %v3584 = vld [vmem:[#allocation10] sm:$0xff]
    %v3585 = vld [vmem:[#allocation10 + $0x8] sm:$0xf]
    %v3586 = vld [vmem:[#allocation10 + $0xc] sm:$0xff]
    %v3587 = vld [vmem:[#allocation10 + $0x14] sm:$0xf]
    %v3588 = vld [vmem:[#allocation10 + $0x18] sm:$0xff]
    %v3589 = vld [vmem:[#allocation10 + $0x20] sm:$0xf]
    %v3590 = vld [vmem:[#allocation10 + $0x24] sm:$0xff]
    %v3591 = vld [vmem:[#allocation10 + $0x2c] sm:$0xf]
    %v3592 = vld [vmem:[#allocation10 + $0x30] sm:$0xff]
    %v3593 = vld [vmem:[#allocation10 + $0x38] sm:$0xf]
    %v3594 = vld [vmem:[#allocation10 + $0x3c] sm:$0xff]
    %v3595 = vld [vmem:[#allocation10 + $0x44] sm:$0xf]
    %v3596 = vld [vmem:[#allocation10 + $0x48] sm:$0xff]
    %v3597 = vld [vmem:[#allocation10 + $0x50] sm:$0xf]
    %v3598 = vld [vmem:[#allocation10 + $0x54] sm:$0xff]
    %v3599 = vld [vmem:[#allocation10 + $0x5c] sm:$0xf]
    %v3600 = vld [vmem:[#allocation10 + $0x60] sm:$0xff]
    %v3601 = vld [vmem:[#allocation10 + $0x68] sm:$0xf]
    %v3602 = vld [vmem:[#allocation10 + $0x6c] sm:$0xff]
    %v3603 = vld [vmem:[#allocation10 + $0x74] sm:$0xf]
    %v3604 = vld [vmem:[#allocation10 + $0x78] sm:$0xff]
    %v3605 = vld [vmem:[#allocation10 + $0x80] sm:$0xf]
    %v3606 = vld [vmem:[#allocation10 + $0x84] sm:$0xff]
    %v3607 = vld [vmem:[#allocation10 + $0x8c] sm:$0xf]
    %v3608 = vld [vmem:[#allocation10 + $0x90] sm:$0xff]
    %v3609 = vld [vmem:[#allocation10 + $0x98] sm:$0xf]
    %v3610 = vld [vmem:[#allocation10 + $0x9c] sm:$0xff]
    %v3611 = vld [vmem:[#allocation10 + $0xa4] sm:$0xf]
    %v3612 = vld [vmem:[#allocation10 + $0xa8] sm:$0xff]
    %v3613 = vld [vmem:[#allocation10 + $0xb0] sm:$0xf]
    %v3614 = vld [vmem:[#allocation10 + $0xb4] sm:$0xff]
    %v3615 = vld [vmem:[#allocation10 + $0xbc] sm:$0xf]
    %v3648 = vunpack.c.l.b16 %v3584
    %v3649 = vunpack.c.h.b16 %v3584
    %v3650 = vunpack.c.l.b16 %v3585
    %v3651 = vunpack.c.l.b16 %v3586
    %v3652 = vunpack.c.h.b16 %v3586
    %v3653 = vunpack.c.l.b16 %v3587
    %v3654 = vunpack.c.l.b16 %v3588
    %v3655 = vunpack.c.h.b16 %v3588
    %v3656 = vunpack.c.l.b16 %v3589
    %v3657 = vunpack.c.l.b16 %v3590
    %v3658 = vunpack.c.h.b16 %v3590
    %v3659 = vunpack.c.l.b16 %v3591
    %v3660 = vunpack.c.l.b16 %v3592
    %v3661 = vunpack.c.h.b16 %v3592
    %v3662 = vunpack.c.l.b16 %v3593
    %v3663 = vunpack.c.l.b16 %v3594
    %v3664 = vunpack.c.h.b16 %v3594
    %v3665 = vunpack.c.l.b16 %v3595
    %v3666 = vunpack.c.l.b16 %v3596
    %v3667 = vunpack.c.h.b16 %v3596
    %v3668 = vunpack.c.l.b16 %v3597
    %v3669 = vunpack.c.l.b16 %v3598
    %v3670 = vunpack.c.h.b16 %v3598
    %v3671 = vunpack.c.l.b16 %v3599
    %v3672 = vunpack.c.l.b16 %v3600
    %v3673 = vunpack.c.h.b16 %v3600
    %v3674 = vunpack.c.l.b16 %v3601
    %v3675 = vunpack.c.l.b16 %v3602
    %v3676 = vunpack.c.h.b16 %v3602
    %v3677 = vunpack.c.l.b16 %v3603
    %v3678 = vunpack.c.l.b16 %v3604
    %v3679 = vunpack.c.h.b16 %v3604
    %v3680 = vunpack.c.l.b16 %v3605
    %v3681 = vunpack.c.l.b16 %v3606
    %v3682 = vunpack.c.h.b16 %v3606
    %v3683 = vunpack.c.l.b16 %v3607
    %v3684 = vunpack.c.l.b16 %v3608
    %v3685 = vunpack.c.h.b16 %v3608
    %v3686 = vunpack.c.l.b16 %v3609
    %v3687 = vunpack.c.l.b16 %v3610
    %v3688 = vunpack.c.h.b16 %v3610
    %v3689 = vunpack.c.l.b16 %v3611
    %v3690 = vunpack.c.l.b16 %v3612
    %v3691 = vunpack.c.h.b16 %v3612
    %v3692 = vunpack.c.l.b16 %v3613
    %v3693 = vunpack.c.l.b16 %v3614
    %v3694 = vunpack.c.h.b16 %v3614
    %v3695 = vunpack.c.l.b16 %v3615
    %v3696 = vpack.c.b16 %v3651, %v3648
    %v3697 = vpack.c.b16 %v3652, %v3649
    %v3698 = vpack.c.b16 %v3653, %v3650
    %v3699 = vpack.c.b16 %v3657, %v3654
    %v3700 = vpack.c.b16 %v3658, %v3655
    %v3701 = vpack.c.b16 %v3659, %v3656
    %v3702 = vpack.c.b16 %v3663, %v3660
    %v3703 = vpack.c.b16 %v3664, %v3661
    %v3704 = vpack.c.b16 %v3665, %v3662
    %v3705 = vpack.c.b16 %v3669, %v3666
    %v3706 = vpack.c.b16 %v3670, %v3667
    %v3707 = vpack.c.b16 %v3671, %v3668
    %v3708 = vpack.c.b16 %v3675, %v3672
    %v3709 = vpack.c.b16 %v3676, %v3673
    %v3710 = vpack.c.b16 %v3677, %v3674
    %v3711 = vpack.c.b16 %v3681, %v3678
    %v3712 = vpack.c.b16 %v3682, %v3679
    %v3713 = vpack.c.b16 %v3683, %v3680
    %v3714 = vpack.c.b16 %v3687, %v3684
    %v3715 = vpack.c.b16 %v3688, %v3685
    %v3716 = vpack.c.b16 %v3689, %v3686
    %v3717 = vpack.c.b16 %v3693, %v3690
    %v3718 = vpack.c.b16 %v3694, %v3691
    %v3719 = vpack.c.b16 %v3695, %v3692
    %3744 = vmatpush.bf16.msra.mxu0 %v3717
    %3745 = vmatpush.bf16.msra.mxu0 %v3714
    %3746 = vmatpush.bf16.msra.mxu0 %v3711
    %3747 = vmatpush.bf16.msra.mxu0 %v3708
    %3748 = vmatpush.bf16.msra.mxu0 %v3705
    %3749 = vmatpush.bf16.msra.mxu0 %v3702
    %3750 = vmatpush.bf16.msra.mxu0 %v3699
    %3751 = vmatpush.bf16.msra.mxu0 %v3696
    %3752 = vmatmul.bf16.gmra.mxu0 %v3581
    %v3753 = vpop.f32.mrf.mxu0
    %v3754 = vadd.f32 0.0, %v3753
    %v3755 = vpop.f32.mrf.mxu0
    %3756 = vdwg.mxu0
    %3757 = vmatpush.bf16.msra.mxu0 %v3718
    %3758 = vmatpush.bf16.msra.mxu0 %v3715
    %3759 = vmatpush.bf16.msra.mxu0 %v3712
    %3760 = vmatpush.bf16.msra.mxu0 %v3709
    %3761 = vmatpush.bf16.msra.mxu0 %v3706
    %3762 = vmatpush.bf16.msra.mxu0 %v3703
    %3763 = vmatpush.bf16.msra.mxu0 %v3700
    %3764 = vmatpush.bf16.msra.mxu0 %v3697
    %3765 = vmatmul.bf16.gmra.mxu0 %v3581
    %v3766 = vpop.f32.mrf.mxu0
    %v3767 = vadd.f32 0.0, %v3766
    %v3768 = vpop.f32.mrf.mxu0
    %3769 = vdwg.mxu0
    %3770 = vmatpush.bf16.msra.mxu0 %v3719
    %3771 = vmatpush.bf16.msra.mxu0 %v3716
    %3772 = vmatpush.bf16.msra.mxu0 %v3713
    %3773 = vmatpush.bf16.msra.mxu0 %v3710
    %3774 = vmatpush.bf16.msra.mxu0 %v3707
    %3775 = vmatpush.bf16.msra.mxu0 %v3704
    %3776 = vmatpush.bf16.msra.mxu0 %v3701
    %3777 = vmatpush.bf16.msra.mxu0 %v3698
    %3778 = vmatmul.bf16.gmra.mxu0 %v3581
    %v3779 = vpop.f32.mrf.mxu0
    %v3780 = vadd.f32 0.0, %v3779
    %v3781 = vpop.f32.mrf.mxu0
    %3782 = vdwg.mxu0
    %v3783 = vld [vmem:[%s1786] sm:$0x3f]
    %v3784 = vadd.f32 %v3783, %v3754
    %v3785 = vxor.u32 %v3784, 2147483648
    %v3786 = vmul.f32 %v3785, 1.442695
    %v3787 = vpow.pop %v3786
    %v3788 = vadd.f32 %v3787, 1.0
    %v3789 = vrcp.pop %v3788
    %v3790 = vmul.f32 %v3788, %v3789
    %v3791 = vsub.f32 1.0, %v3790
    %v3792 = vmul.f32 %v3789, %v3791
    %v3793 = vadd.f32 %v3789, %v3792
    %vm3794 = vweird.f32 %v3788
    %vm3795 = vweird.f32 %v3789
    %vm3796 = vmor %vm3794, %vm3795
    %v3797 = vsel %vm3796, %v3789, %v3793
    %v3798 = vand.u32 2147483647, %v3788
    %vm3799 = vcmp.eq.f32.partialorder %v3798, 8.507059e+37
    %v3800 = vand.u32 %v3788, 2147483648
    %v3801 = vor.u32 1.1754944e-38, %v3800
    %v3802 = vsel %vm3799, %v3801, %v3797
    %v3803 = vmul.f32 1.0, %v3802
    %v3805 = vrot.slane %v3783, 2
    %v3807 = vadd.f32 %v3805, %v3767
    %v3808 = vxor.u32 %v3807, 2147483648
    %v3809 = vmul.f32 %v3808, 1.442695
    %v3810 = vpow.pop %v3809
    %v3811 = vadd.f32 %v3810, 1.0
    %v3812 = vrcp.pop %v3811
    %v3813 = vmul.f32 %v3811, %v3812
    %v3814 = vsub.f32 1.0, %v3813
    %v3815 = vmul.f32 %v3812, %v3814
    %v3816 = vadd.f32 %v3812, %v3815
    %vm3817 = vweird.f32 %v3811
    %vm3818 = vweird.f32 %v3812
    %vm3819 = vmor %vm3817, %vm3818
    %v3820 = vsel %vm3819, %v3812, %v3816
    %v3821 = vand.u32 2147483647, %v3811
    %vm3822 = vcmp.eq.f32.partialorder %v3821, 8.507059e+37
    %v3823 = vand.u32 %v3811, 2147483648
    %v3824 = vor.u32 1.1754944e-38, %v3823
    %v3825 = vsel %vm3822, %v3824, %v3820
    %v3826 = vmul.f32 1.0, %v3825
    %v3827 = vadd.f32 %v3780, %v2034
    %v3828 = vmul.f32 %v3803, %v3827
    %v3829 = vrot.slane %v3783, 4
    %v3831 = vadd.f32 %v3829, %v3828
    %v3832 = vtanh.pop %v3831
    %v3833 = vsub.f32 1.0, %v3826
    %v3834 = vmul.f32 %v3833, %v3832
    %v3835 = vmul.f32 %v3826, %v3580
    %v3836 = vadd.f32 %v3834, %v3835
    %v3837 = vpack.c.bf16 %v3836, %v3836
    %s3838 = scalar_lea.vmem [#allocation12], 7
    %3839 = vst [vmem:[%s3838] sm:$0x1] %v3837
    %3840 = vst [vmem:[#allocation3] sm:$0x3] %v3836
    // Predicated region
    $region46: #{tpu_custom_call.1} parent=1 // pred_check
      _
    $region47: #{tpu_custom_call.1} parent=1 // pred_check_branch
      %3842 = sbr.rel (0) target = $region49
    $region48: #{tpu_custom_call.1} parent=1 // pred_region
      %3844 = vsyncadd [#allocation6], 0
      %s3845 = sshll.u32 [#allocation12], 4
      %s3846 = int_to_ptr.vmem [resolvable:$true] %s3845
      %s3847 = sshll.u32 %s6, 4
      %s3848 = int_to_ptr.hbm [resolvable:$true] %s3847
      %3853 = dma.vmem_to_hbm [thread:$0]  %s3846, 128, %s3848, [#allocation6], 16, 16, 1
    $region49: #{tpu_custom_call.1} parent=1 // pred_fallthru
      _
    // Predicated region
    $region50: #{tpu_custom_call.1} parent=1 // pred_check
      _
    $region51: #{tpu_custom_call.1} parent=1 // pred_check_branch
      %3855 = sbr.rel (0) target = $region53
    $region52: #{tpu_custom_call.1} parent=1 // pred_region
      %3857 = dma.done [#allocation6], 128
    $region53: #{tpu_custom_call.1} parent=1 // pred_fallthru
      _
    %3858 = vsyncpa [#allocation5], 1
    %3859 = vsyncpa [#allocation8], 1
    %3860 = vsyncpa [#allocation11], 1
    %3861 = vsyncpa [#allocation6], 1

</llo_original>
